<compile_context>
chip_gen: v7x
topology: tpu7x:2x2x1
jax: 0.10.0
libtpu: 0.0.40
codegen_flags: <defaults>
</compile_context>

<pallas_src>
import jax
import jax.numpy as jnp
from jax.experimental import pallas as pl
from jax.experimental.pallas import tpu as pltpu


def posenet_kernel(x_ref, w1_ref, b1_ref, wh_ref, bh_ref, out_ref):
    # x_ref: (TB, 512, HW) fp32, native channel-major layout.
    # Global average pool over the spatial axis; the 1/HW scale is folded
    # into w1 in the wrapper, so a plain lane-reduce sum suffices here.
    f = jnp.sum(x_ref[...], axis=-1)                              # (TB, 512) fp32

    # regressor: Linear(512, 2048) + ReLU.  nn.Dropout() == identity at eval.
    y = jnp.dot(f.astype(jnp.bfloat16), w1_ref[...],
                preferred_element_type=jnp.float32) + b1_ref[...]
    y = jnp.maximum(y, 0.0)                                       # fp32 epilogue

    # Fused trans(3) + rotation(4) heads, lane-padded to 128 output lanes.
    out_ref[...] = (jnp.dot(y.astype(jnp.bfloat16), wh_ref[...],
                            preferred_element_type=jnp.float32) + bh_ref[...])


def _pick_batch_tile(B, HW, budget_bytes=16 * 1024 * 1024):
    """Batch tile so 2x (double-buffered) fp32 x tiles fit a conservative VMEM
    budget that is safe even on v7x (64 MiB physical / 32 MiB default scoped)."""
    per_row = 2 * 512 * HW * 4
    tb = max(1, min(B, budget_bytes // per_row))
    if tb < B:
        tb = max(8, (tb // 8) * 8)   # keep sublane-aligned output blocks when tiling
    return tb


def posenet_forward(x_nchw, params, *, tb=None):
    """x_nchw: (B, 512, H, W) float32.  Returns (trans (B, 3), rotation (B, 4))."""
    B, C, H, W = x_nchw.shape
    assert C == 512, "PoseNet head expects 512-channel backbone features"
    HW = H * W
    x = x_nchw.reshape(B, C, HW)            # native layout; no HBM transpose

    w1, b1, wt, bt, wr, br = params
    # Fold the average-pool 1/HW into w1 and cast the large weight to bf16.
    w1_s = (w1 * (1.0 / HW)).astype(jnp.bfloat16)                 # (512, 2048)
    # Fuse + lane-pad the two heads into one (2048, 128) weight / (1, 128) bias.
    wh = jnp.zeros((2048, 128), jnp.float32)
    wh = wh.at[:, 0:3].set(wt).at[:, 3:7].set(wr).astype(jnp.bfloat16)
    bh = jnp.zeros((1, 128), jnp.float32)
    bh = bh.at[:, 0:3].set(bt).at[:, 3:7].set(br)

    if tb is None:
        tb = _pick_batch_tile(B, HW)
    grid = (pl.cdiv(B, tb),)

    cost = pl.CostEstimate(
        flops=2 * B * 512 * 2048 + 2 * B * 2048 * 128 + B * 512 * HW,
        transcendentals=0,
        bytes_accessed=(x.size * 4 + w1_s.size * 2 + b1.size * 4
                        + wh.size * 2 + bh.size * 4 + B * 128 * 4),
    )

    out = pl.pallas_call(
        posenet_kernel,
        out_shape=jax.ShapeDtypeStruct((B, 128), jnp.float32),
        grid=grid,
        in_specs=[
            pl.BlockSpec((tb, 512, HW), lambda b: (b, 0, 0)),     # x batch tiles
            pl.BlockSpec((512, 2048), lambda b: (0, 0)),          # w1 (resident)
            pl.BlockSpec((1, 2048), lambda b: (0, 0)),            # b1
            pl.BlockSpec((2048, 128), lambda b: (0, 0)),          # fused head W
            pl.BlockSpec((1, 128), lambda b: (0, 0)),             # fused head b
        ],
        out_specs=pl.BlockSpec((tb, 128), lambda b: (b, 0)),      # lane-dense slab
        compiler_params=pltpu.CompilerParams(
            dimension_semantics=("parallel",)),
        cost_estimate=cost,
    )(x, w1_s, b1, wh, bh)

    return out[:, 0:3], out[:, 3:7]


def init_params(key):
    """Deterministic init mirroring PoseNet.__init__ weight statistics.

    Weights stored as (in_features, out_features); PyTorch uses (out, in),
    so the per-output-row std of trans_regressor becomes per-column here.
    """
    k1, k2, k3a, k3b, k3c = jax.random.split(key, 5)
    # regressor Linear(512, 2048): weight ~ N(0, 0.01), bias = 0
    w1 = 0.01 * jax.random.normal(k1, (512, 2048), jnp.float32)
    b1 = jnp.zeros((1, 2048), jnp.float32)
    # trans_regressor Linear(2048, 3): cols 0,1 ~ N(0,0.5), col 2 ~ N(0,0.1), bias 0
    wt_col0 = 0.5 * jax.random.normal(k3a, (2048, 1), jnp.float32)
    wt_col1 = 0.5 * jax.random.normal(k3b, (2048, 1), jnp.float32)
    wt_col2 = 0.1 * jax.random.normal(k3c, (2048, 1), jnp.float32)
    wt = jnp.concatenate([wt_col0, wt_col1, wt_col2], axis=1)
    bt = jnp.zeros((1, 3), jnp.float32)
    # rotation_regressor Linear(2048, 4): weight ~ N(0, 0.01), bias = 0
    wr = 0.01 * jax.random.normal(k2, (2048, 4), jnp.float32)
    br = jnp.zeros((1, 4), jnp.float32)
    return (w1, b1, wt, bt, wr, br)


def posenet_reference(x_nchw, params):
    """Pure-JAX reference reproducing the kernel's math (bf16 weights, fp32 acc)."""
    B, C, H, W = x_nchw.shape
    HW = H * W
    w1, b1, wt, bt, wr, br = params
    w1_s = (w1 * (1.0 / HW)).astype(jnp.bfloat16)
    f = jnp.sum(x_nchw.reshape(B, C, HW), axis=-1)                    # (B, 512)
    y = jnp.dot(f.astype(jnp.bfloat16), w1_s,
                preferred_element_type=jnp.float32) + b1              # (B, 2048)
    y = jnp.maximum(y, 0.0)
    yb = y.astype(jnp.bfloat16)
    trans = jnp.dot(yb, wt.astype(jnp.bfloat16),
                    preferred_element_type=jnp.float32) + bt          # (B, 3)
    rot = jnp.dot(yb, wr.astype(jnp.bfloat16),
                  preferred_element_type=jnp.float32) + br            # (B, 4)
    return trans, rot


if __name__ == "__main__":
    key = jax.random.PRNGKey(0)
    pkey, xkey = jax.random.split(key)
    params = init_params(pkey)

    # Small, shape-consistent input: batch=2, 512 channels, 8x8 spatial.
    x = jax.random.normal(xkey, (2, 512, 8, 8), jnp.float32)

    trans, rot = posenet_forward(x, params)
    trans = jax.block_until_ready(trans)
    rot = jax.block_until_ready(rot)

    # Sanity check against the plain-JAX reference (same bf16/fp32 mix).
    ref_t, ref_r = posenet_reference(x, params)
    assert trans.shape == (2, 3) and rot.shape == (2, 4)
    assert jnp.allclose(trans, ref_t, atol=1e-2, rtol=1e-2)
    assert jnp.allclose(rot, ref_r, atol=1e-2, rtol=1e-2)

    print("KERNEL_OK")
</pallas_src>

<mosaic_0001>
module attributes {stable_mosaic.version = 11 : i64} {
  func.func @posenet_kernel(%arg0: i32, %arg1: memref<2x512x64xf32, #tpu.memory_space<vmem>>, %arg2: memref<512x2048xbf16, #tpu.memory_space<vmem>>, %arg3: memref<1x2048xf32, #tpu.memory_space<vmem>>, %arg4: memref<2048x128xbf16, #tpu.memory_space<vmem>>, %arg5: memref<1x128xf32, #tpu.memory_space<vmem>>, %arg6: memref<2x128xf32, #tpu.memory_space<vmem>>) attributes {dimension_semantics = [#tpu.dimension_semantics<parallel>], iteration_bounds = array<i64: 1>, scalar_prefetch = 0 : i64, scratch_operands = 0 : i64, tpu.core_type = #tpu.core_type<tc>, window_params = [{transform_indices = @transform_0, window_bounds = array<i64: 2, 512, 64>}, {pipeline_mode = #tpu.pipeline_mode<synchronous>, transform_indices = @transform_1, window_bounds = array<i64: 512, 2048>}, {pipeline_mode = #tpu.pipeline_mode<synchronous>, transform_indices = @transform_2, window_bounds = array<i64: 1, 2048>}, {pipeline_mode = #tpu.pipeline_mode<synchronous>, transform_indices = @transform_3, window_bounds = array<i64: 2048, 128>}, {pipeline_mode = #tpu.pipeline_mode<synchronous>, transform_indices = @transform_4, window_bounds = array<i64: 1, 128>}, {transform_indices = @transform_5, window_bounds = array<i64: 2, 128>}]} {
    %c0 = arith.constant 0 : index
    %c0_0 = arith.constant 0 : index
    %c0_1 = arith.constant 0 : index
    %0 = vector.load %arg1[%c0, %c0_0, %c0_1] : memref<2x512x64xf32, #tpu.memory_space<vmem>>, vector<2x512x64xf32>
    %cst = arith.constant dense<0.000000e+00> : vector<2x512xf32>
    %1 = vector.multi_reduction <add>, %0, %cst [2] : vector<2x512x64xf32> to vector<2x512xf32>
    %2 = arith.truncf %1 : vector<2x512xf32> to vector<2x512xbf16>
    %c0_2 = arith.constant 0 : index
    %c0_3 = arith.constant 0 : index
    %3 = vector.load %arg2[%c0_2, %c0_3] : memref<512x2048xbf16, #tpu.memory_space<vmem>>, vector<512x2048xbf16>
    %cst_4 = arith.constant dense<0.000000e+00> : vector<2x2048xf32>
    %4 = tpu.matmul %2, %3, %cst_4 {dimension_numbers = #tpu.dot_dimension_numbers<[1], [0], [0], [1], [0, 0, 1, 1], [], []>} : vector<2x512xbf16>, vector<512x2048xbf16>, vector<2x2048xf32> -> vector<2x2048xf32>
    %c0_5 = arith.constant 0 : index
    %c0_6 = arith.constant 0 : index
    %5 = vector.load %arg3[%c0_5, %c0_6] : memref<1x2048xf32, #tpu.memory_space<vmem>>, vector<1x2048xf32>
    %6 = vector.broadcast %5 : vector<1x2048xf32> to vector<2x2048xf32>
    %7 = arith.addf %4, %6 : vector<2x2048xf32>
    %cst_7 = arith.constant 0.000000e+00 : f32
    %8 = vector.broadcast %cst_7 : f32 to vector<2x2048xf32>
    %9 = arith.maximumf %7, %8 : vector<2x2048xf32>
    %10 = arith.truncf %9 : vector<2x2048xf32> to vector<2x2048xbf16>
    %c0_8 = arith.constant 0 : index
    %c0_9 = arith.constant 0 : index
    %11 = vector.load %arg4[%c0_8, %c0_9] : memref<2048x128xbf16, #tpu.memory_space<vmem>>, vector<2048x128xbf16>
    %cst_10 = arith.constant dense<0.000000e+00> : vector<2x128xf32>
    %12 = tpu.matmul %10, %11, %cst_10 {dimension_numbers = #tpu.dot_dimension_numbers<[1], [0], [0], [1], [0, 0, 1, 1], [], []>} : vector<2x2048xbf16>, vector<2048x128xbf16>, vector<2x128xf32> -> vector<2x128xf32>
    %c0_11 = arith.constant 0 : index
    %c0_12 = arith.constant 0 : index
    %13 = vector.load %arg5[%c0_11, %c0_12] : memref<1x128xf32, #tpu.memory_space<vmem>>, vector<1x128xf32>
    %14 = vector.broadcast %13 : vector<1x128xf32> to vector<2x128xf32>
    %15 = arith.addf %12, %14 : vector<2x128xf32>
    %c0_13 = arith.constant 0 : index
    %c0_14 = arith.constant 0 : index
    %16 = vector.load %arg6[%c0_13, %c0_14] : memref<2x128xf32, #tpu.memory_space<vmem>>, vector<2x128xf32>
    tpu.vector_store %arg6[%c0_13, %c0_14], %15 {strides = array<i32>} : memref<2x128xf32, #tpu.memory_space<vmem>>, vector<2x128xf32>,
    return
  }
  func.func @transform_0(%arg0: i32) -> (i32, i32, i32) {
    %c0_i32 = arith.constant 0 : i32
    %c0_i32_0 = arith.constant 0 : i32
    %c0_i32_1 = arith.constant 0 : i32
    return %arg0, %c0_i32, %c0_i32_0 : i32, i32, i32
  }
  func.func @transform_1(%arg0: i32) -> (i32, i32) {
    %c0_i32 = arith.constant 0 : i32
    %c0_i32_0 = arith.constant 0 : i32
    %c0_i32_1 = arith.constant 0 : i32
    return %c0_i32, %c0_i32_0 : i32, i32
  }
  func.func @transform_2(%arg0: i32) -> (i32, i32) {
    %c0_i32 = arith.constant 0 : i32
    %c0_i32_0 = arith.constant 0 : i32
    %c0_i32_1 = arith.constant 0 : i32
    return %c0_i32, %c0_i32_0 : i32, i32
  }
  func.func @transform_3(%arg0: i32) -> (i32, i32) {
    %c0_i32 = arith.constant 0 : i32
    %c0_i32_0 = arith.constant 0 : i32
    %c0_i32_1 = arith.constant 0 : i32
    return %c0_i32, %c0_i32_0 : i32, i32
  }
  func.func @transform_4(%arg0: i32) -> (i32, i32) {
    %c0_i32 = arith.constant 0 : i32
    %c0_i32_0 = arith.constant 0 : i32
    %c0_i32_1 = arith.constant 0 : i32
    return %c0_i32, %c0_i32_0 : i32, i32
  }
  func.func @transform_5(%arg0: i32) -> (i32, i32) {
    %c0_i32 = arith.constant 0 : i32
    %c0_i32_0 = arith.constant 0 : i32
    return %arg0, %c0_i32 : i32, i32
  }
}

</mosaic_0001>

<llo_original>
// kernel: tpu_custom_call.1
$region0: #{tpu_custom_call.1}
  #allocation0 [shape = 'u32[]', space=smem, size = 0x4, offset = 0x4, fixed_abs, tag = 'smem constant byte address 0x4 - core index']
  #allocation1 [shape = 'u32[144,128]{1,0:T(1,128)}', space=vmem, size = 0x12000, scoped, tag = 'internal scratch']
  %s0 = inlined_call_operand.vmem [shape: f32[2,512,64], index: 0, kind: input, shape index: {}]
  %s1 = inlined_call_operand.hbm [shape: bf16[512,2048], index: 1, kind: input, shape index: {}]
  %s2 = inlined_call_operand.hbm [shape: f32[1,2048], index: 2, kind: input, shape index: {}]
  %s3 = inlined_call_operand.hbm [shape: bf16[2048,128], index: 3, kind: input, shape index: {}]
  %s4 = inlined_call_operand.hbm [shape: f32[1,128], index: 4, kind: input, shape index: {}]
  %s5 = inlined_call_operand.hbm [shape: f32[2,128], index: 5, kind: output, shape index: {}]
  %s6 = sld [smem:[#allocation0]]
  $region46: #{tpu_custom_call.1} parent=0
    _
  %s8 = ssub.s32 1, %s6
  %s9 = scalar_select 0, %s8, %s6
  $region1: #{tpu_custom_call.1} parent=0
    #allocation2 [shape = 'u8[2097152]{0}', space=vmem, size = 0x200000, scoped, tag = 'input window, operand 1, single buffered']
    #allocation3 [shape = 's32[1]{0}', space=sflag, size = 0x4, scoped, tag = 'scoped memory for tpu_custom_call.1']
    #allocation4 [shape = 's32[1]{0}', space=sflag, size = 0x4, scoped, tag = 'scoped memory for tpu_custom_call.1']
    #allocation5 [shape = 'u8[8192]{0}', space=vmem, size = 0x2000, scoped, tag = 'input window, operand 2, single buffered']
    #allocation6 [shape = 's32[1]{0}', space=sflag, size = 0x4, scoped, tag = 'scoped memory for tpu_custom_call.1']
    #allocation7 [shape = 'u8[524288]{0}', space=vmem, size = 0x80000, scoped, tag = 'input window, operand 3, single buffered']
    #allocation8 [shape = 'u8[512]{0}', space=vmem, size = 0x400, scoped, tag = 'input window, operand 4, single buffered']
    #allocation9 [shape = 's32[1]{0}', space=sflag, size = 0x4, scoped, tag = 'scoped memory for tpu_custom_call.1']
    #allocation10 [shape = 'u8[1024]{0}', space=vmem, size = 0x400, scoped, tag = 'output window, operand 0, single buffered']
    %10 = vsyncpa [#allocation3], 0
    %11 = vsyncpa [#allocation6], 0
    %12 = vsyncpa [#allocation9], 0
    %13 = vsyncpa [#allocation4], 0
    // Predicated region
    $region2: #{tpu_custom_call.1} parent=1 // pred_check
      _
    $region3: #{tpu_custom_call.1} parent=1 // pred_check_branch
      %15 = sbr.rel (0) target = $region5
    $region4: #{tpu_custom_call.1} parent=1 // pred_region
      _
    $region5: #{tpu_custom_call.1} parent=1 // pred_fallthru
      _
    // Predicated region
    $region6: #{tpu_custom_call.1} parent=1 // pred_check
      _
    $region7: #{tpu_custom_call.1} parent=1 // pred_check_branch
      %17 = sbr.rel (0) target = $region9
    $region8: #{tpu_custom_call.1} parent=1 // pred_region
      %s19 = ssub.s32 65536, 65536
      %20 = vsyncadd [#allocation3], %s19
      %s21 = sshll.u32 [#allocation2], 4
      %s22 = int_to_ptr.vmem [resolvable:$true] %s21
      %27 = dma.hbm_to_vmem [thread:$0]  %s1, 65536, %s22, [#allocation3], 1024, 1024, 64
    $region9: #{tpu_custom_call.1} parent=1 // pred_fallthru
      _
    // Predicated region
    $region10: #{tpu_custom_call.1} parent=1 // pred_check
      _
    $region11: #{tpu_custom_call.1} parent=1 // pred_check_branch
      %29 = sbr.rel (0) target = $region13
    $region12: #{tpu_custom_call.1} parent=1 // pred_region
      %s31 = ssub.s32 256, 256
      %32 = vsyncadd [#allocation6], %s31
      %s34 = sshll.u32 [#allocation5], 4
      %s35 = int_to_ptr.vmem [resolvable:$true] %s34
      %37 = dma.hbm_to_vmem [thread:$0]  %s2, 256, %s35, [#allocation6]
    $region13: #{tpu_custom_call.1} parent=1 // pred_fallthru
      _
    // Predicated region
    $region14: #{tpu_custom_call.1} parent=1 // pred_check
      _
    $region15: #{tpu_custom_call.1} parent=1 // pred_check_branch
      %39 = sbr.rel (0) target = $region17
    $region16: #{tpu_custom_call.1} parent=1 // pred_region
      %s41 = ssub.s32 16384, 16384
      %42 = vsyncadd [#allocation6], %s41
      %s43 = sshll.u32 [#allocation7], 4
      %s44 = int_to_ptr.vmem [resolvable:$true] %s43
      %49 = dma.hbm_to_vmem [thread:$0]  %s3, 16384, %s44, [#allocation6], 64, 64, 4
    $region17: #{tpu_custom_call.1} parent=1 // pred_fallthru
      _
    // Predicated region
    $region18: #{tpu_custom_call.1} parent=1 // pred_check
      _
    $region19: #{tpu_custom_call.1} parent=1 // pred_check_branch
      %51 = sbr.rel (0) target = $region21
    $region20: #{tpu_custom_call.1} parent=1 // pred_region
      %s53 = ssub.s32 16, 16
      %54 = vsyncadd [#allocation9], %s53
      %s56 = sshll.u32 [#allocation8], 4
      %s57 = int_to_ptr.vmem [resolvable:$true] %s56
      %59 = dma.hbm_to_vmem [thread:$0]  %s4, 16, %s57, [#allocation9]
    $region21: #{tpu_custom_call.1} parent=1 // pred_fallthru
      _
    // Predicated region
    $region22: #{tpu_custom_call.1} parent=1 // pred_check
      _
    $region23: #{tpu_custom_call.1} parent=1 // pred_check_branch
      %61 = sbr.rel (0) target = $region25
    $region24: #{tpu_custom_call.1} parent=1 // pred_region
      %62 = dma.done [#allocation3], 65536
    $region25: #{tpu_custom_call.1} parent=1 // pred_fallthru
      _
    // Predicated region
    $region26: #{tpu_custom_call.1} parent=1 // pred_check
      _
    $region27: #{tpu_custom_call.1} parent=1 // pred_check_branch
      %64 = sbr.rel (0) target = $region29
    $region28: #{tpu_custom_call.1} parent=1 // pred_region
      %65 = dma.done [#allocation6], 256
    $region29: #{tpu_custom_call.1} parent=1 // pred_fallthru
      _
    // Predicated region
    $region30: #{tpu_custom_call.1} parent=1 // pred_check
      _
    $region31: #{tpu_custom_call.1} parent=1 // pred_check_branch
      %67 = sbr.rel (0) target = $region33
    $region32: #{tpu_custom_call.1} parent=1 // pred_region
      %68 = dma.done [#allocation6], 16384
    $region33: #{tpu_custom_call.1} parent=1 // pred_fallthru
      _
    // Predicated region
    $region34: #{tpu_custom_call.1} parent=1 // pred_check
      _
    $region35: #{tpu_custom_call.1} parent=1 // pred_check_branch
      %70 = sbr.rel (0) target = $region37
    $region36: #{tpu_custom_call.1} parent=1 // pred_region
      %71 = dma.done [#allocation9], 16
    $region37: #{tpu_custom_call.1} parent=1 // pred_fallthru
      _
    %v73 = vld [vmem:[%s0] sm:$0xff]
    %v74 = vld [vmem:[%s0 + $0x8] sm:$0xff]
    %v75 = vld [vmem:[%s0 + $0x10] sm:$0xff]
    %v76 = vld [vmem:[%s0 + $0x18] sm:$0xff]
    %v77 = vld [vmem:[%s0 + $0x20] sm:$0xff]
    %v78 = vld [vmem:[%s0 + $0x28] sm:$0xff]
    %v79 = vld [vmem:[%s0 + $0x30] sm:$0xff]
    %v80 = vld [vmem:[%s0 + $0x38] sm:$0xff]
    %v81 = vld [vmem:[%s0 + $0x40] sm:$0xff]
    %v82 = vld [vmem:[%s0 + $0x48] sm:$0xff]
    %v83 = vld [vmem:[%s0 + $0x50] sm:$0xff]
    %v84 = vld [vmem:[%s0 + $0x58] sm:$0xff]
    %v85 = vld [vmem:[%s0 + $0x60] sm:$0xff]
    %v86 = vld [vmem:[%s0 + $0x68] sm:$0xff]
    %v87 = vld [vmem:[%s0 + $0x70] sm:$0xff]
    %v88 = vld [vmem:[%s0 + $0x78] sm:$0xff]
    %v89 = vld [vmem:[%s0 + $0x80] sm:$0xff]
    %v90 = vld [vmem:[%s0 + $0x88] sm:$0xff]
    %v91 = vld [vmem:[%s0 + $0x90] sm:$0xff]
    %v92 = vld [vmem:[%s0 + $0x98] sm:$0xff]
    %v93 = vld [vmem:[%s0 + $0xa0] sm:$0xff]
    %v94 = vld [vmem:[%s0 + $0xa8] sm:$0xff]
    %v95 = vld [vmem:[%s0 + $0xb0] sm:$0xff]
    %v96 = vld [vmem:[%s0 + $0xb8] sm:$0xff]
    %v97 = vld [vmem:[%s0 + $0xc0] sm:$0xff]
    %v98 = vld [vmem:[%s0 + $0xc8] sm:$0xff]
    %v99 = vld [vmem:[%s0 + $0xd0] sm:$0xff]
    %v100 = vld [vmem:[%s0 + $0xd8] sm:$0xff]
    %v101 = vld [vmem:[%s0 + $0xe0] sm:$0xff]
    %v102 = vld [vmem:[%s0 + $0xe8] sm:$0xff]
    %v103 = vld [vmem:[%s0 + $0xf0] sm:$0xff]
    %v104 = vld [vmem:[%s0 + $0xf8] sm:$0xff]
    %v105 = vld [vmem:[%s0 + $0x100] sm:$0xff]
    %v106 = vld [vmem:[%s0 + $0x108] sm:$0xff]
    %v107 = vld [vmem:[%s0 + $0x110] sm:$0xff]
    %v108 = vld [vmem:[%s0 + $0x118] sm:$0xff]
    %v109 = vld [vmem:[%s0 + $0x120] sm:$0xff]
    %v110 = vld [vmem:[%s0 + $0x128] sm:$0xff]
    %v111 = vld [vmem:[%s0 + $0x130] sm:$0xff]
    %v112 = vld [vmem:[%s0 + $0x138] sm:$0xff]
    %v113 = vld [vmem:[%s0 + $0x140] sm:$0xff]
    %v114 = vld [vmem:[%s0 + $0x148] sm:$0xff]
    %v115 = vld [vmem:[%s0 + $0x150] sm:$0xff]
    %v116 = vld [vmem:[%s0 + $0x158] sm:$0xff]
    %v117 = vld [vmem:[%s0 + $0x160] sm:$0xff]
    %v118 = vld [vmem:[%s0 + $0x168] sm:$0xff]
    %v119 = vld [vmem:[%s0 + $0x170] sm:$0xff]
    %v120 = vld [vmem:[%s0 + $0x178] sm:$0xff]
    %v121 = vld [vmem:[%s0 + $0x180] sm:$0xff]
    %v122 = vld [vmem:[%s0 + $0x188] sm:$0xff]
    %v123 = vld [vmem:[%s0 + $0x190] sm:$0xff]
    %v124 = vld [vmem:[%s0 + $0x198] sm:$0xff]
    %v125 = vld [vmem:[%s0 + $0x1a0] sm:$0xff]
    %v126 = vld [vmem:[%s0 + $0x1a8] sm:$0xff]
    %v127 = vld [vmem:[%s0 + $0x1b0] sm:$0xff]
    %v128 = vld [vmem:[%s0 + $0x1b8] sm:$0xff]
    %v129 = vld [vmem:[%s0 + $0x1c0] sm:$0xff]
    %v130 = vld [vmem:[%s0 + $0x1c8] sm:$0xff]
    %v131 = vld [vmem:[%s0 + $0x1d0] sm:$0xff]
    %v132 = vld [vmem:[%s0 + $0x1d8] sm:$0xff]
    %v133 = vld [vmem:[%s0 + $0x1e0] sm:$0xff]
    %v134 = vld [vmem:[%s0 + $0x1e8] sm:$0xff]
    %v135 = vld [vmem:[%s0 + $0x1f0] sm:$0xff]
    %v136 = vld [vmem:[%s0 + $0x1f8] sm:$0xff]
    %v137 = vld [vmem:[%s0 + $0x200] sm:$0xff]
    %v138 = vld [vmem:[%s0 + $0x208] sm:$0xff]
    %v139 = vld [vmem:[%s0 + $0x210] sm:$0xff]
    %v140 = vld [vmem:[%s0 + $0x218] sm:$0xff]
    %v141 = vld [vmem:[%s0 + $0x220] sm:$0xff]
    %v142 = vld [vmem:[%s0 + $0x228] sm:$0xff]
    %v143 = vld [vmem:[%s0 + $0x230] sm:$0xff]
    %v144 = vld [vmem:[%s0 + $0x238] sm:$0xff]
    %v145 = vld [vmem:[%s0 + $0x240] sm:$0xff]
    %v146 = vld [vmem:[%s0 + $0x248] sm:$0xff]
    %v147 = vld [vmem:[%s0 + $0x250] sm:$0xff]
    %v148 = vld [vmem:[%s0 + $0x258] sm:$0xff]
    %v149 = vld [vmem:[%s0 + $0x260] sm:$0xff]
    %v150 = vld [vmem:[%s0 + $0x268] sm:$0xff]
    %v151 = vld [vmem:[%s0 + $0x270] sm:$0xff]
    %v152 = vld [vmem:[%s0 + $0x278] sm:$0xff]
    %v153 = vld [vmem:[%s0 + $0x280] sm:$0xff]
    %v154 = vld [vmem:[%s0 + $0x288] sm:$0xff]
    %v155 = vld [vmem:[%s0 + $0x290] sm:$0xff]
    %v156 = vld [vmem:[%s0 + $0x298] sm:$0xff]
    %v157 = vld [vmem:[%s0 + $0x2a0] sm:$0xff]
    %v158 = vld [vmem:[%s0 + $0x2a8] sm:$0xff]
    %v159 = vld [vmem:[%s0 + $0x2b0] sm:$0xff]
    %v160 = vld [vmem:[%s0 + $0x2b8] sm:$0xff]
    %v161 = vld [vmem:[%s0 + $0x2c0] sm:$0xff]
    %v162 = vld [vmem:[%s0 + $0x2c8] sm:$0xff]
    %v163 = vld [vmem:[%s0 + $0x2d0] sm:$0xff]
    %v164 = vld [vmem:[%s0 + $0x2d8] sm:$0xff]
    %v165 = vld [vmem:[%s0 + $0x2e0] sm:$0xff]
    %v166 = vld [vmem:[%s0 + $0x2e8] sm:$0xff]
    %v167 = vld [vmem:[%s0 + $0x2f0] sm:$0xff]
    %v168 = vld [vmem:[%s0 + $0x2f8] sm:$0xff]
    %v169 = vld [vmem:[%s0 + $0x300] sm:$0xff]
    %v170 = vld [vmem:[%s0 + $0x308] sm:$0xff]
    %v171 = vld [vmem:[%s0 + $0x310] sm:$0xff]
    %v172 = vld [vmem:[%s0 + $0x318] sm:$0xff]
    %v173 = vld [vmem:[%s0 + $0x320] sm:$0xff]
    %v174 = vld [vmem:[%s0 + $0x328] sm:$0xff]
    %v175 = vld [vmem:[%s0 + $0x330] sm:$0xff]
    %v176 = vld [vmem:[%s0 + $0x338] sm:$0xff]
    %v177 = vld [vmem:[%s0 + $0x340] sm:$0xff]
    %v178 = vld [vmem:[%s0 + $0x348] sm:$0xff]
    %v179 = vld [vmem:[%s0 + $0x350] sm:$0xff]
    %v180 = vld [vmem:[%s0 + $0x358] sm:$0xff]
    %v181 = vld [vmem:[%s0 + $0x360] sm:$0xff]
    %v182 = vld [vmem:[%s0 + $0x368] sm:$0xff]
    %v183 = vld [vmem:[%s0 + $0x370] sm:$0xff]
    %v184 = vld [vmem:[%s0 + $0x378] sm:$0xff]
    %v185 = vld [vmem:[%s0 + $0x380] sm:$0xff]
    %v186 = vld [vmem:[%s0 + $0x388] sm:$0xff]
    %v187 = vld [vmem:[%s0 + $0x390] sm:$0xff]
    %v188 = vld [vmem:[%s0 + $0x398] sm:$0xff]
    %v189 = vld [vmem:[%s0 + $0x3a0] sm:$0xff]
    %v190 = vld [vmem:[%s0 + $0x3a8] sm:$0xff]
    %v191 = vld [vmem:[%s0 + $0x3b0] sm:$0xff]
    %v192 = vld [vmem:[%s0 + $0x3b8] sm:$0xff]
    %v193 = vld [vmem:[%s0 + $0x3c0] sm:$0xff]
    %v194 = vld [vmem:[%s0 + $0x3c8] sm:$0xff]
    %v195 = vld [vmem:[%s0 + $0x3d0] sm:$0xff]
    %v196 = vld [vmem:[%s0 + $0x3d8] sm:$0xff]
    %v197 = vld [vmem:[%s0 + $0x3e0] sm:$0xff]
    %v198 = vld [vmem:[%s0 + $0x3e8] sm:$0xff]
    %v199 = vld [vmem:[%s0 + $0x3f0] sm:$0xff]
    %v200 = vld [vmem:[%s0 + $0x3f8] sm:$0xff]
    %vm201 = vcmask 523264
    %v202 = vsel %vm201, %v73, 0.0
    %203 = vadd.xlane.f32.xlu0 %v202
    %v204 = vpop.xlane.xlu0 %203
    %v205 = vsel %vm201, %v74, 0.0
    %206 = vadd.xlane.f32.xlu0 %v205
    %v207 = vpop.xlane.xlu0 %206
    %v208 = vsel %vm201, %v75, 0.0
    %209 = vadd.xlane.f32.xlu0 %v208
    %v210 = vpop.xlane.xlu0 %209
    %v211 = vsel %vm201, %v76, 0.0
    %212 = vadd.xlane.f32.xlu0 %v211
    %v213 = vpop.xlane.xlu0 %212
    %v214 = vsel %vm201, %v77, 0.0
    %215 = vadd.xlane.f32.xlu0 %v214
    %v216 = vpop.xlane.xlu0 %215
    %v217 = vsel %vm201, %v78, 0.0
    %218 = vadd.xlane.f32.xlu0 %v217
    %v219 = vpop.xlane.xlu0 %218
    %v220 = vsel %vm201, %v79, 0.0
    %221 = vadd.xlane.f32.xlu0 %v220
    %v222 = vpop.xlane.xlu0 %221
    %v223 = vsel %vm201, %v80, 0.0
    %224 = vadd.xlane.f32.xlu0 %v223
    %v225 = vpop.xlane.xlu0 %224
    %v226 = vsel %vm201, %v81, 0.0
    %227 = vadd.xlane.f32.xlu0 %v226
    %v228 = vpop.xlane.xlu0 %227
    %v229 = vsel %vm201, %v82, 0.0
    %230 = vadd.xlane.f32.xlu0 %v229
    %v231 = vpop.xlane.xlu0 %230
    %v232 = vsel %vm201, %v83, 0.0
    %233 = vadd.xlane.f32.xlu0 %v232
    %v234 = vpop.xlane.xlu0 %233
    %v235 = vsel %vm201, %v84, 0.0
    %236 = vadd.xlane.f32.xlu0 %v235
    %v237 = vpop.xlane.xlu0 %236
    %v238 = vsel %vm201, %v85, 0.0
    %239 = vadd.xlane.f32.xlu0 %v238
    %v240 = vpop.xlane.xlu0 %239
    %v241 = vsel %vm201, %v86, 0.0
    %242 = vadd.xlane.f32.xlu0 %v241
    %v243 = vpop.xlane.xlu0 %242
    %v244 = vsel %vm201, %v87, 0.0
    %245 = vadd.xlane.f32.xlu0 %v244
    %v246 = vpop.xlane.xlu0 %245
    %v247 = vsel %vm201, %v88, 0.0
    %248 = vadd.xlane.f32.xlu0 %v247
    %v249 = vpop.xlane.xlu0 %248
    %v250 = vsel %vm201, %v89, 0.0
    %251 = vadd.xlane.f32.xlu0 %v250
    %v252 = vpop.xlane.xlu0 %251
    %v253 = vsel %vm201, %v90, 0.0
    %254 = vadd.xlane.f32.xlu0 %v253
    %v255 = vpop.xlane.xlu0 %254
    %v256 = vsel %vm201, %v91, 0.0
    %257 = vadd.xlane.f32.xlu0 %v256
    %v258 = vpop.xlane.xlu0 %257
    %v259 = vsel %vm201, %v92, 0.0
    %260 = vadd.xlane.f32.xlu0 %v259
    %v261 = vpop.xlane.xlu0 %260
    %v262 = vsel %vm201, %v93, 0.0
    %263 = vadd.xlane.f32.xlu0 %v262
    %v264 = vpop.xlane.xlu0 %263
    %v265 = vsel %vm201, %v94, 0.0
    %266 = vadd.xlane.f32.xlu0 %v265
    %v267 = vpop.xlane.xlu0 %266
    %v268 = vsel %vm201, %v95, 0.0
    %269 = vadd.xlane.f32.xlu0 %v268
    %v270 = vpop.xlane.xlu0 %269
    %v271 = vsel %vm201, %v96, 0.0
    %272 = vadd.xlane.f32.xlu0 %v271
    %v273 = vpop.xlane.xlu0 %272
    %v274 = vsel %vm201, %v97, 0.0
    %275 = vadd.xlane.f32.xlu0 %v274
    %v276 = vpop.xlane.xlu0 %275
    %v277 = vsel %vm201, %v98, 0.0
    %278 = vadd.xlane.f32.xlu0 %v277
    %v279 = vpop.xlane.xlu0 %278
    %v280 = vsel %vm201, %v99, 0.0
    %281 = vadd.xlane.f32.xlu0 %v280
    %v282 = vpop.xlane.xlu0 %281
    %v283 = vsel %vm201, %v100, 0.0
    %284 = vadd.xlane.f32.xlu0 %v283
    %v285 = vpop.xlane.xlu0 %284
    %v286 = vsel %vm201, %v101, 0.0
    %287 = vadd.xlane.f32.xlu0 %v286
    %v288 = vpop.xlane.xlu0 %287
    %v289 = vsel %vm201, %v102, 0.0
    %290 = vadd.xlane.f32.xlu0 %v289
    %v291 = vpop.xlane.xlu0 %290
    %v292 = vsel %vm201, %v103, 0.0
    %293 = vadd.xlane.f32.xlu0 %v292
    %v294 = vpop.xlane.xlu0 %293
    %v295 = vsel %vm201, %v104, 0.0
    %296 = vadd.xlane.f32.xlu0 %v295
    %v297 = vpop.xlane.xlu0 %296
    %v298 = vsel %vm201, %v105, 0.0
    %299 = vadd.xlane.f32.xlu0 %v298
    %v300 = vpop.xlane.xlu0 %299
    %v301 = vsel %vm201, %v106, 0.0
    %302 = vadd.xlane.f32.xlu0 %v301
    %v303 = vpop.xlane.xlu0 %302
    %v304 = vsel %vm201, %v107, 0.0
    %305 = vadd.xlane.f32.xlu0 %v304
    %v306 = vpop.xlane.xlu0 %305
    %v307 = vsel %vm201, %v108, 0.0
    %308 = vadd.xlane.f32.xlu0 %v307
    %v309 = vpop.xlane.xlu0 %308
    %v310 = vsel %vm201, %v109, 0.0
    %311 = vadd.xlane.f32.xlu0 %v310
    %v312 = vpop.xlane.xlu0 %311
    %v313 = vsel %vm201, %v110, 0.0
    %314 = vadd.xlane.f32.xlu0 %v313
    %v315 = vpop.xlane.xlu0 %314
    %v316 = vsel %vm201, %v111, 0.0
    %317 = vadd.xlane.f32.xlu0 %v316
    %v318 = vpop.xlane.xlu0 %317
    %v319 = vsel %vm201, %v112, 0.0
    %320 = vadd.xlane.f32.xlu0 %v319
    %v321 = vpop.xlane.xlu0 %320
    %v322 = vsel %vm201, %v113, 0.0
    %323 = vadd.xlane.f32.xlu0 %v322
    %v324 = vpop.xlane.xlu0 %323
    %v325 = vsel %vm201, %v114, 0.0
    %326 = vadd.xlane.f32.xlu0 %v325
    %v327 = vpop.xlane.xlu0 %326
    %v328 = vsel %vm201, %v115, 0.0
    %329 = vadd.xlane.f32.xlu0 %v328
    %v330 = vpop.xlane.xlu0 %329
    %v331 = vsel %vm201, %v116, 0.0
    %332 = vadd.xlane.f32.xlu0 %v331
    %v333 = vpop.xlane.xlu0 %332
    %v334 = vsel %vm201, %v117, 0.0
    %335 = vadd.xlane.f32.xlu0 %v334
    %v336 = vpop.xlane.xlu0 %335
    %v337 = vsel %vm201, %v118, 0.0
    %338 = vadd.xlane.f32.xlu0 %v337
    %v339 = vpop.xlane.xlu0 %338
    %v340 = vsel %vm201, %v119, 0.0
    %341 = vadd.xlane.f32.xlu0 %v340
    %v342 = vpop.xlane.xlu0 %341
    %v343 = vsel %vm201, %v120, 0.0
    %344 = vadd.xlane.f32.xlu0 %v343
    %v345 = vpop.xlane.xlu0 %344
    %v346 = vsel %vm201, %v121, 0.0
    %347 = vadd.xlane.f32.xlu0 %v346
    %v348 = vpop.xlane.xlu0 %347
    %v349 = vsel %vm201, %v122, 0.0
    %350 = vadd.xlane.f32.xlu0 %v349
    %v351 = vpop.xlane.xlu0 %350
    %v352 = vsel %vm201, %v123, 0.0
    %353 = vadd.xlane.f32.xlu0 %v352
    %v354 = vpop.xlane.xlu0 %353
    %v355 = vsel %vm201, %v124, 0.0
    %356 = vadd.xlane.f32.xlu0 %v355
    %v357 = vpop.xlane.xlu0 %356
    %v358 = vsel %vm201, %v125, 0.0
    %359 = vadd.xlane.f32.xlu0 %v358
    %v360 = vpop.xlane.xlu0 %359
    %v361 = vsel %vm201, %v126, 0.0
    %362 = vadd.xlane.f32.xlu0 %v361
    %v363 = vpop.xlane.xlu0 %362
    %v364 = vsel %vm201, %v127, 0.0
    %365 = vadd.xlane.f32.xlu0 %v364
    %v366 = vpop.xlane.xlu0 %365
    %v367 = vsel %vm201, %v128, 0.0
    %368 = vadd.xlane.f32.xlu0 %v367
    %v369 = vpop.xlane.xlu0 %368
    %v370 = vsel %vm201, %v129, 0.0
    %371 = vadd.xlane.f32.xlu0 %v370
    %v372 = vpop.xlane.xlu0 %371
    %v373 = vsel %vm201, %v130, 0.0
    %374 = vadd.xlane.f32.xlu0 %v373
    %v375 = vpop.xlane.xlu0 %374
    %v376 = vsel %vm201, %v131, 0.0
    %377 = vadd.xlane.f32.xlu0 %v376
    %v378 = vpop.xlane.xlu0 %377
    %v379 = vsel %vm201, %v132, 0.0
    %380 = vadd.xlane.f32.xlu0 %v379
    %v381 = vpop.xlane.xlu0 %380
    %v382 = vsel %vm201, %v133, 0.0
    %383 = vadd.xlane.f32.xlu0 %v382
    %v384 = vpop.xlane.xlu0 %383
    %v385 = vsel %vm201, %v134, 0.0
    %386 = vadd.xlane.f32.xlu0 %v385
    %v387 = vpop.xlane.xlu0 %386
    %v388 = vsel %vm201, %v135, 0.0
    %389 = vadd.xlane.f32.xlu0 %v388
    %v390 = vpop.xlane.xlu0 %389
    %v391 = vsel %vm201, %v136, 0.0
    %392 = vadd.xlane.f32.xlu0 %v391
    %v393 = vpop.xlane.xlu0 %392
    %v394 = vsel %vm201, %v137, 0.0
    %395 = vadd.xlane.f32.xlu0 %v394
    %v396 = vpop.xlane.xlu0 %395
    %v397 = vsel %vm201, %v138, 0.0
    %398 = vadd.xlane.f32.xlu0 %v397
    %v399 = vpop.xlane.xlu0 %398
    %v400 = vsel %vm201, %v139, 0.0
    %401 = vadd.xlane.f32.xlu0 %v400
    %v402 = vpop.xlane.xlu0 %401
    %v403 = vsel %vm201, %v140, 0.0
    %404 = vadd.xlane.f32.xlu0 %v403
    %v405 = vpop.xlane.xlu0 %404
    %v406 = vsel %vm201, %v141, 0.0
    %407 = vadd.xlane.f32.xlu0 %v406
    %v408 = vpop.xlane.xlu0 %407
    %v409 = vsel %vm201, %v142, 0.0
    %410 = vadd.xlane.f32.xlu0 %v409
    %v411 = vpop.xlane.xlu0 %410
    %v412 = vsel %vm201, %v143, 0.0
    %413 = vadd.xlane.f32.xlu0 %v412
    %v414 = vpop.xlane.xlu0 %413
    %v415 = vsel %vm201, %v144, 0.0
    %416 = vadd.xlane.f32.xlu0 %v415
    %v417 = vpop.xlane.xlu0 %416
    %v418 = vsel %vm201, %v145, 0.0
    %419 = vadd.xlane.f32.xlu0 %v418
    %v420 = vpop.xlane.xlu0 %419
    %v421 = vsel %vm201, %v146, 0.0
    %422 = vadd.xlane.f32.xlu0 %v421
    %v423 = vpop.xlane.xlu0 %422
    %v424 = vsel %vm201, %v147, 0.0
    %425 = vadd.xlane.f32.xlu0 %v424
    %v426 = vpop.xlane.xlu0 %425
    %v427 = vsel %vm201, %v148, 0.0
    %428 = vadd.xlane.f32.xlu0 %v427
    %v429 = vpop.xlane.xlu0 %428
    %v430 = vsel %vm201, %v149, 0.0
    %431 = vadd.xlane.f32.xlu0 %v430
    %v432 = vpop.xlane.xlu0 %431
    %v433 = vsel %vm201, %v150, 0.0
    %434 = vadd.xlane.f32.xlu0 %v433
    %v435 = vpop.xlane.xlu0 %434
    %v436 = vsel %vm201, %v151, 0.0
    %437 = vadd.xlane.f32.xlu0 %v436
    %v438 = vpop.xlane.xlu0 %437
    %v439 = vsel %vm201, %v152, 0.0
    %440 = vadd.xlane.f32.xlu0 %v439
    %v441 = vpop.xlane.xlu0 %440
    %v442 = vsel %vm201, %v153, 0.0
    %443 = vadd.xlane.f32.xlu0 %v442
    %v444 = vpop.xlane.xlu0 %443
    %v445 = vsel %vm201, %v154, 0.0
    %446 = vadd.xlane.f32.xlu0 %v445
    %v447 = vpop.xlane.xlu0 %446
    %v448 = vsel %vm201, %v155, 0.0
    %449 = vadd.xlane.f32.xlu0 %v448
    %v450 = vpop.xlane.xlu0 %449
    %v451 = vsel %vm201, %v156, 0.0
    %452 = vadd.xlane.f32.xlu0 %v451
    %v453 = vpop.xlane.xlu0 %452
    %v454 = vsel %vm201, %v157, 0.0
    %455 = vadd.xlane.f32.xlu0 %v454
    %v456 = vpop.xlane.xlu0 %455
    %v457 = vsel %vm201, %v158, 0.0
    %458 = vadd.xlane.f32.xlu0 %v457
    %v459 = vpop.xlane.xlu0 %458
    %v460 = vsel %vm201, %v159, 0.0
    %461 = vadd.xlane.f32.xlu0 %v460
    %v462 = vpop.xlane.xlu0 %461
    %v463 = vsel %vm201, %v160, 0.0
    %464 = vadd.xlane.f32.xlu0 %v463
    %v465 = vpop.xlane.xlu0 %464
    %v466 = vsel %vm201, %v161, 0.0
    %467 = vadd.xlane.f32.xlu0 %v466
    %v468 = vpop.xlane.xlu0 %467
    %v469 = vsel %vm201, %v162, 0.0
    %470 = vadd.xlane.f32.xlu0 %v469
    %v471 = vpop.xlane.xlu0 %470
    %v472 = vsel %vm201, %v163, 0.0
    %473 = vadd.xlane.f32.xlu0 %v472
    %v474 = vpop.xlane.xlu0 %473
    %v475 = vsel %vm201, %v164, 0.0
    %476 = vadd.xlane.f32.xlu0 %v475
    %v477 = vpop.xlane.xlu0 %476
    %v478 = vsel %vm201, %v165, 0.0
    %479 = vadd.xlane.f32.xlu0 %v478
    %v480 = vpop.xlane.xlu0 %479
    %v481 = vsel %vm201, %v166, 0.0
    %482 = vadd.xlane.f32.xlu0 %v481
    %v483 = vpop.xlane.xlu0 %482
    %v484 = vsel %vm201, %v167, 0.0
    %485 = vadd.xlane.f32.xlu0 %v484
    %v486 = vpop.xlane.xlu0 %485
    %v487 = vsel %vm201, %v168, 0.0
    %488 = vadd.xlane.f32.xlu0 %v487
    %v489 = vpop.xlane.xlu0 %488
    %v490 = vsel %vm201, %v169, 0.0
    %491 = vadd.xlane.f32.xlu0 %v490
    %v492 = vpop.xlane.xlu0 %491
    %v493 = vsel %vm201, %v170, 0.0
    %494 = vadd.xlane.f32.xlu0 %v493
    %v495 = vpop.xlane.xlu0 %494
    %v496 = vsel %vm201, %v171, 0.0
    %497 = vadd.xlane.f32.xlu0 %v496
    %v498 = vpop.xlane.xlu0 %497
    %v499 = vsel %vm201, %v172, 0.0
    %500 = vadd.xlane.f32.xlu0 %v499
    %v501 = vpop.xlane.xlu0 %500
    %v502 = vsel %vm201, %v173, 0.0
    %503 = vadd.xlane.f32.xlu0 %v502
    %v504 = vpop.xlane.xlu0 %503
    %v505 = vsel %vm201, %v174, 0.0
    %506 = vadd.xlane.f32.xlu0 %v505
    %v507 = vpop.xlane.xlu0 %506
    %v508 = vsel %vm201, %v175, 0.0
    %509 = vadd.xlane.f32.xlu0 %v508
    %v510 = vpop.xlane.xlu0 %509
    %v511 = vsel %vm201, %v176, 0.0
    %512 = vadd.xlane.f32.xlu0 %v511
    %v513 = vpop.xlane.xlu0 %512
    %v514 = vsel %vm201, %v177, 0.0
    %515 = vadd.xlane.f32.xlu0 %v514
    %v516 = vpop.xlane.xlu0 %515
    %v517 = vsel %vm201, %v178, 0.0
    %518 = vadd.xlane.f32.xlu0 %v517
    %v519 = vpop.xlane.xlu0 %518
    %v520 = vsel %vm201, %v179, 0.0
    %521 = vadd.xlane.f32.xlu0 %v520
    %v522 = vpop.xlane.xlu0 %521
    %v523 = vsel %vm201, %v180, 0.0
    %524 = vadd.xlane.f32.xlu0 %v523
    %v525 = vpop.xlane.xlu0 %524
    %v526 = vsel %vm201, %v181, 0.0
    %527 = vadd.xlane.f32.xlu0 %v526
    %v528 = vpop.xlane.xlu0 %527
    %v529 = vsel %vm201, %v182, 0.0
    %530 = vadd.xlane.f32.xlu0 %v529
    %v531 = vpop.xlane.xlu0 %530
    %v532 = vsel %vm201, %v183, 0.0
    %533 = vadd.xlane.f32.xlu0 %v532
    %v534 = vpop.xlane.xlu0 %533
    %v535 = vsel %vm201, %v184, 0.0
    %536 = vadd.xlane.f32.xlu0 %v535
    %v537 = vpop.xlane.xlu0 %536
    %v538 = vsel %vm201, %v185, 0.0
    %539 = vadd.xlane.f32.xlu0 %v538
    %v540 = vpop.xlane.xlu0 %539
    %v541 = vsel %vm201, %v186, 0.0
    %542 = vadd.xlane.f32.xlu0 %v541
    %v543 = vpop.xlane.xlu0 %542
    %v544 = vsel %vm201, %v187, 0.0
    %545 = vadd.xlane.f32.xlu0 %v544
    %v546 = vpop.xlane.xlu0 %545
    %v547 = vsel %vm201, %v188, 0.0
    %548 = vadd.xlane.f32.xlu0 %v547
    %v549 = vpop.xlane.xlu0 %548
    %v550 = vsel %vm201, %v189, 0.0
    %551 = vadd.xlane.f32.xlu0 %v550
    %v552 = vpop.xlane.xlu0 %551
    %v553 = vsel %vm201, %v190, 0.0
    %554 = vadd.xlane.f32.xlu0 %v553
    %v555 = vpop.xlane.xlu0 %554
    %v556 = vsel %vm201, %v191, 0.0
    %557 = vadd.xlane.f32.xlu0 %v556
    %v558 = vpop.xlane.xlu0 %557
    %v559 = vsel %vm201, %v192, 0.0
    %560 = vadd.xlane.f32.xlu0 %v559
    %v561 = vpop.xlane.xlu0 %560
    %v562 = vsel %vm201, %v193, 0.0
    %563 = vadd.xlane.f32.xlu0 %v562
    %v564 = vpop.xlane.xlu0 %563
    %v565 = vsel %vm201, %v194, 0.0
    %566 = vadd.xlane.f32.xlu0 %v565
    %v567 = vpop.xlane.xlu0 %566
    %v568 = vsel %vm201, %v195, 0.0
    %569 = vadd.xlane.f32.xlu0 %v568
    %v570 = vpop.xlane.xlu0 %569
    %v571 = vsel %vm201, %v196, 0.0
    %572 = vadd.xlane.f32.xlu0 %v571
    %v573 = vpop.xlane.xlu0 %572
    %v574 = vsel %vm201, %v197, 0.0
    %575 = vadd.xlane.f32.xlu0 %v574
    %v576 = vpop.xlane.xlu0 %575
    %v577 = vsel %vm201, %v198, 0.0
    %578 = vadd.xlane.f32.xlu0 %v577
    %v579 = vpop.xlane.xlu0 %578
    %v580 = vsel %vm201, %v199, 0.0
    %581 = vadd.xlane.f32.xlu0 %v580
    %v582 = vpop.xlane.xlu0 %581
    %v583 = vsel %vm201, %v200, 0.0
    %584 = vadd.xlane.f32.xlu0 %v583
    %v585 = vpop.xlane.xlu0 %584
    %v586 = vpack.c.bf16 %v207, %v204
    %v587 = vpack.c.bf16 %v213, %v210
    %v588 = vpack.c.bf16 %v219, %v216
    %v589 = vpack.c.bf16 %v225, %v222
    %v590 = vpack.c.bf16 %v231, %v228
    %v591 = vpack.c.bf16 %v237, %v234
    %v592 = vpack.c.bf16 %v243, %v240
    %v593 = vpack.c.bf16 %v249, %v246
    %v594 = vpack.c.bf16 %v255, %v252
    %v595 = vpack.c.bf16 %v261, %v258
    %v596 = vpack.c.bf16 %v267, %v264
    %v597 = vpack.c.bf16 %v273, %v270
    %v598 = vpack.c.bf16 %v279, %v276
    %v599 = vpack.c.bf16 %v285, %v282
    %v600 = vpack.c.bf16 %v291, %v288
    %v601 = vpack.c.bf16 %v297, %v294
    %v602 = vpack.c.bf16 %v303, %v300
    %v603 = vpack.c.bf16 %v309, %v306
    %v604 = vpack.c.bf16 %v315, %v312
    %v605 = vpack.c.bf16 %v321, %v318
    %v606 = vpack.c.bf16 %v327, %v324
    %v607 = vpack.c.bf16 %v333, %v330
    %v608 = vpack.c.bf16 %v339, %v336
    %v609 = vpack.c.bf16 %v345, %v342
    %v610 = vpack.c.bf16 %v351, %v348
    %v611 = vpack.c.bf16 %v357, %v354
    %v612 = vpack.c.bf16 %v363, %v360
    %v613 = vpack.c.bf16 %v369, %v366
    %v614 = vpack.c.bf16 %v375, %v372
    %v615 = vpack.c.bf16 %v381, %v378
    %v616 = vpack.c.bf16 %v387, %v384
    %v617 = vpack.c.bf16 %v393, %v390
    %v618 = vpack.c.bf16 %v399, %v396
    %v619 = vpack.c.bf16 %v405, %v402
    %v620 = vpack.c.bf16 %v411, %v408
    %v621 = vpack.c.bf16 %v417, %v414
    %v622 = vpack.c.bf16 %v423, %v420
    %v623 = vpack.c.bf16 %v429, %v426
    %v624 = vpack.c.bf16 %v435, %v432
    %v625 = vpack.c.bf16 %v441, %v438
    %v626 = vpack.c.bf16 %v447, %v444
    %v627 = vpack.c.bf16 %v453, %v450
    %v628 = vpack.c.bf16 %v459, %v456
    %v629 = vpack.c.bf16 %v465, %v462
    %v630 = vpack.c.bf16 %v471, %v468
    %v631 = vpack.c.bf16 %v477, %v474
    %v632 = vpack.c.bf16 %v483, %v480
    %v633 = vpack.c.bf16 %v489, %v486
    %v634 = vpack.c.bf16 %v495, %v492
    %v635 = vpack.c.bf16 %v501, %v498
    %v636 = vpack.c.bf16 %v507, %v504
    %v637 = vpack.c.bf16 %v513, %v510
    %v638 = vpack.c.bf16 %v519, %v516
    %v639 = vpack.c.bf16 %v525, %v522
    %v640 = vpack.c.bf16 %v531, %v528
    %v641 = vpack.c.bf16 %v537, %v534
    %v642 = vpack.c.bf16 %v543, %v540
    %v643 = vpack.c.bf16 %v549, %v546
    %v644 = vpack.c.bf16 %v555, %v552
    %v645 = vpack.c.bf16 %v561, %v558
    %v646 = vpack.c.bf16 %v567, %v564
    %v647 = vpack.c.bf16 %v573, %v570
    %v648 = vpack.c.bf16 %v579, %v576
    %v649 = vpack.c.bf16 %v585, %v582
    %v650 = vld [vmem:[#allocation2] sm:$0xff]
    %v651 = vld [vmem:[#allocation2 + $0x8] sm:$0xff]
    %v652 = vld [vmem:[#allocation2 + $0x10] sm:$0xff]
    %v653 = vld [vmem:[#allocation2 + $0x18] sm:$0xff]
    %v654 = vld [vmem:[#allocation2 + $0x20] sm:$0xff]
    %v655 = vld [vmem:[#allocation2 + $0x28] sm:$0xff]
    %v656 = vld [vmem:[#allocation2 + $0x30] sm:$0xff]
    %v657 = vld [vmem:[#allocation2 + $0x38] sm:$0xff]
    %v658 = vld [vmem:[#allocation2 + $0x40] sm:$0xff]
    %v659 = vld [vmem:[#allocation2 + $0x48] sm:$0xff]
    %v660 = vld [vmem:[#allocation2 + $0x50] sm:$0xff]
    %v661 = vld [vmem:[#allocation2 + $0x58] sm:$0xff]
    %v662 = vld [vmem:[#allocation2 + $0x60] sm:$0xff]
    %v663 = vld [vmem:[#allocation2 + $0x68] sm:$0xff]
    %v664 = vld [vmem:[#allocation2 + $0x70] sm:$0xff]
    %v665 = vld [vmem:[#allocation2 + $0x78] sm:$0xff]
    %v666 = vld [vmem:[#allocation2 + $0x80] sm:$0xff]
    %v667 = vld [vmem:[#allocation2 + $0x88] sm:$0xff]
    %v668 = vld [vmem:[#allocation2 + $0x90] sm:$0xff]
    %v669 = vld [vmem:[#allocation2 + $0x98] sm:$0xff]
    %v670 = vld [vmem:[#allocation2 + $0xa0] sm:$0xff]
    %v671 = vld [vmem:[#allocation2 + $0xa8] sm:$0xff]
    %v672 = vld [vmem:[#allocation2 + $0xb0] sm:$0xff]
    %v673 = vld [vmem:[#allocation2 + $0xb8] sm:$0xff]
    %v674 = vld [vmem:[#allocation2 + $0xc0] sm:$0xff]
    %v675 = vld [vmem:[#allocation2 + $0xc8] sm:$0xff]
    %v676 = vld [vmem:[#allocation2 + $0xd0] sm:$0xff]
    %v677 = vld [vmem:[#allocation2 + $0xd8] sm:$0xff]
    %v678 = vld [vmem:[#allocation2 + $0xe0] sm:$0xff]
    %v679 = vld [vmem:[#allocation2 + $0xe8] sm:$0xff]
    %v680 = vld [vmem:[#allocation2 + $0xf0] sm:$0xff]
    %v681 = vld [vmem:[#allocation2 + $0xf8] sm:$0xff]
    %v682 = vld [vmem:[#allocation2 + $0x100] sm:$0xff]
    %v683 = vld [vmem:[#allocation2 + $0x108] sm:$0xff]
    %v684 = vld [vmem:[#allocation2 + $0x110] sm:$0xff]
    %v685 = vld [vmem:[#allocation2 + $0x118] sm:$0xff]
    %v686 = vld [vmem:[#allocation2 + $0x120] sm:$0xff]
    %v687 = vld [vmem:[#allocation2 + $0x128] sm:$0xff]
    %v688 = vld [vmem:[#allocation2 + $0x130] sm:$0xff]
    %v689 = vld [vmem:[#allocation2 + $0x138] sm:$0xff]
    %v690 = vld [vmem:[#allocation2 + $0x140] sm:$0xff]
    %v691 = vld [vmem:[#allocation2 + $0x148] sm:$0xff]
    %v692 = vld [vmem:[#allocation2 + $0x150] sm:$0xff]
    %v693 = vld [vmem:[#allocation2 + $0x158] sm:$0xff]
    %v694 = vld [vmem:[#allocation2 + $0x160] sm:$0xff]
    %v695 = vld [vmem:[#allocation2 + $0x168] sm:$0xff]
    %v696 = vld [vmem:[#allocation2 + $0x170] sm:$0xff]
    %v697 = vld [vmem:[#allocation2 + $0x178] sm:$0xff]
    %v698 = vld [vmem:[#allocation2 + $0x180] sm:$0xff]
    %v699 = vld [vmem:[#allocation2 + $0x188] sm:$0xff]
    %v700 = vld [vmem:[#allocation2 + $0x190] sm:$0xff]
    %v701 = vld [vmem:[#allocation2 + $0x198] sm:$0xff]
    %v702 = vld [vmem:[#allocation2 + $0x1a0] sm:$0xff]
    %v703 = vld [vmem:[#allocation2 + $0x1a8] sm:$0xff]
    %v704 = vld [vmem:[#allocation2 + $0x1b0] sm:$0xff]
    %v705 = vld [vmem:[#allocation2 + $0x1b8] sm:$0xff]
    %v706 = vld [vmem:[#allocation2 + $0x1c0] sm:$0xff]
    %v707 = vld [vmem:[#allocation2 + $0x1c8] sm:$0xff]
    %v708 = vld [vmem:[#allocation2 + $0x1d0] sm:$0xff]
    %v709 = vld [vmem:[#allocation2 + $0x1d8] sm:$0xff]
    %v710 = vld [vmem:[#allocation2 + $0x1e0] sm:$0xff]
    %v711 = vld [vmem:[#allocation2 + $0x1e8] sm:$0xff]
    %v712 = vld [vmem:[#allocation2 + $0x1f0] sm:$0xff]
    %v713 = vld [vmem:[#allocation2 + $0x1f8] sm:$0xff]
    %v714 = vld [vmem:[#allocation2 + $0x200] sm:$0xff]
    %v715 = vld [vmem:[#allocation2 + $0x208] sm:$0xff]
    %v716 = vld [vmem:[#allocation2 + $0x210] sm:$0xff]
    %v717 = vld [vmem:[#allocation2 + $0x218] sm:$0xff]
    %v718 = vld [vmem:[#allocation2 + $0x220] sm:$0xff]
    %v719 = vld [vmem:[#allocation2 + $0x228] sm:$0xff]
    %v720 = vld [vmem:[#allocation2 + $0x230] sm:$0xff]
    %v721 = vld [vmem:[#allocation2 + $0x238] sm:$0xff]
    %v722 = vld [vmem:[#allocation2 + $0x240] sm:$0xff]
    %v723 = vld [vmem:[#allocation2 + $0x248] sm:$0xff]
    %v724 = vld [vmem:[#allocation2 + $0x250] sm:$0xff]
    %v725 = vld [vmem:[#allocation2 + $0x258] sm:$0xff]
    %v726 = vld [vmem:[#allocation2 + $0x260] sm:$0xff]
    %v727 = vld [vmem:[#allocation2 + $0x268] sm:$0xff]
    %v728 = vld [vmem:[#allocation2 + $0x270] sm:$0xff]
    %v729 = vld [vmem:[#allocation2 + $0x278] sm:$0xff]
    %v730 = vld [vmem:[#allocation2 + $0x280] sm:$0xff]
    %v731 = vld [vmem:[#allocation2 + $0x288] sm:$0xff]
    %v732 = vld [vmem:[#allocation2 + $0x290] sm:$0xff]
    %v733 = vld [vmem:[#allocation2 + $0x298] sm:$0xff]
    %v734 = vld [vmem:[#allocation2 + $0x2a0] sm:$0xff]
    %v735 = vld [vmem:[#allocation2 + $0x2a8] sm:$0xff]
    %v736 = vld [vmem:[#allocation2 + $0x2b0] sm:$0xff]
    %v737 = vld [vmem:[#allocation2 + $0x2b8] sm:$0xff]
    %v738 = vld [vmem:[#allocation2 + $0x2c0] sm:$0xff]
    %v739 = vld [vmem:[#allocation2 + $0x2c8] sm:$0xff]
    %v740 = vld [vmem:[#allocation2 + $0x2d0] sm:$0xff]
    %v741 = vld [vmem:[#allocation2 + $0x2d8] sm:$0xff]
    %v742 = vld [vmem:[#allocation2 + $0x2e0] sm:$0xff]
    %v743 = vld [vmem:[#allocation2 + $0x2e8] sm:$0xff]
    %v744 = vld [vmem:[#allocation2 + $0x2f0] sm:$0xff]
    %v745 = vld [vmem:[#allocation2 + $0x2f8] sm:$0xff]
    %v746 = vld [vmem:[#allocation2 + $0x300] sm:$0xff]
    %v747 = vld [vmem:[#allocation2 + $0x308] sm:$0xff]
    %v748 = vld [vmem:[#allocation2 + $0x310] sm:$0xff]
    %v749 = vld [vmem:[#allocation2 + $0x318] sm:$0xff]
    %v750 = vld [vmem:[#allocation2 + $0x320] sm:$0xff]
    %v751 = vld [vmem:[#allocation2 + $0x328] sm:$0xff]
    %v752 = vld [vmem:[#allocation2 + $0x330] sm:$0xff]
    %v753 = vld [vmem:[#allocation2 + $0x338] sm:$0xff]
    %v754 = vld [vmem:[#allocation2 + $0x340] sm:$0xff]
    %v755 = vld [vmem:[#allocation2 + $0x348] sm:$0xff]
    %v756 = vld [vmem:[#allocation2 + $0x350] sm:$0xff]
    %v757 = vld [vmem:[#allocation2 + $0x358] sm:$0xff]
    %v758 = vld [vmem:[#allocation2 + $0x360] sm:$0xff]
    %v759 = vld [vmem:[#allocation2 + $0x368] sm:$0xff]
    %v760 = vld [vmem:[#allocation2 + $0x370] sm:$0xff]
    %v761 = vld [vmem:[#allocation2 + $0x378] sm:$0xff]
    %v762 = vld [vmem:[#allocation2 + $0x380] sm:$0xff]
    %v763 = vld [vmem:[#allocation2 + $0x388] sm:$0xff]
    %v764 = vld [vmem:[#allocation2 + $0x390] sm:$0xff]
    %v765 = vld [vmem:[#allocation2 + $0x398] sm:$0xff]
    %v766 = vld [vmem:[#allocation2 + $0x3a0] sm:$0xff]
    %v767 = vld [vmem:[#allocation2 + $0x3a8] sm:$0xff]
    %v768 = vld [vmem:[#allocation2 + $0x3b0] sm:$0xff]
    %v769 = vld [vmem:[#allocation2 + $0x3b8] sm:$0xff]
    %v770 = vld [vmem:[#allocation2 + $0x3c0] sm:$0xff]
    %v771 = vld [vmem:[#allocation2 + $0x3c8] sm:$0xff]
    %v772 = vld [vmem:[#allocation2 + $0x3d0] sm:$0xff]
    %v773 = vld [vmem:[#allocation2 + $0x3d8] sm:$0xff]
    %v774 = vld [vmem:[#allocation2 + $0x3e0] sm:$0xff]
    %v775 = vld [vmem:[#allocation2 + $0x3e8] sm:$0xff]
    %v776 = vld [vmem:[#allocation2 + $0x3f0] sm:$0xff]
    %v777 = vld [vmem:[#allocation2 + $0x3f8] sm:$0xff]
    %v778 = vld [vmem:[#allocation2 + $0x400] sm:$0xff]
    %v779 = vld [vmem:[#allocation2 + $0x408] sm:$0xff]
    %v780 = vld [vmem:[#allocation2 + $0x410] sm:$0xff]
    %v781 = vld [vmem:[#allocation2 + $0x418] sm:$0xff]
    %v782 = vld [vmem:[#allocation2 + $0x420] sm:$0xff]
    %v783 = vld [vmem:[#allocation2 + $0x428] sm:$0xff]
    %v784 = vld [vmem:[#allocation2 + $0x430] sm:$0xff]
    %v785 = vld [vmem:[#allocation2 + $0x438] sm:$0xff]
    %v786 = vld [vmem:[#allocation2 + $0x440] sm:$0xff]
    %v787 = vld [vmem:[#allocation2 + $0x448] sm:$0xff]
    %v788 = vld [vmem:[#allocation2 + $0x450] sm:$0xff]
    %v789 = vld [vmem:[#allocation2 + $0x458] sm:$0xff]
    %v790 = vld [vmem:[#allocation2 + $0x460] sm:$0xff]
    %v791 = vld [vmem:[#allocation2 + $0x468] sm:$0xff]
    %v792 = vld [vmem:[#allocation2 + $0x470] sm:$0xff]
    %v793 = vld [vmem:[#allocation2 + $0x478] sm:$0xff]
    %v794 = vld [vmem:[#allocation2 + $0x480] sm:$0xff]
    %v795 = vld [vmem:[#allocation2 + $0x488] sm:$0xff]
    %v796 = vld [vmem:[#allocation2 + $0x490] sm:$0xff]
    %v797 = vld [vmem:[#allocation2 + $0x498] sm:$0xff]
    %v798 = vld [vmem:[#allocation2 + $0x4a0] sm:$0xff]
    %v799 = vld [vmem:[#allocation2 + $0x4a8] sm:$0xff]
    %v800 = vld [vmem:[#allocation2 + $0x4b0] sm:$0xff]
    %v801 = vld [vmem:[#allocation2 + $0x4b8] sm:$0xff]
    %v802 = vld [vmem:[#allocation2 + $0x4c0] sm:$0xff]
    %v803 = vld [vmem:[#allocation2 + $0x4c8] sm:$0xff]
    %v804 = vld [vmem:[#allocation2 + $0x4d0] sm:$0xff]
    %v805 = vld [vmem:[#allocation2 + $0x4d8] sm:$0xff]
    %v806 = vld [vmem:[#allocation2 + $0x4e0] sm:$0xff]
    %v807 = vld [vmem:[#allocation2 + $0x4e8] sm:$0xff]
    %v808 = vld [vmem:[#allocation2 + $0x4f0] sm:$0xff]
    %v809 = vld [vmem:[#allocation2 + $0x4f8] sm:$0xff]
    %v810 = vld [vmem:[#allocation2 + $0x500] sm:$0xff]
    %v811 = vld [vmem:[#allocation2 + $0x508] sm:$0xff]
    %v812 = vld [vmem:[#allocation2 + $0x510] sm:$0xff]
    %v813 = vld [vmem:[#allocation2 + $0x518] sm:$0xff]
    %v814 = vld [vmem:[#allocation2 + $0x520] sm:$0xff]
    %v815 = vld [vmem:[#allocation2 + $0x528] sm:$0xff]
    %v816 = vld [vmem:[#allocation2 + $0x530] sm:$0xff]
    %v817 = vld [vmem:[#allocation2 + $0x538] sm:$0xff]
    %v818 = vld [vmem:[#allocation2 + $0x540] sm:$0xff]
    %v819 = vld [vmem:[#allocation2 + $0x548] sm:$0xff]
    %v820 = vld [vmem:[#allocation2 + $0x550] sm:$0xff]
    %v821 = vld [vmem:[#allocation2 + $0x558] sm:$0xff]
    %v822 = vld [vmem:[#allocation2 + $0x560] sm:$0xff]
    %v823 = vld [vmem:[#allocation2 + $0x568] sm:$0xff]
    %v824 = vld [vmem:[#allocation2 + $0x570] sm:$0xff]
    %v825 = vld [vmem:[#allocation2 + $0x578] sm:$0xff]
    %v826 = vld [vmem:[#allocation2 + $0x580] sm:$0xff]
    %v827 = vld [vmem:[#allocation2 + $0x588] sm:$0xff]
    %v828 = vld [vmem:[#allocation2 + $0x590] sm:$0xff]
    %v829 = vld [vmem:[#allocation2 + $0x598] sm:$0xff]
    %v830 = vld [vmem:[#allocation2 + $0x5a0] sm:$0xff]
    %v831 = vld [vmem:[#allocation2 + $0x5a8] sm:$0xff]
    %v832 = vld [vmem:[#allocation2 + $0x5b0] sm:$0xff]
    %v833 = vld [vmem:[#allocation2 + $0x5b8] sm:$0xff]
    %v834 = vld [vmem:[#allocation2 + $0x5c0] sm:$0xff]
    %v835 = vld [vmem:[#allocation2 + $0x5c8] sm:$0xff]
    %v836 = vld [vmem:[#allocation2 + $0x5d0] sm:$0xff]
    %v837 = vld [vmem:[#allocation2 + $0x5d8] sm:$0xff]
    %v838 = vld [vmem:[#allocation2 + $0x5e0] sm:$0xff]
    %v839 = vld [vmem:[#allocation2 + $0x5e8] sm:$0xff]
    %v840 = vld [vmem:[#allocation2 + $0x5f0] sm:$0xff]
    %v841 = vld [vmem:[#allocation2 + $0x5f8] sm:$0xff]
    %v842 = vld [vmem:[#allocation2 + $0x600] sm:$0xff]
    %v843 = vld [vmem:[#allocation2 + $0x608] sm:$0xff]
    %v844 = vld [vmem:[#allocation2 + $0x610] sm:$0xff]
    %v845 = vld [vmem:[#allocation2 + $0x618] sm:$0xff]
    %v846 = vld [vmem:[#allocation2 + $0x620] sm:$0xff]
    %v847 = vld [vmem:[#allocation2 + $0x628] sm:$0xff]
    %v848 = vld [vmem:[#allocation2 + $0x630] sm:$0xff]
    %v849 = vld [vmem:[#allocation2 + $0x638] sm:$0xff]
    %v850 = vld [vmem:[#allocation2 + $0x640] sm:$0xff]
    %v851 = vld [vmem:[#allocation2 + $0x648] sm:$0xff]
    %v852 = vld [vmem:[#allocation2 + $0x650] sm:$0xff]
    %v853 = vld [vmem:[#allocation2 + $0x658] sm:$0xff]
    %v854 = vld [vmem:[#allocation2 + $0x660] sm:$0xff]
    %v855 = vld [vmem:[#allocation2 + $0x668] sm:$0xff]
    %v856 = vld [vmem:[#allocation2 + $0x670] sm:$0xff]
    %v857 = vld [vmem:[#allocation2 + $0x678] sm:$0xff]
    %v858 = vld [vmem:[#allocation2 + $0x680] sm:$0xff]
    %v859 = vld [vmem:[#allocation2 + $0x688] sm:$0xff]
    %v860 = vld [vmem:[#allocation2 + $0x690] sm:$0xff]
    %v861 = vld [vmem:[#allocation2 + $0x698] sm:$0xff]
    %v862 = vld [vmem:[#allocation2 + $0x6a0] sm:$0xff]
    %v863 = vld [vmem:[#allocation2 + $0x6a8] sm:$0xff]
    %v864 = vld [vmem:[#allocation2 + $0x6b0] sm:$0xff]
    %v865 = vld [vmem:[#allocation2 + $0x6b8] sm:$0xff]
    %v866 = vld [vmem:[#allocation2 + $0x6c0] sm:$0xff]
    %v867 = vld [vmem:[#allocation2 + $0x6c8] sm:$0xff]
    %v868 = vld [vmem:[#allocation2 + $0x6d0] sm:$0xff]
    %v869 = vld [vmem:[#allocation2 + $0x6d8] sm:$0xff]
    %v870 = vld [vmem:[#allocation2 + $0x6e0] sm:$0xff]
    %v871 = vld [vmem:[#allocation2 + $0x6e8] sm:$0xff]
    %v872 = vld [vmem:[#allocation2 + $0x6f0] sm:$0xff]
    %v873 = vld [vmem:[#allocation2 + $0x6f8] sm:$0xff]
    %v874 = vld [vmem:[#allocation2 + $0x700] sm:$0xff]
    %v875 = vld [vmem:[#allocation2 + $0x708] sm:$0xff]
    %v876 = vld [vmem:[#allocation2 + $0x710] sm:$0xff]
    %v877 = vld [vmem:[#allocation2 + $0x718] sm:$0xff]
    %v878 = vld [vmem:[#allocation2 + $0x720] sm:$0xff]
    %v879 = vld [vmem:[#allocation2 + $0x728] sm:$0xff]
    %v880 = vld [vmem:[#allocation2 + $0x730] sm:$0xff]
    %v881 = vld [vmem:[#allocation2 + $0x738] sm:$0xff]
    %v882 = vld [vmem:[#allocation2 + $0x740] sm:$0xff]
    %v883 = vld [vmem:[#allocation2 + $0x748] sm:$0xff]
    %v884 = vld [vmem:[#allocation2 + $0x750] sm:$0xff]
    %v885 = vld [vmem:[#allocation2 + $0x758] sm:$0xff]
    %v886 = vld [vmem:[#allocation2 + $0x760] sm:$0xff]
    %v887 = vld [vmem:[#allocation2 + $0x768] sm:$0xff]
    %v888 = vld [vmem:[#allocation2 + $0x770] sm:$0xff]
    %v889 = vld [vmem:[#allocation2 + $0x778] sm:$0xff]
    %v890 = vld [vmem:[#allocation2 + $0x780] sm:$0xff]
    %v891 = vld [vmem:[#allocation2 + $0x788] sm:$0xff]
    %v892 = vld [vmem:[#allocation2 + $0x790] sm:$0xff]
    %v893 = vld [vmem:[#allocation2 + $0x798] sm:$0xff]
    %v894 = vld [vmem:[#allocation2 + $0x7a0] sm:$0xff]
    %v895 = vld [vmem:[#allocation2 + $0x7a8] sm:$0xff]
    %v896 = vld [vmem:[#allocation2 + $0x7b0] sm:$0xff]
    %v897 = vld [vmem:[#allocation2 + $0x7b8] sm:$0xff]
    %v898 = vld [vmem:[#allocation2 + $0x7c0] sm:$0xff]
    %v899 = vld [vmem:[#allocation2 + $0x7c8] sm:$0xff]
    %v900 = vld [vmem:[#allocation2 + $0x7d0] sm:$0xff]
    %v901 = vld [vmem:[#allocation2 + $0x7d8] sm:$0xff]
    %v902 = vld [vmem:[#allocation2 + $0x7e0] sm:$0xff]
    %v903 = vld [vmem:[#allocation2 + $0x7e8] sm:$0xff]
    %v904 = vld [vmem:[#allocation2 + $0x7f0] sm:$0xff]
    %v905 = vld [vmem:[#allocation2 + $0x7f8] sm:$0xff]
    %v906 = vld [vmem:[#allocation2 + $0x800] sm:$0xff]
    %v907 = vld [vmem:[#allocation2 + $0x808] sm:$0xff]
    %v908 = vld [vmem:[#allocation2 + $0x810] sm:$0xff]
    %v909 = vld [vmem:[#allocation2 + $0x818] sm:$0xff]
    %v910 = vld [vmem:[#allocation2 + $0x820] sm:$0xff]
    %v911 = vld [vmem:[#allocation2 + $0x828] sm:$0xff]
    %v912 = vld [vmem:[#allocation2 + $0x830] sm:$0xff]
    %v913 = vld [vmem:[#allocation2 + $0x838] sm:$0xff]
    %v914 = vld [vmem:[#allocation2 + $0x840] sm:$0xff]
    %v915 = vld [vmem:[#allocation2 + $0x848] sm:$0xff]
    %v916 = vld [vmem:[#allocation2 + $0x850] sm:$0xff]
    %v917 = vld [vmem:[#allocation2 + $0x858] sm:$0xff]
    %v918 = vld [vmem:[#allocation2 + $0x860] sm:$0xff]
    %v919 = vld [vmem:[#allocation2 + $0x868] sm:$0xff]
    %v920 = vld [vmem:[#allocation2 + $0x870] sm:$0xff]
    %v921 = vld [vmem:[#allocation2 + $0x878] sm:$0xff]
    %v922 = vld [vmem:[#allocation2 + $0x880] sm:$0xff]
    %v923 = vld [vmem:[#allocation2 + $0x888] sm:$0xff]
    %v924 = vld [vmem:[#allocation2 + $0x890] sm:$0xff]
    %v925 = vld [vmem:[#allocation2 + $0x898] sm:$0xff]
    %v926 = vld [vmem:[#allocation2 + $0x8a0] sm:$0xff]
    %v927 = vld [vmem:[#allocation2 + $0x8a8] sm:$0xff]
    %v928 = vld [vmem:[#allocation2 + $0x8b0] sm:$0xff]
    %v929 = vld [vmem:[#allocation2 + $0x8b8] sm:$0xff]
    %v930 = vld [vmem:[#allocation2 + $0x8c0] sm:$0xff]
    %v931 = vld [vmem:[#allocation2 + $0x8c8] sm:$0xff]
    %v932 = vld [vmem:[#allocation2 + $0x8d0] sm:$0xff]
    %v933 = vld [vmem:[#allocation2 + $0x8d8] sm:$0xff]
    %v934 = vld [vmem:[#allocation2 + $0x8e0] sm:$0xff]
    %v935 = vld [vmem:[#allocation2 + $0x8e8] sm:$0xff]
    %v936 = vld [vmem:[#allocation2 + $0x8f0] sm:$0xff]
    %v937 = vld [vmem:[#allocation2 + $0x8f8] sm:$0xff]
    %v938 = vld [vmem:[#allocation2 + $0x900] sm:$0xff]
    %v939 = vld [vmem:[#allocation2 + $0x908] sm:$0xff]
    %v940 = vld [vmem:[#allocation2 + $0x910] sm:$0xff]
    %v941 = vld [vmem:[#allocation2 + $0x918] sm:$0xff]
    %v942 = vld [vmem:[#allocation2 + $0x920] sm:$0xff]
    %v943 = vld [vmem:[#allocation2 + $0x928] sm:$0xff]
    %v944 = vld [vmem:[#allocation2 + $0x930] sm:$0xff]
    %v945 = vld [vmem:[#allocation2 + $0x938] sm:$0xff]
    %v946 = vld [vmem:[#allocation2 + $0x940] sm:$0xff]
    %v947 = vld [vmem:[#allocation2 + $0x948] sm:$0xff]
    %v948 = vld [vmem:[#allocation2 + $0x950] sm:$0xff]
    %v949 = vld [vmem:[#allocation2 + $0x958] sm:$0xff]
    %v950 = vld [vmem:[#allocation2 + $0x960] sm:$0xff]
    %v951 = vld [vmem:[#allocation2 + $0x968] sm:$0xff]
    %v952 = vld [vmem:[#allocation2 + $0x970] sm:$0xff]
    %v953 = vld [vmem:[#allocation2 + $0x978] sm:$0xff]
    %v954 = vld [vmem:[#allocation2 + $0x980] sm:$0xff]
    %v955 = vld [vmem:[#allocation2 + $0x988] sm:$0xff]
    %v956 = vld [vmem:[#allocation2 + $0x990] sm:$0xff]
    %v957 = vld [vmem:[#allocation2 + $0x998] sm:$0xff]
    %v958 = vld [vmem:[#allocation2 + $0x9a0] sm:$0xff]
    %v959 = vld [vmem:[#allocation2 + $0x9a8] sm:$0xff]
    %v960 = vld [vmem:[#allocation2 + $0x9b0] sm:$0xff]
    %v961 = vld [vmem:[#allocation2 + $0x9b8] sm:$0xff]
    %v962 = vld [vmem:[#allocation2 + $0x9c0] sm:$0xff]
    %v963 = vld [vmem:[#allocation2 + $0x9c8] sm:$0xff]
    %v964 = vld [vmem:[#allocation2 + $0x9d0] sm:$0xff]
    %v965 = vld [vmem:[#allocation2 + $0x9d8] sm:$0xff]
    %v966 = vld [vmem:[#allocation2 + $0x9e0] sm:$0xff]
    %v967 = vld [vmem:[#allocation2 + $0x9e8] sm:$0xff]
    %v968 = vld [vmem:[#allocation2 + $0x9f0] sm:$0xff]
    %v969 = vld [vmem:[#allocation2 + $0x9f8] sm:$0xff]
    %v970 = vld [vmem:[#allocation2 + $0xa00] sm:$0xff]
    %v971 = vld [vmem:[#allocation2 + $0xa08] sm:$0xff]
    %v972 = vld [vmem:[#allocation2 + $0xa10] sm:$0xff]
    %v973 = vld [vmem:[#allocation2 + $0xa18] sm:$0xff]
    %v974 = vld [vmem:[#allocation2 + $0xa20] sm:$0xff]
    %v975 = vld [vmem:[#allocation2 + $0xa28] sm:$0xff]
    %v976 = vld [vmem:[#allocation2 + $0xa30] sm:$0xff]
    %v977 = vld [vmem:[#allocation2 + $0xa38] sm:$0xff]
    %v978 = vld [vmem:[#allocation2 + $0xa40] sm:$0xff]
    %v979 = vld [vmem:[#allocation2 + $0xa48] sm:$0xff]
    %v980 = vld [vmem:[#allocation2 + $0xa50] sm:$0xff]
    %v981 = vld [vmem:[#allocation2 + $0xa58] sm:$0xff]
    %v982 = vld [vmem:[#allocation2 + $0xa60] sm:$0xff]
    %v983 = vld [vmem:[#allocation2 + $0xa68] sm:$0xff]
    %v984 = vld [vmem:[#allocation2 + $0xa70] sm:$0xff]
    %v985 = vld [vmem:[#allocation2 + $0xa78] sm:$0xff]
    %v986 = vld [vmem:[#allocation2 + $0xa80] sm:$0xff]
    %v987 = vld [vmem:[#allocation2 + $0xa88] sm:$0xff]
    %v988 = vld [vmem:[#allocation2 + $0xa90] sm:$0xff]
    %v989 = vld [vmem:[#allocation2 + $0xa98] sm:$0xff]
    %v990 = vld [vmem:[#allocation2 + $0xaa0] sm:$0xff]
    %v991 = vld [vmem:[#allocation2 + $0xaa8] sm:$0xff]
    %v992 = vld [vmem:[#allocation2 + $0xab0] sm:$0xff]
    %v993 = vld [vmem:[#allocation2 + $0xab8] sm:$0xff]
    %v994 = vld [vmem:[#allocation2 + $0xac0] sm:$0xff]
    %v995 = vld [vmem:[#allocation2 + $0xac8] sm:$0xff]
    %v996 = vld [vmem:[#allocation2 + $0xad0] sm:$0xff]
    %v997 = vld [vmem:[#allocation2 + $0xad8] sm:$0xff]
    %v998 = vld [vmem:[#allocation2 + $0xae0] sm:$0xff]
    %v999 = vld [vmem:[#allocation2 + $0xae8] sm:$0xff]
    %v1000 = vld [vmem:[#allocation2 + $0xaf0] sm:$0xff]
    %v1001 = vld [vmem:[#allocation2 + $0xaf8] sm:$0xff]
    %v1002 = vld [vmem:[#allocation2 + $0xb00] sm:$0xff]
    %v1003 = vld [vmem:[#allocation2 + $0xb08] sm:$0xff]
    %v1004 = vld [vmem:[#allocation2 + $0xb10] sm:$0xff]
    %v1005 = vld [vmem:[#allocation2 + $0xb18] sm:$0xff]
    %v1006 = vld [vmem:[#allocation2 + $0xb20] sm:$0xff]
    %v1007 = vld [vmem:[#allocation2 + $0xb28] sm:$0xff]
    %v1008 = vld [vmem:[#allocation2 + $0xb30] sm:$0xff]
    %v1009 = vld [vmem:[#allocation2 + $0xb38] sm:$0xff]
    %v1010 = vld [vmem:[#allocation2 + $0xb40] sm:$0xff]
    %v1011 = vld [vmem:[#allocation2 + $0xb48] sm:$0xff]
    %v1012 = vld [vmem:[#allocation2 + $0xb50] sm:$0xff]
    %v1013 = vld [vmem:[#allocation2 + $0xb58] sm:$0xff]
    %v1014 = vld [vmem:[#allocation2 + $0xb60] sm:$0xff]
    %v1015 = vld [vmem:[#allocation2 + $0xb68] sm:$0xff]
    %v1016 = vld [vmem:[#allocation2 + $0xb70] sm:$0xff]
    %v1017 = vld [vmem:[#allocation2 + $0xb78] sm:$0xff]
    %v1018 = vld [vmem:[#allocation2 + $0xb80] sm:$0xff]
    %v1019 = vld [vmem:[#allocation2 + $0xb88] sm:$0xff]
    %v1020 = vld [vmem:[#allocation2 + $0xb90] sm:$0xff]
    %v1021 = vld [vmem:[#allocation2 + $0xb98] sm:$0xff]
    %v1022 = vld [vmem:[#allocation2 + $0xba0] sm:$0xff]
    %v1023 = vld [vmem:[#allocation2 + $0xba8] sm:$0xff]
    %v1024 = vld [vmem:[#allocation2 + $0xbb0] sm:$0xff]
    %v1025 = vld [vmem:[#allocation2 + $0xbb8] sm:$0xff]
    %v1026 = vld [vmem:[#allocation2 + $0xbc0] sm:$0xff]
    %v1027 = vld [vmem:[#allocation2 + $0xbc8] sm:$0xff]
    %v1028 = vld [vmem:[#allocation2 + $0xbd0] sm:$0xff]
    %v1029 = vld [vmem:[#allocation2 + $0xbd8] sm:$0xff]
    %v1030 = vld [vmem:[#allocation2 + $0xbe0] sm:$0xff]
    %v1031 = vld [vmem:[#allocation2 + $0xbe8] sm:$0xff]
    %v1032 = vld [vmem:[#allocation2 + $0xbf0] sm:$0xff]
    %v1033 = vld [vmem:[#allocation2 + $0xbf8] sm:$0xff]
    %v1034 = vld [vmem:[#allocation2 + $0xc00] sm:$0xff]
    %v1035 = vld [vmem:[#allocation2 + $0xc08] sm:$0xff]
    %v1036 = vld [vmem:[#allocation2 + $0xc10] sm:$0xff]
    %v1037 = vld [vmem:[#allocation2 + $0xc18] sm:$0xff]
    %v1038 = vld [vmem:[#allocation2 + $0xc20] sm:$0xff]
    %v1039 = vld [vmem:[#allocation2 + $0xc28] sm:$0xff]
    %v1040 = vld [vmem:[#allocation2 + $0xc30] sm:$0xff]
    %v1041 = vld [vmem:[#allocation2 + $0xc38] sm:$0xff]
    %v1042 = vld [vmem:[#allocation2 + $0xc40] sm:$0xff]
    %v1043 = vld [vmem:[#allocation2 + $0xc48] sm:$0xff]
    %v1044 = vld [vmem:[#allocation2 + $0xc50] sm:$0xff]
    %v1045 = vld [vmem:[#allocation2 + $0xc58] sm:$0xff]
    %v1046 = vld [vmem:[#allocation2 + $0xc60] sm:$0xff]
    %v1047 = vld [vmem:[#allocation2 + $0xc68] sm:$0xff]
    %v1048 = vld [vmem:[#allocation2 + $0xc70] sm:$0xff]
    %v1049 = vld [vmem:[#allocation2 + $0xc78] sm:$0xff]
    %v1050 = vld [vmem:[#allocation2 + $0xc80] sm:$0xff]
    %v1051 = vld [vmem:[#allocation2 + $0xc88] sm:$0xff]
    %v1052 = vld [vmem:[#allocation2 + $0xc90] sm:$0xff]
    %v1053 = vld [vmem:[#allocation2 + $0xc98] sm:$0xff]
    %v1054 = vld [vmem:[#allocation2 + $0xca0] sm:$0xff]
    %v1055 = vld [vmem:[#allocation2 + $0xca8] sm:$0xff]
    %v1056 = vld [vmem:[#allocation2 + $0xcb0] sm:$0xff]
    %v1057 = vld [vmem:[#allocation2 + $0xcb8] sm:$0xff]
    %v1058 = vld [vmem:[#allocation2 + $0xcc0] sm:$0xff]
    %v1059 = vld [vmem:[#allocation2 + $0xcc8] sm:$0xff]
    %v1060 = vld [vmem:[#allocation2 + $0xcd0] sm:$0xff]
    %v1061 = vld [vmem:[#allocation2 + $0xcd8] sm:$0xff]
    %v1062 = vld [vmem:[#allocation2 + $0xce0] sm:$0xff]
    %v1063 = vld [vmem:[#allocation2 + $0xce8] sm:$0xff]
    %v1064 = vld [vmem:[#allocation2 + $0xcf0] sm:$0xff]
    %v1065 = vld [vmem:[#allocation2 + $0xcf8] sm:$0xff]
    %v1066 = vld [vmem:[#allocation2 + $0xd00] sm:$0xff]
    %v1067 = vld [vmem:[#allocation2 + $0xd08] sm:$0xff]
    %v1068 = vld [vmem:[#allocation2 + $0xd10] sm:$0xff]
    %v1069 = vld [vmem:[#allocation2 + $0xd18] sm:$0xff]
    %v1070 = vld [vmem:[#allocation2 + $0xd20] sm:$0xff]
    %v1071 = vld [vmem:[#allocation2 + $0xd28] sm:$0xff]
    %v1072 = vld [vmem:[#allocation2 + $0xd30] sm:$0xff]
    %v1073 = vld [vmem:[#allocation2 + $0xd38] sm:$0xff]
    %v1074 = vld [vmem:[#allocation2 + $0xd40] sm:$0xff]
    %v1075 = vld [vmem:[#allocation2 + $0xd48] sm:$0xff]
    %v1076 = vld [vmem:[#allocation2 + $0xd50] sm:$0xff]
    %v1077 = vld [vmem:[#allocation2 + $0xd58] sm:$0xff]
    %v1078 = vld [vmem:[#allocation2 + $0xd60] sm:$0xff]
    %v1079 = vld [vmem:[#allocation2 + $0xd68] sm:$0xff]
    %v1080 = vld [vmem:[#allocation2 + $0xd70] sm:$0xff]
    %v1081 = vld [vmem:[#allocation2 + $0xd78] sm:$0xff]
    %v1082 = vld [vmem:[#allocation2 + $0xd80] sm:$0xff]
    %v1083 = vld [vmem:[#allocation2 + $0xd88] sm:$0xff]
    %v1084 = vld [vmem:[#allocation2 + $0xd90] sm:$0xff]
    %v1085 = vld [vmem:[#allocation2 + $0xd98] sm:$0xff]
    %v1086 = vld [vmem:[#allocation2 + $0xda0] sm:$0xff]
    %v1087 = vld [vmem:[#allocation2 + $0xda8] sm:$0xff]
    %v1088 = vld [vmem:[#allocation2 + $0xdb0] sm:$0xff]
    %v1089 = vld [vmem:[#allocation2 + $0xdb8] sm:$0xff]
    %v1090 = vld [vmem:[#allocation2 + $0xdc0] sm:$0xff]
    %v1091 = vld [vmem:[#allocation2 + $0xdc8] sm:$0xff]
    %v1092 = vld [vmem:[#allocation2 + $0xdd0] sm:$0xff]
    %v1093 = vld [vmem:[#allocation2 + $0xdd8] sm:$0xff]
    %v1094 = vld [vmem:[#allocation2 + $0xde0] sm:$0xff]
    %v1095 = vld [vmem:[#allocation2 + $0xde8] sm:$0xff]
    %v1096 = vld [vmem:[#allocation2 + $0xdf0] sm:$0xff]
    %v1097 = vld [vmem:[#allocation2 + $0xdf8] sm:$0xff]
    %v1098 = vld [vmem:[#allocation2 + $0xe00] sm:$0xff]
    %v1099 = vld [vmem:[#allocation2 + $0xe08] sm:$0xff]
    %v1100 = vld [vmem:[#allocation2 + $0xe10] sm:$0xff]
    %v1101 = vld [vmem:[#allocation2 + $0xe18] sm:$0xff]
    %v1102 = vld [vmem:[#allocation2 + $0xe20] sm:$0xff]
    %v1103 = vld [vmem:[#allocation2 + $0xe28] sm:$0xff]
    %v1104 = vld [vmem:[#allocation2 + $0xe30] sm:$0xff]
    %v1105 = vld [vmem:[#allocation2 + $0xe38] sm:$0xff]
    %v1106 = vld [vmem:[#allocation2 + $0xe40] sm:$0xff]
    %v1107 = vld [vmem:[#allocation2 + $0xe48] sm:$0xff]
    %v1108 = vld [vmem:[#allocation2 + $0xe50] sm:$0xff]
    %v1109 = vld [vmem:[#allocation2 + $0xe58] sm:$0xff]
    %v1110 = vld [vmem:[#allocation2 + $0xe60] sm:$0xff]
    %v1111 = vld [vmem:[#allocation2 + $0xe68] sm:$0xff]
    %v1112 = vld [vmem:[#allocation2 + $0xe70] sm:$0xff]
    %v1113 = vld [vmem:[#allocation2 + $0xe78] sm:$0xff]
    %v1114 = vld [vmem:[#allocation2 + $0xe80] sm:$0xff]
    %v1115 = vld [vmem:[#allocation2 + $0xe88] sm:$0xff]
    %v1116 = vld [vmem:[#allocation2 + $0xe90] sm:$0xff]
    %v1117 = vld [vmem:[#allocation2 + $0xe98] sm:$0xff]
    %v1118 = vld [vmem:[#allocation2 + $0xea0] sm:$0xff]
    %v1119 = vld [vmem:[#allocation2 + $0xea8] sm:$0xff]
    %v1120 = vld [vmem:[#allocation2 + $0xeb0] sm:$0xff]
    %v1121 = vld [vmem:[#allocation2 + $0xeb8] sm:$0xff]
    %v1122 = vld [vmem:[#allocation2 + $0xec0] sm:$0xff]
    %v1123 = vld [vmem:[#allocation2 + $0xec8] sm:$0xff]
    %v1124 = vld [vmem:[#allocation2 + $0xed0] sm:$0xff]
    %v1125 = vld [vmem:[#allocation2 + $0xed8] sm:$0xff]
    %v1126 = vld [vmem:[#allocation2 + $0xee0] sm:$0xff]
    %v1127 = vld [vmem:[#allocation2 + $0xee8] sm:$0xff]
    %v1128 = vld [vmem:[#allocation2 + $0xef0] sm:$0xff]
    %v1129 = vld [vmem:[#allocation2 + $0xef8] sm:$0xff]
    %v1130 = vld [vmem:[#allocation2 + $0xf00] sm:$0xff]
    %v1131 = vld [vmem:[#allocation2 + $0xf08] sm:$0xff]
    %v1132 = vld [vmem:[#allocation2 + $0xf10] sm:$0xff]
    %v1133 = vld [vmem:[#allocation2 + $0xf18] sm:$0xff]
    %v1134 = vld [vmem:[#allocation2 + $0xf20] sm:$0xff]
    %v1135 = vld [vmem:[#allocation2 + $0xf28] sm:$0xff]
    %v1136 = vld [vmem:[#allocation2 + $0xf30] sm:$0xff]
    %v1137 = vld [vmem:[#allocation2 + $0xf38] sm:$0xff]
    %v1138 = vld [vmem:[#allocation2 + $0xf40] sm:$0xff]
    %v1139 = vld [vmem:[#allocation2 + $0xf48] sm:$0xff]
    %v1140 = vld [vmem:[#allocation2 + $0xf50] sm:$0xff]
    %v1141 = vld [vmem:[#allocation2 + $0xf58] sm:$0xff]
    %v1142 = vld [vmem:[#allocation2 + $0xf60] sm:$0xff]
    %v1143 = vld [vmem:[#allocation2 + $0xf68] sm:$0xff]
    %v1144 = vld [vmem:[#allocation2 + $0xf70] sm:$0xff]
    %v1145 = vld [vmem:[#allocation2 + $0xf78] sm:$0xff]
    %v1146 = vld [vmem:[#allocation2 + $0xf80] sm:$0xff]
    %v1147 = vld [vmem:[#allocation2 + $0xf88] sm:$0xff]
    %v1148 = vld [vmem:[#allocation2 + $0xf90] sm:$0xff]
    %v1149 = vld [vmem:[#allocation2 + $0xf98] sm:$0xff]
    %v1150 = vld [vmem:[#allocation2 + $0xfa0] sm:$0xff]
    %v1151 = vld [vmem:[#allocation2 + $0xfa8] sm:$0xff]
    %v1152 = vld [vmem:[#allocation2 + $0xfb0] sm:$0xff]
    %v1153 = vld [vmem:[#allocation2 + $0xfb8] sm:$0xff]
    %v1154 = vld [vmem:[#allocation2 + $0xfc0] sm:$0xff]
    %v1155 = vld [vmem:[#allocation2 + $0xfc8] sm:$0xff]
    %v1156 = vld [vmem:[#allocation2 + $0xfd0] sm:$0xff]
    %v1157 = vld [vmem:[#allocation2 + $0xfd8] sm:$0xff]
    %v1158 = vld [vmem:[#allocation2 + $0xfe0] sm:$0xff]
    %v1159 = vld [vmem:[#allocation2 + $0xfe8] sm:$0xff]
    %v1160 = vld [vmem:[#allocation2 + $0xff0] sm:$0xff]
    %v1161 = vld [vmem:[#allocation2 + $0xff8] sm:$0xff]
    %v1162 = vld [vmem:[#allocation5] sm:$0xff]
    %v1163 = vld [vmem:[#allocation5 + $0x8] sm:$0xff]
    %v1166 = vlaneseq
    %v1167 = vshrl.u32 %v1166, 7
    %v1168 = vsub.s32 0, %v1167
    %v1169 = vrot.slane %v1162, %v1168
    %v1170 = vlaneseq
    %v1171 = vshrl.u32 %v1170, 7
    %v1172 = vsub.s32 1, %v1171
    %v1173 = vrot.slane %v1162, %v1172
    %v1174 = vlaneseq
    %v1175 = vshrl.u32 %v1174, 7
    %v1176 = vsub.s32 2, %v1175
    %v1177 = vrot.slane %v1162, %v1176
    %v1178 = vlaneseq
    %v1179 = vshrl.u32 %v1178, 7
    %v1180 = vsub.s32 3, %v1179
    %v1181 = vrot.slane %v1162, %v1180
    %v1182 = vlaneseq
    %v1183 = vshrl.u32 %v1182, 7
    %v1184 = vsub.s32 4, %v1183
    %v1185 = vrot.slane %v1162, %v1184
    %v1186 = vlaneseq
    %v1187 = vshrl.u32 %v1186, 7
    %v1188 = vsub.s32 5, %v1187
    %v1189 = vrot.slane %v1162, %v1188
    %v1190 = vlaneseq
    %v1191 = vshrl.u32 %v1190, 7
    %v1192 = vsub.s32 6, %v1191
    %v1193 = vrot.slane %v1162, %v1192
    %v1194 = vlaneseq
    %v1195 = vshrl.u32 %v1194, 7
    %v1196 = vsub.s32 7, %v1195
    %v1197 = vrot.slane %v1162, %v1196
    %v1198 = vlaneseq
    %v1199 = vshrl.u32 %v1198, 7
    %v1200 = vsub.s32 0, %v1199
    %v1201 = vrot.slane %v1163, %v1200
    %v1202 = vlaneseq
    %v1203 = vshrl.u32 %v1202, 7
    %v1204 = vsub.s32 1, %v1203
    %v1205 = vrot.slane %v1163, %v1204
    %v1206 = vlaneseq
    %v1207 = vshrl.u32 %v1206, 7
    %v1208 = vsub.s32 2, %v1207
    %v1209 = vrot.slane %v1163, %v1208
    %v1210 = vlaneseq
    %v1211 = vshrl.u32 %v1210, 7
    %v1212 = vsub.s32 3, %v1211
    %v1213 = vrot.slane %v1163, %v1212
    %v1214 = vlaneseq
    %v1215 = vshrl.u32 %v1214, 7
    %v1216 = vsub.s32 4, %v1215
    %v1217 = vrot.slane %v1163, %v1216
    %v1218 = vlaneseq
    %v1219 = vshrl.u32 %v1218, 7
    %v1220 = vsub.s32 5, %v1219
    %v1221 = vrot.slane %v1163, %v1220
    %v1222 = vlaneseq
    %v1223 = vshrl.u32 %v1222, 7
    %v1224 = vsub.s32 6, %v1223
    %v1225 = vrot.slane %v1163, %v1224
    %v1226 = vlaneseq
    %v1227 = vshrl.u32 %v1226, 7
    %v1228 = vsub.s32 7, %v1227
    %v1229 = vrot.slane %v1163, %v1228
    %v1310 = vunpack.c.l.b16 %v586
    %v1311 = vunpack.c.h.b16 %v586
    %v1312 = vunpack.c.l.b16 %v587
    %v1313 = vunpack.c.h.b16 %v587
    %v1314 = vunpack.c.l.b16 %v588
    %v1315 = vunpack.c.h.b16 %v588
    %v1316 = vunpack.c.l.b16 %v589
    %v1317 = vunpack.c.h.b16 %v589
    %v1318 = vunpack.c.l.b16 %v590
    %v1319 = vunpack.c.h.b16 %v590
    %v1320 = vunpack.c.l.b16 %v591
    %v1321 = vunpack.c.h.b16 %v591
    %v1322 = vunpack.c.l.b16 %v592
    %v1323 = vunpack.c.h.b16 %v592
    %v1324 = vunpack.c.l.b16 %v593
    %v1325 = vunpack.c.h.b16 %v593
    %v1326 = vunpack.c.l.b16 %v594
    %v1327 = vunpack.c.h.b16 %v594
    %v1328 = vunpack.c.l.b16 %v595
    %v1329 = vunpack.c.h.b16 %v595
    %v1330 = vunpack.c.l.b16 %v596
    %v1331 = vunpack.c.h.b16 %v596
    %v1332 = vunpack.c.l.b16 %v597
    %v1333 = vunpack.c.h.b16 %v597
    %v1334 = vunpack.c.l.b16 %v598
    %v1335 = vunpack.c.h.b16 %v598
    %v1336 = vunpack.c.l.b16 %v599
    %v1337 = vunpack.c.h.b16 %v599
    %v1338 = vunpack.c.l.b16 %v600
    %v1339 = vunpack.c.h.b16 %v600
    %v1340 = vunpack.c.l.b16 %v601
    %v1341 = vunpack.c.h.b16 %v601
    %v1342 = vunpack.c.l.b16 %v602
    %v1343 = vunpack.c.h.b16 %v602
    %v1344 = vunpack.c.l.b16 %v603
    %v1345 = vunpack.c.h.b16 %v603
    %v1346 = vunpack.c.l.b16 %v604
    %v1347 = vunpack.c.h.b16 %v604
    %v1348 = vunpack.c.l.b16 %v605
    %v1349 = vunpack.c.h.b16 %v605
    %v1350 = vunpack.c.l.b16 %v606
    %v1351 = vunpack.c.h.b16 %v606
    %v1352 = vunpack.c.l.b16 %v607
    %v1353 = vunpack.c.h.b16 %v607
    %v1354 = vunpack.c.l.b16 %v608
    %v1355 = vunpack.c.h.b16 %v608
    %v1356 = vunpack.c.l.b16 %v609
    %v1357 = vunpack.c.h.b16 %v609
    %v1358 = vunpack.c.l.b16 %v610
    %v1359 = vunpack.c.h.b16 %v610
    %v1360 = vunpack.c.l.b16 %v611
    %v1361 = vunpack.c.h.b16 %v611
    %v1362 = vunpack.c.l.b16 %v612
    %v1363 = vunpack.c.h.b16 %v612
    %v1364 = vunpack.c.l.b16 %v613
    %v1365 = vunpack.c.h.b16 %v613
    %v1366 = vunpack.c.l.b16 %v614
    %v1367 = vunpack.c.h.b16 %v614
    %v1368 = vunpack.c.l.b16 %v615
    %v1369 = vunpack.c.h.b16 %v615
    %v1370 = vunpack.c.l.b16 %v616
    %v1371 = vunpack.c.h.b16 %v616
    %v1372 = vunpack.c.l.b16 %v617
    %v1373 = vunpack.c.h.b16 %v617
    %v1374 = vunpack.c.l.b16 %v618
    %v1375 = vunpack.c.h.b16 %v618
    %v1376 = vunpack.c.l.b16 %v619
    %v1377 = vunpack.c.h.b16 %v619
    %v1378 = vunpack.c.l.b16 %v620
    %v1379 = vunpack.c.h.b16 %v620
    %v1380 = vunpack.c.l.b16 %v621
    %v1381 = vunpack.c.h.b16 %v621
    %v1382 = vunpack.c.l.b16 %v622
    %v1383 = vunpack.c.h.b16 %v622
    %v1384 = vunpack.c.l.b16 %v623
    %v1385 = vunpack.c.h.b16 %v623
    %v1386 = vunpack.c.l.b16 %v624
    %v1387 = vunpack.c.h.b16 %v624
    %v1388 = vunpack.c.l.b16 %v625
    %v1389 = vunpack.c.h.b16 %v625
    %v1390 = vunpack.c.l.b16 %v626
    %v1391 = vunpack.c.h.b16 %v626
    %v1392 = vunpack.c.l.b16 %v627
    %v1393 = vunpack.c.h.b16 %v627
    %v1394 = vunpack.c.l.b16 %v628
    %v1395 = vunpack.c.h.b16 %v628
    %v1396 = vunpack.c.l.b16 %v629
    %v1397 = vunpack.c.h.b16 %v629
    %v1398 = vunpack.c.l.b16 %v630
    %v1399 = vunpack.c.h.b16 %v630
    %v1400 = vunpack.c.l.b16 %v631
    %v1401 = vunpack.c.h.b16 %v631
    %v1402 = vunpack.c.l.b16 %v632
    %v1403 = vunpack.c.h.b16 %v632
    %v1404 = vunpack.c.l.b16 %v633
    %v1405 = vunpack.c.h.b16 %v633
    %v1406 = vunpack.c.l.b16 %v634
    %v1407 = vunpack.c.h.b16 %v634
    %v1408 = vunpack.c.l.b16 %v635
    %v1409 = vunpack.c.h.b16 %v635
    %v1410 = vunpack.c.l.b16 %v636
    %v1411 = vunpack.c.h.b16 %v636
    %v1412 = vunpack.c.l.b16 %v637
    %v1413 = vunpack.c.h.b16 %v637
    %v1414 = vunpack.c.l.b16 %v638
    %v1415 = vunpack.c.h.b16 %v638
    %v1416 = vunpack.c.l.b16 %v639
    %v1417 = vunpack.c.h.b16 %v639
    %v1418 = vunpack.c.l.b16 %v640
    %v1419 = vunpack.c.h.b16 %v640
    %v1420 = vunpack.c.l.b16 %v641
    %v1421 = vunpack.c.h.b16 %v641
    %v1422 = vunpack.c.l.b16 %v642
    %v1423 = vunpack.c.h.b16 %v642
    %v1424 = vunpack.c.l.b16 %v643
    %v1425 = vunpack.c.h.b16 %v643
    %v1426 = vunpack.c.l.b16 %v644
    %v1427 = vunpack.c.h.b16 %v644
    %v1428 = vunpack.c.l.b16 %v645
    %v1429 = vunpack.c.h.b16 %v645
    %v1430 = vunpack.c.l.b16 %v646
    %v1431 = vunpack.c.h.b16 %v646
    %v1432 = vunpack.c.l.b16 %v647
    %v1433 = vunpack.c.h.b16 %v647
    %v1434 = vunpack.c.l.b16 %v648
    %v1435 = vunpack.c.h.b16 %v648
    %v1436 = vunpack.c.l.b16 %v649
    %v1437 = vunpack.c.h.b16 %v649
    %v1438 = vlaneseq
    %v1439 = vand.u32 %v1438, 127
    %v1440 = vlaneseq
    %v1441 = vshrl.u32 %v1440, 7
    %v1442 = vsub.s32 %v1439, %v1441
    %v1443 = vrot.slane %v1310, %v1442
    %v1444 = vadd.s32 %v1439, 4294967288
    %v1445 = vlaneseq
    %v1446 = vshrl.u32 %v1445, 7
    %v1447 = vsub.s32 %v1444, %v1446
    %v1448 = vrot.slane %v1311, %v1447
    %vm1449 = vcmask 130112
    %v1450 = vsel %vm1449, %v1448, %v1443
    %v1451 = vadd.s32 %v1439, 4294967280
    %v1452 = vlaneseq
    %v1453 = vshrl.u32 %v1452, 7
    %v1454 = vsub.s32 %v1451, %v1453
    %v1455 = vrot.slane %v1312, %v1454
    %vm1456 = vcmask 195712
    %v1457 = vsel %vm1456, %v1455, %v1450
    %v1458 = vadd.s32 %v1439, 4294967272
    %v1459 = vlaneseq
    %v1460 = vshrl.u32 %v1459, 7
    %v1461 = vsub.s32 %v1458, %v1460
    %v1462 = vrot.slane %v1313, %v1461
    %vm1463 = vcmask 261312
    %v1464 = vsel %vm1463, %v1462, %v1457
    %v1465 = vadd.s32 %v1439, 4294967264
    %v1466 = vlaneseq
    %v1467 = vshrl.u32 %v1466, 7
    %v1468 = vsub.s32 %v1465, %v1467
    %v1469 = vrot.slane %v1314, %v1468
    %vm1470 = vcmask 326912
    %v1471 = vsel %vm1470, %v1469, %v1464
    %v1472 = vadd.s32 %v1439, 4294967256
    %v1473 = vlaneseq
    %v1474 = vshrl.u32 %v1473, 7
    %v1475 = vsub.s32 %v1472, %v1474
    %v1476 = vrot.slane %v1315, %v1475
    %vm1477 = vcmask 392512
    %v1478 = vsel %vm1477, %v1476, %v1471
    %v1479 = vadd.s32 %v1439, 4294967248
    %v1480 = vlaneseq
    %v1481 = vshrl.u32 %v1480, 7
    %v1482 = vsub.s32 %v1479, %v1481
    %v1483 = vrot.slane %v1316, %v1482
    %vm1484 = vcmask 458112
    %v1485 = vsel %vm1484, %v1483, %v1478
    %v1486 = vadd.s32 %v1439, 4294967240
    %v1487 = vlaneseq
    %v1488 = vshrl.u32 %v1487, 7
    %v1489 = vsub.s32 %v1486, %v1488
    %v1490 = vrot.slane %v1317, %v1489
    %vm1491 = vcmask 523712
    %v1492 = vsel %vm1491, %v1490, %v1485
    %v1493 = vadd.s32 %v1439, 4294967232
    %v1494 = vlaneseq
    %v1495 = vshrl.u32 %v1494, 7
    %v1496 = vsub.s32 %v1493, %v1495
    %v1497 = vrot.slane %v1318, %v1496
    %vm1498 = vcmask 589312
    %v1499 = vsel %vm1498, %v1497, %v1492
    %v1500 = vadd.s32 %v1439, 4294967224
    %v1501 = vlaneseq
    %v1502 = vshrl.u32 %v1501, 7
    %v1503 = vsub.s32 %v1500, %v1502
    %v1504 = vrot.slane %v1319, %v1503
    %vm1505 = vcmask 654912
    %v1506 = vsel %vm1505, %v1504, %v1499
    %v1507 = vadd.s32 %v1439, 4294967216
    %v1508 = vlaneseq
    %v1509 = vshrl.u32 %v1508, 7
    %v1510 = vsub.s32 %v1507, %v1509
    %v1511 = vrot.slane %v1320, %v1510
    %vm1512 = vcmask 720512
    %v1513 = vsel %vm1512, %v1511, %v1506
    %v1514 = vadd.s32 %v1439, 4294967208
    %v1515 = vlaneseq
    %v1516 = vshrl.u32 %v1515, 7
    %v1517 = vsub.s32 %v1514, %v1516
    %v1518 = vrot.slane %v1321, %v1517
    %vm1519 = vcmask 786112
    %v1520 = vsel %vm1519, %v1518, %v1513
    %v1521 = vadd.s32 %v1439, 4294967200
    %v1522 = vlaneseq
    %v1523 = vshrl.u32 %v1522, 7
    %v1524 = vsub.s32 %v1521, %v1523
    %v1525 = vrot.slane %v1322, %v1524
    %vm1526 = vcmask 851712
    %v1527 = vsel %vm1526, %v1525, %v1520
    %v1528 = vadd.s32 %v1439, 4294967192
    %v1529 = vlaneseq
    %v1530 = vshrl.u32 %v1529, 7
    %v1531 = vsub.s32 %v1528, %v1530
    %v1532 = vrot.slane %v1323, %v1531
    %vm1533 = vcmask 917312
    %v1534 = vsel %vm1533, %v1532, %v1527
    %v1535 = vadd.s32 %v1439, 4294967184
    %v1536 = vlaneseq
    %v1537 = vshrl.u32 %v1536, 7
    %v1538 = vsub.s32 %v1535, %v1537
    %v1539 = vrot.slane %v1324, %v1538
    %vm1540 = vcmask 982912
    %v1541 = vsel %vm1540, %v1539, %v1534
    %v1542 = vadd.s32 %v1439, 4294967176
    %v1543 = vlaneseq
    %v1544 = vshrl.u32 %v1543, 7
    %v1545 = vsub.s32 %v1542, %v1544
    %v1546 = vrot.slane %v1325, %v1545
    %vm1547 = vcmask 1048512
    %v1548 = vsel %vm1547, %v1546, %v1541
    %v1549 = vlaneseq
    %v1550 = vshrl.u32 %v1549, 7
    %v1551 = vsub.s32 %v1439, %v1550
    %v1552 = vrot.slane %v1326, %v1551
    %v1553 = vlaneseq
    %v1554 = vshrl.u32 %v1553, 7
    %v1555 = vsub.s32 %v1444, %v1554
    %v1556 = vrot.slane %v1327, %v1555
    %v1557 = vsel %vm1449, %v1556, %v1552
    %v1558 = vlaneseq
    %v1559 = vshrl.u32 %v1558, 7
    %v1560 = vsub.s32 %v1451, %v1559
    %v1561 = vrot.slane %v1328, %v1560
    %v1562 = vsel %vm1456, %v1561, %v1557
    %v1563 = vlaneseq
    %v1564 = vshrl.u32 %v1563, 7
    %v1565 = vsub.s32 %v1458, %v1564
    %v1566 = vrot.slane %v1329, %v1565
    %v1567 = vsel %vm1463, %v1566, %v1562
    %v1568 = vlaneseq
    %v1569 = vshrl.u32 %v1568, 7
    %v1570 = vsub.s32 %v1465, %v1569
    %v1571 = vrot.slane %v1330, %v1570
    %v1572 = vsel %vm1470, %v1571, %v1567
    %v1573 = vlaneseq
    %v1574 = vshrl.u32 %v1573, 7
    %v1575 = vsub.s32 %v1472, %v1574
    %v1576 = vrot.slane %v1331, %v1575
    %v1577 = vsel %vm1477, %v1576, %v1572
    %v1578 = vlaneseq
    %v1579 = vshrl.u32 %v1578, 7
    %v1580 = vsub.s32 %v1479, %v1579
    %v1581 = vrot.slane %v1332, %v1580
    %v1582 = vsel %vm1484, %v1581, %v1577
    %v1583 = vlaneseq
    %v1584 = vshrl.u32 %v1583, 7
    %v1585 = vsub.s32 %v1486, %v1584
    %v1586 = vrot.slane %v1333, %v1585
    %v1587 = vsel %vm1491, %v1586, %v1582
    %v1588 = vlaneseq
    %v1589 = vshrl.u32 %v1588, 7
    %v1590 = vsub.s32 %v1493, %v1589
    %v1591 = vrot.slane %v1334, %v1590
    %v1592 = vsel %vm1498, %v1591, %v1587
    %v1593 = vlaneseq
    %v1594 = vshrl.u32 %v1593, 7
    %v1595 = vsub.s32 %v1500, %v1594
    %v1596 = vrot.slane %v1335, %v1595
    %v1597 = vsel %vm1505, %v1596, %v1592
    %v1598 = vlaneseq
    %v1599 = vshrl.u32 %v1598, 7
    %v1600 = vsub.s32 %v1507, %v1599
    %v1601 = vrot.slane %v1336, %v1600
    %v1602 = vsel %vm1512, %v1601, %v1597
    %v1603 = vlaneseq
    %v1604 = vshrl.u32 %v1603, 7
    %v1605 = vsub.s32 %v1514, %v1604
    %v1606 = vrot.slane %v1337, %v1605
    %v1607 = vsel %vm1519, %v1606, %v1602
    %v1608 = vlaneseq
    %v1609 = vshrl.u32 %v1608, 7
    %v1610 = vsub.s32 %v1521, %v1609
    %v1611 = vrot.slane %v1338, %v1610
    %v1612 = vsel %vm1526, %v1611, %v1607
    %v1613 = vlaneseq
    %v1614 = vshrl.u32 %v1613, 7
    %v1615 = vsub.s32 %v1528, %v1614
    %v1616 = vrot.slane %v1339, %v1615
    %v1617 = vsel %vm1533, %v1616, %v1612
    %v1618 = vlaneseq
    %v1619 = vshrl.u32 %v1618, 7
    %v1620 = vsub.s32 %v1535, %v1619
    %v1621 = vrot.slane %v1340, %v1620
    %v1622 = vsel %vm1540, %v1621, %v1617
    %v1623 = vlaneseq
    %v1624 = vshrl.u32 %v1623, 7
    %v1625 = vsub.s32 %v1542, %v1624
    %v1626 = vrot.slane %v1341, %v1625
    %v1627 = vsel %vm1547, %v1626, %v1622
    %v1628 = vlaneseq
    %v1629 = vshrl.u32 %v1628, 7
    %v1630 = vsub.s32 %v1439, %v1629
    %v1631 = vrot.slane %v1342, %v1630
    %v1632 = vlaneseq
    %v1633 = vshrl.u32 %v1632, 7
    %v1634 = vsub.s32 %v1444, %v1633
    %v1635 = vrot.slane %v1343, %v1634
    %v1636 = vsel %vm1449, %v1635, %v1631
    %v1637 = vlaneseq
    %v1638 = vshrl.u32 %v1637, 7
    %v1639 = vsub.s32 %v1451, %v1638
    %v1640 = vrot.slane %v1344, %v1639
    %v1641 = vsel %vm1456, %v1640, %v1636
    %v1642 = vlaneseq
    %v1643 = vshrl.u32 %v1642, 7
    %v1644 = vsub.s32 %v1458, %v1643
    %v1645 = vrot.slane %v1345, %v1644
    %v1646 = vsel %vm1463, %v1645, %v1641
    %v1647 = vlaneseq
    %v1648 = vshrl.u32 %v1647, 7
    %v1649 = vsub.s32 %v1465, %v1648
    %v1650 = vrot.slane %v1346, %v1649
    %v1651 = vsel %vm1470, %v1650, %v1646
    %v1652 = vlaneseq
    %v1653 = vshrl.u32 %v1652, 7
    %v1654 = vsub.s32 %v1472, %v1653
    %v1655 = vrot.slane %v1347, %v1654
    %v1656 = vsel %vm1477, %v1655, %v1651
    %v1657 = vlaneseq
    %v1658 = vshrl.u32 %v1657, 7
    %v1659 = vsub.s32 %v1479, %v1658
    %v1660 = vrot.slane %v1348, %v1659
    %v1661 = vsel %vm1484, %v1660, %v1656
    %v1662 = vlaneseq
    %v1663 = vshrl.u32 %v1662, 7
    %v1664 = vsub.s32 %v1486, %v1663
    %v1665 = vrot.slane %v1349, %v1664
    %v1666 = vsel %vm1491, %v1665, %v1661
    %v1667 = vlaneseq
    %v1668 = vshrl.u32 %v1667, 7
    %v1669 = vsub.s32 %v1493, %v1668
    %v1670 = vrot.slane %v1350, %v1669
    %v1671 = vsel %vm1498, %v1670, %v1666
    %v1672 = vlaneseq
    %v1673 = vshrl.u32 %v1672, 7
    %v1674 = vsub.s32 %v1500, %v1673
    %v1675 = vrot.slane %v1351, %v1674
    %v1676 = vsel %vm1505, %v1675, %v1671
    %v1677 = vlaneseq
    %v1678 = vshrl.u32 %v1677, 7
    %v1679 = vsub.s32 %v1507, %v1678
    %v1680 = vrot.slane %v1352, %v1679
    %v1681 = vsel %vm1512, %v1680, %v1676
    %v1682 = vlaneseq
    %v1683 = vshrl.u32 %v1682, 7
    %v1684 = vsub.s32 %v1514, %v1683
    %v1685 = vrot.slane %v1353, %v1684
    %v1686 = vsel %vm1519, %v1685, %v1681
    %v1687 = vlaneseq
    %v1688 = vshrl.u32 %v1687, 7
    %v1689 = vsub.s32 %v1521, %v1688
    %v1690 = vrot.slane %v1354, %v1689
    %v1691 = vsel %vm1526, %v1690, %v1686
    %v1692 = vlaneseq
    %v1693 = vshrl.u32 %v1692, 7
    %v1694 = vsub.s32 %v1528, %v1693
    %v1695 = vrot.slane %v1355, %v1694
    %v1696 = vsel %vm1533, %v1695, %v1691
    %v1697 = vlaneseq
    %v1698 = vshrl.u32 %v1697, 7
    %v1699 = vsub.s32 %v1535, %v1698
    %v1700 = vrot.slane %v1356, %v1699
    %v1701 = vsel %vm1540, %v1700, %v1696
    %v1702 = vlaneseq
    %v1703 = vshrl.u32 %v1702, 7
    %v1704 = vsub.s32 %v1542, %v1703
    %v1705 = vrot.slane %v1357, %v1704
    %v1706 = vsel %vm1547, %v1705, %v1701
    %v1707 = vlaneseq
    %v1708 = vshrl.u32 %v1707, 7
    %v1709 = vsub.s32 %v1439, %v1708
    %v1710 = vrot.slane %v1358, %v1709
    %v1711 = vlaneseq
    %v1712 = vshrl.u32 %v1711, 7
    %v1713 = vsub.s32 %v1444, %v1712
    %v1714 = vrot.slane %v1359, %v1713
    %v1715 = vsel %vm1449, %v1714, %v1710
    %v1716 = vlaneseq
    %v1717 = vshrl.u32 %v1716, 7
    %v1718 = vsub.s32 %v1451, %v1717
    %v1719 = vrot.slane %v1360, %v1718
    %v1720 = vsel %vm1456, %v1719, %v1715
    %v1721 = vlaneseq
    %v1722 = vshrl.u32 %v1721, 7
    %v1723 = vsub.s32 %v1458, %v1722
    %v1724 = vrot.slane %v1361, %v1723
    %v1725 = vsel %vm1463, %v1724, %v1720
    %v1726 = vlaneseq
    %v1727 = vshrl.u32 %v1726, 7
    %v1728 = vsub.s32 %v1465, %v1727
    %v1729 = vrot.slane %v1362, %v1728
    %v1730 = vsel %vm1470, %v1729, %v1725
    %v1731 = vlaneseq
    %v1732 = vshrl.u32 %v1731, 7
    %v1733 = vsub.s32 %v1472, %v1732
    %v1734 = vrot.slane %v1363, %v1733
    %v1735 = vsel %vm1477, %v1734, %v1730
    %v1736 = vlaneseq
    %v1737 = vshrl.u32 %v1736, 7
    %v1738 = vsub.s32 %v1479, %v1737
    %v1739 = vrot.slane %v1364, %v1738
    %v1740 = vsel %vm1484, %v1739, %v1735
    %v1741 = vlaneseq
    %v1742 = vshrl.u32 %v1741, 7
    %v1743 = vsub.s32 %v1486, %v1742
    %v1744 = vrot.slane %v1365, %v1743
    %v1745 = vsel %vm1491, %v1744, %v1740
    %v1746 = vlaneseq
    %v1747 = vshrl.u32 %v1746, 7
    %v1748 = vsub.s32 %v1493, %v1747
    %v1749 = vrot.slane %v1366, %v1748
    %v1750 = vsel %vm1498, %v1749, %v1745
    %v1751 = vlaneseq
    %v1752 = vshrl.u32 %v1751, 7
    %v1753 = vsub.s32 %v1500, %v1752
    %v1754 = vrot.slane %v1367, %v1753
    %v1755 = vsel %vm1505, %v1754, %v1750
    %v1756 = vlaneseq
    %v1757 = vshrl.u32 %v1756, 7
    %v1758 = vsub.s32 %v1507, %v1757
    %v1759 = vrot.slane %v1368, %v1758
    %v1760 = vsel %vm1512, %v1759, %v1755
    %v1761 = vlaneseq
    %v1762 = vshrl.u32 %v1761, 7
    %v1763 = vsub.s32 %v1514, %v1762
    %v1764 = vrot.slane %v1369, %v1763
    %v1765 = vsel %vm1519, %v1764, %v1760
    %v1766 = vlaneseq
    %v1767 = vshrl.u32 %v1766, 7
    %v1768 = vsub.s32 %v1521, %v1767
    %v1769 = vrot.slane %v1370, %v1768
    %v1770 = vsel %vm1526, %v1769, %v1765
    %v1771 = vlaneseq
    %v1772 = vshrl.u32 %v1771, 7
    %v1773 = vsub.s32 %v1528, %v1772
    %v1774 = vrot.slane %v1371, %v1773
    %v1775 = vsel %vm1533, %v1774, %v1770
    %v1776 = vlaneseq
    %v1777 = vshrl.u32 %v1776, 7
    %v1778 = vsub.s32 %v1535, %v1777
    %v1779 = vrot.slane %v1372, %v1778
    %v1780 = vsel %vm1540, %v1779, %v1775
    %v1781 = vlaneseq
    %v1782 = vshrl.u32 %v1781, 7
    %v1783 = vsub.s32 %v1542, %v1782
    %v1784 = vrot.slane %v1373, %v1783
    %v1785 = vsel %vm1547, %v1784, %v1780
    %v1786 = vlaneseq
    %v1787 = vshrl.u32 %v1786, 7
    %v1788 = vsub.s32 %v1439, %v1787
    %v1789 = vrot.slane %v1374, %v1788
    %v1790 = vlaneseq
    %v1791 = vshrl.u32 %v1790, 7
    %v1792 = vsub.s32 %v1444, %v1791
    %v1793 = vrot.slane %v1375, %v1792
    %v1794 = vsel %vm1449, %v1793, %v1789
    %v1795 = vlaneseq
    %v1796 = vshrl.u32 %v1795, 7
    %v1797 = vsub.s32 %v1451, %v1796
    %v1798 = vrot.slane %v1376, %v1797
    %v1799 = vsel %vm1456, %v1798, %v1794
    %v1800 = vlaneseq
    %v1801 = vshrl.u32 %v1800, 7
    %v1802 = vsub.s32 %v1458, %v1801
    %v1803 = vrot.slane %v1377, %v1802
    %v1804 = vsel %vm1463, %v1803, %v1799
    %v1805 = vlaneseq
    %v1806 = vshrl.u32 %v1805, 7
    %v1807 = vsub.s32 %v1465, %v1806
    %v1808 = vrot.slane %v1378, %v1807
    %v1809 = vsel %vm1470, %v1808, %v1804
    %v1810 = vlaneseq
    %v1811 = vshrl.u32 %v1810, 7
    %v1812 = vsub.s32 %v1472, %v1811
    %v1813 = vrot.slane %v1379, %v1812
    %v1814 = vsel %vm1477, %v1813, %v1809
    %v1815 = vlaneseq
    %v1816 = vshrl.u32 %v1815, 7
    %v1817 = vsub.s32 %v1479, %v1816
    %v1818 = vrot.slane %v1380, %v1817
    %v1819 = vsel %vm1484, %v1818, %v1814
    %v1820 = vlaneseq
    %v1821 = vshrl.u32 %v1820, 7
    %v1822 = vsub.s32 %v1486, %v1821
    %v1823 = vrot.slane %v1381, %v1822
    %v1824 = vsel %vm1491, %v1823, %v1819
    %v1825 = vlaneseq
    %v1826 = vshrl.u32 %v1825, 7
    %v1827 = vsub.s32 %v1493, %v1826
    %v1828 = vrot.slane %v1382, %v1827
    %v1829 = vsel %vm1498, %v1828, %v1824
    %v1830 = vlaneseq
    %v1831 = vshrl.u32 %v1830, 7
    %v1832 = vsub.s32 %v1500, %v1831
    %v1833 = vrot.slane %v1383, %v1832
    %v1834 = vsel %vm1505, %v1833, %v1829
    %v1835 = vlaneseq
    %v1836 = vshrl.u32 %v1835, 7
    %v1837 = vsub.s32 %v1507, %v1836
    %v1838 = vrot.slane %v1384, %v1837
    %v1839 = vsel %vm1512, %v1838, %v1834
    %v1840 = vlaneseq
    %v1841 = vshrl.u32 %v1840, 7
    %v1842 = vsub.s32 %v1514, %v1841
    %v1843 = vrot.slane %v1385, %v1842
    %v1844 = vsel %vm1519, %v1843, %v1839
    %v1845 = vlaneseq
    %v1846 = vshrl.u32 %v1845, 7
    %v1847 = vsub.s32 %v1521, %v1846
    %v1848 = vrot.slane %v1386, %v1847
    %v1849 = vsel %vm1526, %v1848, %v1844
    %v1850 = vlaneseq
    %v1851 = vshrl.u32 %v1850, 7
    %v1852 = vsub.s32 %v1528, %v1851
    %v1853 = vrot.slane %v1387, %v1852
    %v1854 = vsel %vm1533, %v1853, %v1849
    %v1855 = vlaneseq
    %v1856 = vshrl.u32 %v1855, 7
    %v1857 = vsub.s32 %v1535, %v1856
    %v1858 = vrot.slane %v1388, %v1857
    %v1859 = vsel %vm1540, %v1858, %v1854
    %v1860 = vlaneseq
    %v1861 = vshrl.u32 %v1860, 7
    %v1862 = vsub.s32 %v1542, %v1861
    %v1863 = vrot.slane %v1389, %v1862
    %v1864 = vsel %vm1547, %v1863, %v1859
    %v1865 = vlaneseq
    %v1866 = vshrl.u32 %v1865, 7
    %v1867 = vsub.s32 %v1439, %v1866
    %v1868 = vrot.slane %v1390, %v1867
    %v1869 = vlaneseq
    %v1870 = vshrl.u32 %v1869, 7
    %v1871 = vsub.s32 %v1444, %v1870
    %v1872 = vrot.slane %v1391, %v1871
    %v1873 = vsel %vm1449, %v1872, %v1868
    %v1874 = vlaneseq
    %v1875 = vshrl.u32 %v1874, 7
    %v1876 = vsub.s32 %v1451, %v1875
    %v1877 = vrot.slane %v1392, %v1876
    %v1878 = vsel %vm1456, %v1877, %v1873
    %v1879 = vlaneseq
    %v1880 = vshrl.u32 %v1879, 7
    %v1881 = vsub.s32 %v1458, %v1880
    %v1882 = vrot.slane %v1393, %v1881
    %v1883 = vsel %vm1463, %v1882, %v1878
    %v1884 = vlaneseq
    %v1885 = vshrl.u32 %v1884, 7
    %v1886 = vsub.s32 %v1465, %v1885
    %v1887 = vrot.slane %v1394, %v1886
    %v1888 = vsel %vm1470, %v1887, %v1883
    %v1889 = vlaneseq
    %v1890 = vshrl.u32 %v1889, 7
    %v1891 = vsub.s32 %v1472, %v1890
    %v1892 = vrot.slane %v1395, %v1891
    %v1893 = vsel %vm1477, %v1892, %v1888
    %v1894 = vlaneseq
    %v1895 = vshrl.u32 %v1894, 7
    %v1896 = vsub.s32 %v1479, %v1895
    %v1897 = vrot.slane %v1396, %v1896
    %v1898 = vsel %vm1484, %v1897, %v1893
    %v1899 = vlaneseq
    %v1900 = vshrl.u32 %v1899, 7
    %v1901 = vsub.s32 %v1486, %v1900
    %v1902 = vrot.slane %v1397, %v1901
    %v1903 = vsel %vm1491, %v1902, %v1898
    %v1904 = vlaneseq
    %v1905 = vshrl.u32 %v1904, 7
    %v1906 = vsub.s32 %v1493, %v1905
    %v1907 = vrot.slane %v1398, %v1906
    %v1908 = vsel %vm1498, %v1907, %v1903
    %v1909 = vlaneseq
    %v1910 = vshrl.u32 %v1909, 7
    %v1911 = vsub.s32 %v1500, %v1910
    %v1912 = vrot.slane %v1399, %v1911
    %v1913 = vsel %vm1505, %v1912, %v1908
    %v1914 = vlaneseq
    %v1915 = vshrl.u32 %v1914, 7
    %v1916 = vsub.s32 %v1507, %v1915
    %v1917 = vrot.slane %v1400, %v1916
    %v1918 = vsel %vm1512, %v1917, %v1913
    %v1919 = vlaneseq
    %v1920 = vshrl.u32 %v1919, 7
    %v1921 = vsub.s32 %v1514, %v1920
    %v1922 = vrot.slane %v1401, %v1921
    %v1923 = vsel %vm1519, %v1922, %v1918
    %v1924 = vlaneseq
    %v1925 = vshrl.u32 %v1924, 7
    %v1926 = vsub.s32 %v1521, %v1925
    %v1927 = vrot.slane %v1402, %v1926
    %v1928 = vsel %vm1526, %v1927, %v1923
    %v1929 = vlaneseq
    %v1930 = vshrl.u32 %v1929, 7
    %v1931 = vsub.s32 %v1528, %v1930
    %v1932 = vrot.slane %v1403, %v1931
    %v1933 = vsel %vm1533, %v1932, %v1928
    %v1934 = vlaneseq
    %v1935 = vshrl.u32 %v1934, 7
    %v1936 = vsub.s32 %v1535, %v1935
    %v1937 = vrot.slane %v1404, %v1936
    %v1938 = vsel %vm1540, %v1937, %v1933
    %v1939 = vlaneseq
    %v1940 = vshrl.u32 %v1939, 7
    %v1941 = vsub.s32 %v1542, %v1940
    %v1942 = vrot.slane %v1405, %v1941
    %v1943 = vsel %vm1547, %v1942, %v1938
    %v1944 = vlaneseq
    %v1945 = vshrl.u32 %v1944, 7
    %v1946 = vsub.s32 %v1439, %v1945
    %v1947 = vrot.slane %v1406, %v1946
    %v1948 = vlaneseq
    %v1949 = vshrl.u32 %v1948, 7
    %v1950 = vsub.s32 %v1444, %v1949
    %v1951 = vrot.slane %v1407, %v1950
    %v1952 = vsel %vm1449, %v1951, %v1947
    %v1953 = vlaneseq
    %v1954 = vshrl.u32 %v1953, 7
    %v1955 = vsub.s32 %v1451, %v1954
    %v1956 = vrot.slane %v1408, %v1955
    %v1957 = vsel %vm1456, %v1956, %v1952
    %v1958 = vlaneseq
    %v1959 = vshrl.u32 %v1958, 7
    %v1960 = vsub.s32 %v1458, %v1959
    %v1961 = vrot.slane %v1409, %v1960
    %v1962 = vsel %vm1463, %v1961, %v1957
    %v1963 = vlaneseq
    %v1964 = vshrl.u32 %v1963, 7
    %v1965 = vsub.s32 %v1465, %v1964
    %v1966 = vrot.slane %v1410, %v1965
    %v1967 = vsel %vm1470, %v1966, %v1962
    %v1968 = vlaneseq
    %v1969 = vshrl.u32 %v1968, 7
    %v1970 = vsub.s32 %v1472, %v1969
    %v1971 = vrot.slane %v1411, %v1970
    %v1972 = vsel %vm1477, %v1971, %v1967
    %v1973 = vlaneseq
    %v1974 = vshrl.u32 %v1973, 7
    %v1975 = vsub.s32 %v1479, %v1974
    %v1976 = vrot.slane %v1412, %v1975
    %v1977 = vsel %vm1484, %v1976, %v1972
    %v1978 = vlaneseq
    %v1979 = vshrl.u32 %v1978, 7
    %v1980 = vsub.s32 %v1486, %v1979
    %v1981 = vrot.slane %v1413, %v1980
    %v1982 = vsel %vm1491, %v1981, %v1977
    %v1983 = vlaneseq
    %v1984 = vshrl.u32 %v1983, 7
    %v1985 = vsub.s32 %v1493, %v1984
    %v1986 = vrot.slane %v1414, %v1985
    %v1987 = vsel %vm1498, %v1986, %v1982
    %v1988 = vlaneseq
    %v1989 = vshrl.u32 %v1988, 7
    %v1990 = vsub.s32 %v1500, %v1989
    %v1991 = vrot.slane %v1415, %v1990
    %v1992 = vsel %vm1505, %v1991, %v1987
    %v1993 = vlaneseq
    %v1994 = vshrl.u32 %v1993, 7
    %v1995 = vsub.s32 %v1507, %v1994
    %v1996 = vrot.slane %v1416, %v1995
    %v1997 = vsel %vm1512, %v1996, %v1992
    %v1998 = vlaneseq
    %v1999 = vshrl.u32 %v1998, 7
    %v2000 = vsub.s32 %v1514, %v1999
    %v2001 = vrot.slane %v1417, %v2000
    %v2002 = vsel %vm1519, %v2001, %v1997
    %v2003 = vlaneseq
    %v2004 = vshrl.u32 %v2003, 7
    %v2005 = vsub.s32 %v1521, %v2004
    %v2006 = vrot.slane %v1418, %v2005
    %v2007 = vsel %vm1526, %v2006, %v2002
    %v2008 = vlaneseq
    %v2009 = vshrl.u32 %v2008, 7
    %v2010 = vsub.s32 %v1528, %v2009
    %v2011 = vrot.slane %v1419, %v2010
    %v2012 = vsel %vm1533, %v2011, %v2007
    %v2013 = vlaneseq
    %v2014 = vshrl.u32 %v2013, 7
    %v2015 = vsub.s32 %v1535, %v2014
    %v2016 = vrot.slane %v1420, %v2015
    %v2017 = vsel %vm1540, %v2016, %v2012
    %v2018 = vlaneseq
    %v2019 = vshrl.u32 %v2018, 7
    %v2020 = vsub.s32 %v1542, %v2019
    %v2021 = vrot.slane %v1421, %v2020
    %v2022 = vsel %vm1547, %v2021, %v2017
    %v2023 = vlaneseq
    %v2024 = vshrl.u32 %v2023, 7
    %v2025 = vsub.s32 %v1439, %v2024
    %v2026 = vrot.slane %v1422, %v2025
    %v2027 = vlaneseq
    %v2028 = vshrl.u32 %v2027, 7
    %v2029 = vsub.s32 %v1444, %v2028
    %v2030 = vrot.slane %v1423, %v2029
    %v2031 = vsel %vm1449, %v2030, %v2026
    %v2032 = vlaneseq
    %v2033 = vshrl.u32 %v2032, 7
    %v2034 = vsub.s32 %v1451, %v2033
    %v2035 = vrot.slane %v1424, %v2034
    %v2036 = vsel %vm1456, %v2035, %v2031
    %v2037 = vlaneseq
    %v2038 = vshrl.u32 %v2037, 7
    %v2039 = vsub.s32 %v1458, %v2038
    %v2040 = vrot.slane %v1425, %v2039
    %v2041 = vsel %vm1463, %v2040, %v2036
    %v2042 = vlaneseq
    %v2043 = vshrl.u32 %v2042, 7
    %v2044 = vsub.s32 %v1465, %v2043
    %v2045 = vrot.slane %v1426, %v2044
    %v2046 = vsel %vm1470, %v2045, %v2041
    %v2047 = vlaneseq
    %v2048 = vshrl.u32 %v2047, 7
    %v2049 = vsub.s32 %v1472, %v2048
    %v2050 = vrot.slane %v1427, %v2049
    %v2051 = vsel %vm1477, %v2050, %v2046
    %v2052 = vlaneseq
    %v2053 = vshrl.u32 %v2052, 7
    %v2054 = vsub.s32 %v1479, %v2053
    %v2055 = vrot.slane %v1428, %v2054
    %v2056 = vsel %vm1484, %v2055, %v2051
    %v2057 = vlaneseq
    %v2058 = vshrl.u32 %v2057, 7
    %v2059 = vsub.s32 %v1486, %v2058
    %v2060 = vrot.slane %v1429, %v2059
    %v2061 = vsel %vm1491, %v2060, %v2056
    %v2062 = vlaneseq
    %v2063 = vshrl.u32 %v2062, 7
    %v2064 = vsub.s32 %v1493, %v2063
    %v2065 = vrot.slane %v1430, %v2064
    %v2066 = vsel %vm1498, %v2065, %v2061
    %v2067 = vlaneseq
    %v2068 = vshrl.u32 %v2067, 7
    %v2069 = vsub.s32 %v1500, %v2068
    %v2070 = vrot.slane %v1431, %v2069
    %v2071 = vsel %vm1505, %v2070, %v2066
    %v2072 = vlaneseq
    %v2073 = vshrl.u32 %v2072, 7
    %v2074 = vsub.s32 %v1507, %v2073
    %v2075 = vrot.slane %v1432, %v2074
    %v2076 = vsel %vm1512, %v2075, %v2071
    %v2077 = vlaneseq
    %v2078 = vshrl.u32 %v2077, 7
    %v2079 = vsub.s32 %v1514, %v2078
    %v2080 = vrot.slane %v1433, %v2079
    %v2081 = vsel %vm1519, %v2080, %v2076
    %v2082 = vlaneseq
    %v2083 = vshrl.u32 %v2082, 7
    %v2084 = vsub.s32 %v1521, %v2083
    %v2085 = vrot.slane %v1434, %v2084
    %v2086 = vsel %vm1526, %v2085, %v2081
    %v2087 = vlaneseq
    %v2088 = vshrl.u32 %v2087, 7
    %v2089 = vsub.s32 %v1528, %v2088
    %v2090 = vrot.slane %v1435, %v2089
    %v2091 = vsel %vm1533, %v2090, %v2086
    %v2092 = vlaneseq
    %v2093 = vshrl.u32 %v2092, 7
    %v2094 = vsub.s32 %v1535, %v2093
    %v2095 = vrot.slane %v1436, %v2094
    %v2096 = vsel %vm1540, %v2095, %v2091
    %v2097 = vlaneseq
    %v2098 = vshrl.u32 %v2097, 7
    %v2099 = vsub.s32 %v1542, %v2098
    %v2100 = vrot.slane %v1437, %v2099
    %v2101 = vsel %vm1547, %v2100, %v2096
    %vm2102 = vcmask 1041409
    %v2103 = vsel %vm2102, %v1864, %v1548
    %v2104 = vsel %vm2102, %v1943, %v1627
    %v2105 = vsel %vm2102, %v2022, %v1706
    %v2106 = vsel %vm2102, %v2101, %v1785
    %v2107 = vpack.c.b16 %v2103, %v2103
    %v2108 = vpack.c.b16 %v2104, %v2104
    %v2109 = vpack.c.b16 %v2105, %v2105
    %v2110 = vpack.c.b16 %v2106, %v2106
    %v2627 = vunpack.c.l.b16 %v650
    %v2628 = vunpack.c.h.b16 %v650
    %v2629 = vunpack.c.l.b16 %v651
    %v2630 = vunpack.c.h.b16 %v651
    %v2631 = vunpack.c.l.b16 %v652
    %v2632 = vunpack.c.h.b16 %v652
    %v2633 = vunpack.c.l.b16 %v653
    %v2634 = vunpack.c.h.b16 %v653
    %v2635 = vunpack.c.l.b16 %v654
    %v2636 = vunpack.c.h.b16 %v654
    %v2637 = vunpack.c.l.b16 %v655
    %v2638 = vunpack.c.h.b16 %v655
    %v2639 = vunpack.c.l.b16 %v656
    %v2640 = vunpack.c.h.b16 %v656
    %v2641 = vunpack.c.l.b16 %v657
    %v2642 = vunpack.c.h.b16 %v657
    %v2643 = vunpack.c.l.b16 %v658
    %v2644 = vunpack.c.h.b16 %v658
    %v2645 = vunpack.c.l.b16 %v659
    %v2646 = vunpack.c.h.b16 %v659
    %v2647 = vunpack.c.l.b16 %v660
    %v2648 = vunpack.c.h.b16 %v660
    %v2649 = vunpack.c.l.b16 %v661
    %v2650 = vunpack.c.h.b16 %v661
    %v2651 = vunpack.c.l.b16 %v662
    %v2652 = vunpack.c.h.b16 %v662
    %v2653 = vunpack.c.l.b16 %v663
    %v2654 = vunpack.c.h.b16 %v663
    %v2655 = vunpack.c.l.b16 %v664
    %v2656 = vunpack.c.h.b16 %v664
    %v2657 = vunpack.c.l.b16 %v665
    %v2658 = vunpack.c.h.b16 %v665
    %v2659 = vunpack.c.l.b16 %v666
    %v2660 = vunpack.c.h.b16 %v666
    %v2661 = vunpack.c.l.b16 %v667
    %v2662 = vunpack.c.h.b16 %v667
    %v2663 = vunpack.c.l.b16 %v668
    %v2664 = vunpack.c.h.b16 %v668
    %v2665 = vunpack.c.l.b16 %v669
    %v2666 = vunpack.c.h.b16 %v669
    %v2667 = vunpack.c.l.b16 %v670
    %v2668 = vunpack.c.h.b16 %v670
    %v2669 = vunpack.c.l.b16 %v671
    %v2670 = vunpack.c.h.b16 %v671
    %v2671 = vunpack.c.l.b16 %v672
    %v2672 = vunpack.c.h.b16 %v672
    %v2673 = vunpack.c.l.b16 %v673
    %v2674 = vunpack.c.h.b16 %v673
    %v2675 = vunpack.c.l.b16 %v674
    %v2676 = vunpack.c.h.b16 %v674
    %v2677 = vunpack.c.l.b16 %v675
    %v2678 = vunpack.c.h.b16 %v675
    %v2679 = vunpack.c.l.b16 %v676
    %v2680 = vunpack.c.h.b16 %v676
    %v2681 = vunpack.c.l.b16 %v677
    %v2682 = vunpack.c.h.b16 %v677
    %v2683 = vunpack.c.l.b16 %v678
    %v2684 = vunpack.c.h.b16 %v678
    %v2685 = vunpack.c.l.b16 %v679
    %v2686 = vunpack.c.h.b16 %v679
    %v2687 = vunpack.c.l.b16 %v680
    %v2688 = vunpack.c.h.b16 %v680
    %v2689 = vunpack.c.l.b16 %v681
    %v2690 = vunpack.c.h.b16 %v681
    %v2691 = vunpack.c.l.b16 %v682
    %v2692 = vunpack.c.h.b16 %v682
    %v2693 = vunpack.c.l.b16 %v683
    %v2694 = vunpack.c.h.b16 %v683
    %v2695 = vunpack.c.l.b16 %v684
    %v2696 = vunpack.c.h.b16 %v684
    %v2697 = vunpack.c.l.b16 %v685
    %v2698 = vunpack.c.h.b16 %v685
    %v2699 = vunpack.c.l.b16 %v686
    %v2700 = vunpack.c.h.b16 %v686
    %v2701 = vunpack.c.l.b16 %v687
    %v2702 = vunpack.c.h.b16 %v687
    %v2703 = vunpack.c.l.b16 %v688
    %v2704 = vunpack.c.h.b16 %v688
    %v2705 = vunpack.c.l.b16 %v689
    %v2706 = vunpack.c.h.b16 %v689
    %v2707 = vunpack.c.l.b16 %v690
    %v2708 = vunpack.c.h.b16 %v690
    %v2709 = vunpack.c.l.b16 %v691
    %v2710 = vunpack.c.h.b16 %v691
    %v2711 = vunpack.c.l.b16 %v692
    %v2712 = vunpack.c.h.b16 %v692
    %v2713 = vunpack.c.l.b16 %v693
    %v2714 = vunpack.c.h.b16 %v693
    %v2715 = vunpack.c.l.b16 %v694
    %v2716 = vunpack.c.h.b16 %v694
    %v2717 = vunpack.c.l.b16 %v695
    %v2718 = vunpack.c.h.b16 %v695
    %v2719 = vunpack.c.l.b16 %v696
    %v2720 = vunpack.c.h.b16 %v696
    %v2721 = vunpack.c.l.b16 %v697
    %v2722 = vunpack.c.h.b16 %v697
    %v2723 = vunpack.c.l.b16 %v698
    %v2724 = vunpack.c.h.b16 %v698
    %v2725 = vunpack.c.l.b16 %v699
    %v2726 = vunpack.c.h.b16 %v699
    %v2727 = vunpack.c.l.b16 %v700
    %v2728 = vunpack.c.h.b16 %v700
    %v2729 = vunpack.c.l.b16 %v701
    %v2730 = vunpack.c.h.b16 %v701
    %v2731 = vunpack.c.l.b16 %v702
    %v2732 = vunpack.c.h.b16 %v702
    %v2733 = vunpack.c.l.b16 %v703
    %v2734 = vunpack.c.h.b16 %v703
    %v2735 = vunpack.c.l.b16 %v704
    %v2736 = vunpack.c.h.b16 %v704
    %v2737 = vunpack.c.l.b16 %v705
    %v2738 = vunpack.c.h.b16 %v705
    %v2739 = vunpack.c.l.b16 %v706
    %v2740 = vunpack.c.h.b16 %v706
    %v2741 = vunpack.c.l.b16 %v707
    %v2742 = vunpack.c.h.b16 %v707
    %v2743 = vunpack.c.l.b16 %v708
    %v2744 = vunpack.c.h.b16 %v708
    %v2745 = vunpack.c.l.b16 %v709
    %v2746 = vunpack.c.h.b16 %v709
    %v2747 = vunpack.c.l.b16 %v710
    %v2748 = vunpack.c.h.b16 %v710
    %v2749 = vunpack.c.l.b16 %v711
    %v2750 = vunpack.c.h.b16 %v711
    %v2751 = vunpack.c.l.b16 %v712
    %v2752 = vunpack.c.h.b16 %v712
    %v2753 = vunpack.c.l.b16 %v713
    %v2754 = vunpack.c.h.b16 %v713
    %v2755 = vunpack.c.l.b16 %v714
    %v2756 = vunpack.c.h.b16 %v714
    %v2757 = vunpack.c.l.b16 %v715
    %v2758 = vunpack.c.h.b16 %v715
    %v2759 = vunpack.c.l.b16 %v716
    %v2760 = vunpack.c.h.b16 %v716
    %v2761 = vunpack.c.l.b16 %v717
    %v2762 = vunpack.c.h.b16 %v717
    %v2763 = vunpack.c.l.b16 %v718
    %v2764 = vunpack.c.h.b16 %v718
    %v2765 = vunpack.c.l.b16 %v719
    %v2766 = vunpack.c.h.b16 %v719
    %v2767 = vunpack.c.l.b16 %v720
    %v2768 = vunpack.c.h.b16 %v720
    %v2769 = vunpack.c.l.b16 %v721
    %v2770 = vunpack.c.h.b16 %v721
    %v2771 = vunpack.c.l.b16 %v722
    %v2772 = vunpack.c.h.b16 %v722
    %v2773 = vunpack.c.l.b16 %v723
    %v2774 = vunpack.c.h.b16 %v723
    %v2775 = vunpack.c.l.b16 %v724
    %v2776 = vunpack.c.h.b16 %v724
    %v2777 = vunpack.c.l.b16 %v725
    %v2778 = vunpack.c.h.b16 %v725
    %v2779 = vunpack.c.l.b16 %v726
    %v2780 = vunpack.c.h.b16 %v726
    %v2781 = vunpack.c.l.b16 %v727
    %v2782 = vunpack.c.h.b16 %v727
    %v2783 = vunpack.c.l.b16 %v728
    %v2784 = vunpack.c.h.b16 %v728
    %v2785 = vunpack.c.l.b16 %v729
    %v2786 = vunpack.c.h.b16 %v729
    %v2787 = vunpack.c.l.b16 %v730
    %v2788 = vunpack.c.h.b16 %v730
    %v2789 = vunpack.c.l.b16 %v731
    %v2790 = vunpack.c.h.b16 %v731
    %v2791 = vunpack.c.l.b16 %v732
    %v2792 = vunpack.c.h.b16 %v732
    %v2793 = vunpack.c.l.b16 %v733
    %v2794 = vunpack.c.h.b16 %v733
    %v2795 = vunpack.c.l.b16 %v734
    %v2796 = vunpack.c.h.b16 %v734
    %v2797 = vunpack.c.l.b16 %v735
    %v2798 = vunpack.c.h.b16 %v735
    %v2799 = vunpack.c.l.b16 %v736
    %v2800 = vunpack.c.h.b16 %v736
    %v2801 = vunpack.c.l.b16 %v737
    %v2802 = vunpack.c.h.b16 %v737
    %v2803 = vunpack.c.l.b16 %v738
    %v2804 = vunpack.c.h.b16 %v738
    %v2805 = vunpack.c.l.b16 %v739
    %v2806 = vunpack.c.h.b16 %v739
    %v2807 = vunpack.c.l.b16 %v740
    %v2808 = vunpack.c.h.b16 %v740
    %v2809 = vunpack.c.l.b16 %v741
    %v2810 = vunpack.c.h.b16 %v741
    %v2811 = vunpack.c.l.b16 %v742
    %v2812 = vunpack.c.h.b16 %v742
    %v2813 = vunpack.c.l.b16 %v743
    %v2814 = vunpack.c.h.b16 %v743
    %v2815 = vunpack.c.l.b16 %v744
    %v2816 = vunpack.c.h.b16 %v744
    %v2817 = vunpack.c.l.b16 %v745
    %v2818 = vunpack.c.h.b16 %v745
    %v2819 = vunpack.c.l.b16 %v746
    %v2820 = vunpack.c.h.b16 %v746
    %v2821 = vunpack.c.l.b16 %v747
    %v2822 = vunpack.c.h.b16 %v747
    %v2823 = vunpack.c.l.b16 %v748
    %v2824 = vunpack.c.h.b16 %v748
    %v2825 = vunpack.c.l.b16 %v749
    %v2826 = vunpack.c.h.b16 %v749
    %v2827 = vunpack.c.l.b16 %v750
    %v2828 = vunpack.c.h.b16 %v750
    %v2829 = vunpack.c.l.b16 %v751
    %v2830 = vunpack.c.h.b16 %v751
    %v2831 = vunpack.c.l.b16 %v752
    %v2832 = vunpack.c.h.b16 %v752
    %v2833 = vunpack.c.l.b16 %v753
    %v2834 = vunpack.c.h.b16 %v753
    %v2835 = vunpack.c.l.b16 %v754
    %v2836 = vunpack.c.h.b16 %v754
    %v2837 = vunpack.c.l.b16 %v755
    %v2838 = vunpack.c.h.b16 %v755
    %v2839 = vunpack.c.l.b16 %v756
    %v2840 = vunpack.c.h.b16 %v756
    %v2841 = vunpack.c.l.b16 %v757
    %v2842 = vunpack.c.h.b16 %v757
    %v2843 = vunpack.c.l.b16 %v758
    %v2844 = vunpack.c.h.b16 %v758
    %v2845 = vunpack.c.l.b16 %v759
    %v2846 = vunpack.c.h.b16 %v759
    %v2847 = vunpack.c.l.b16 %v760
    %v2848 = vunpack.c.h.b16 %v760
    %v2849 = vunpack.c.l.b16 %v761
    %v2850 = vunpack.c.h.b16 %v761
    %v2851 = vunpack.c.l.b16 %v762
    %v2852 = vunpack.c.h.b16 %v762
    %v2853 = vunpack.c.l.b16 %v763
    %v2854 = vunpack.c.h.b16 %v763
    %v2855 = vunpack.c.l.b16 %v764
    %v2856 = vunpack.c.h.b16 %v764
    %v2857 = vunpack.c.l.b16 %v765
    %v2858 = vunpack.c.h.b16 %v765
    %v2859 = vunpack.c.l.b16 %v766
    %v2860 = vunpack.c.h.b16 %v766
    %v2861 = vunpack.c.l.b16 %v767
    %v2862 = vunpack.c.h.b16 %v767
    %v2863 = vunpack.c.l.b16 %v768
    %v2864 = vunpack.c.h.b16 %v768
    %v2865 = vunpack.c.l.b16 %v769
    %v2866 = vunpack.c.h.b16 %v769
    %v2867 = vunpack.c.l.b16 %v770
    %v2868 = vunpack.c.h.b16 %v770
    %v2869 = vunpack.c.l.b16 %v771
    %v2870 = vunpack.c.h.b16 %v771
    %v2871 = vunpack.c.l.b16 %v772
    %v2872 = vunpack.c.h.b16 %v772
    %v2873 = vunpack.c.l.b16 %v773
    %v2874 = vunpack.c.h.b16 %v773
    %v2875 = vunpack.c.l.b16 %v774
    %v2876 = vunpack.c.h.b16 %v774
    %v2877 = vunpack.c.l.b16 %v775
    %v2878 = vunpack.c.h.b16 %v775
    %v2879 = vunpack.c.l.b16 %v776
    %v2880 = vunpack.c.h.b16 %v776
    %v2881 = vunpack.c.l.b16 %v777
    %v2882 = vunpack.c.h.b16 %v777
    %v2883 = vunpack.c.l.b16 %v778
    %v2884 = vunpack.c.h.b16 %v778
    %v2885 = vunpack.c.l.b16 %v779
    %v2886 = vunpack.c.h.b16 %v779
    %v2887 = vunpack.c.l.b16 %v780
    %v2888 = vunpack.c.h.b16 %v780
    %v2889 = vunpack.c.l.b16 %v781
    %v2890 = vunpack.c.h.b16 %v781
    %v2891 = vunpack.c.l.b16 %v782
    %v2892 = vunpack.c.h.b16 %v782
    %v2893 = vunpack.c.l.b16 %v783
    %v2894 = vunpack.c.h.b16 %v783
    %v2895 = vunpack.c.l.b16 %v784
    %v2896 = vunpack.c.h.b16 %v784
    %v2897 = vunpack.c.l.b16 %v785
    %v2898 = vunpack.c.h.b16 %v785
    %v2899 = vunpack.c.l.b16 %v786
    %v2900 = vunpack.c.h.b16 %v786
    %v2901 = vunpack.c.l.b16 %v787
    %v2902 = vunpack.c.h.b16 %v787
    %v2903 = vunpack.c.l.b16 %v788
    %v2904 = vunpack.c.h.b16 %v788
    %v2905 = vunpack.c.l.b16 %v789
    %v2906 = vunpack.c.h.b16 %v789
    %v2907 = vunpack.c.l.b16 %v790
    %v2908 = vunpack.c.h.b16 %v790
    %v2909 = vunpack.c.l.b16 %v791
    %v2910 = vunpack.c.h.b16 %v791
    %v2911 = vunpack.c.l.b16 %v792
    %v2912 = vunpack.c.h.b16 %v792
    %v2913 = vunpack.c.l.b16 %v793
    %v2914 = vunpack.c.h.b16 %v793
    %v2915 = vunpack.c.l.b16 %v794
    %v2916 = vunpack.c.h.b16 %v794
    %v2917 = vunpack.c.l.b16 %v795
    %v2918 = vunpack.c.h.b16 %v795
    %v2919 = vunpack.c.l.b16 %v796
    %v2920 = vunpack.c.h.b16 %v796
    %v2921 = vunpack.c.l.b16 %v797
    %v2922 = vunpack.c.h.b16 %v797
    %v2923 = vunpack.c.l.b16 %v798
    %v2924 = vunpack.c.h.b16 %v798
    %v2925 = vunpack.c.l.b16 %v799
    %v2926 = vunpack.c.h.b16 %v799
    %v2927 = vunpack.c.l.b16 %v800
    %v2928 = vunpack.c.h.b16 %v800
    %v2929 = vunpack.c.l.b16 %v801
    %v2930 = vunpack.c.h.b16 %v801
    %v2931 = vunpack.c.l.b16 %v802
    %v2932 = vunpack.c.h.b16 %v802
    %v2933 = vunpack.c.l.b16 %v803
    %v2934 = vunpack.c.h.b16 %v803
    %v2935 = vunpack.c.l.b16 %v804
    %v2936 = vunpack.c.h.b16 %v804
    %v2937 = vunpack.c.l.b16 %v805
    %v2938 = vunpack.c.h.b16 %v805
    %v2939 = vunpack.c.l.b16 %v806
    %v2940 = vunpack.c.h.b16 %v806
    %v2941 = vunpack.c.l.b16 %v807
    %v2942 = vunpack.c.h.b16 %v807
    %v2943 = vunpack.c.l.b16 %v808
    %v2944 = vunpack.c.h.b16 %v808
    %v2945 = vunpack.c.l.b16 %v809
    %v2946 = vunpack.c.h.b16 %v809
    %v2947 = vunpack.c.l.b16 %v810
    %v2948 = vunpack.c.h.b16 %v810
    %v2949 = vunpack.c.l.b16 %v811
    %v2950 = vunpack.c.h.b16 %v811
    %v2951 = vunpack.c.l.b16 %v812
    %v2952 = vunpack.c.h.b16 %v812
    %v2953 = vunpack.c.l.b16 %v813
    %v2954 = vunpack.c.h.b16 %v813
    %v2955 = vunpack.c.l.b16 %v814
    %v2956 = vunpack.c.h.b16 %v814
    %v2957 = vunpack.c.l.b16 %v815
    %v2958 = vunpack.c.h.b16 %v815
    %v2959 = vunpack.c.l.b16 %v816
    %v2960 = vunpack.c.h.b16 %v816
    %v2961 = vunpack.c.l.b16 %v817
    %v2962 = vunpack.c.h.b16 %v817
    %v2963 = vunpack.c.l.b16 %v818
    %v2964 = vunpack.c.h.b16 %v818
    %v2965 = vunpack.c.l.b16 %v819
    %v2966 = vunpack.c.h.b16 %v819
    %v2967 = vunpack.c.l.b16 %v820
    %v2968 = vunpack.c.h.b16 %v820
    %v2969 = vunpack.c.l.b16 %v821
    %v2970 = vunpack.c.h.b16 %v821
    %v2971 = vunpack.c.l.b16 %v822
    %v2972 = vunpack.c.h.b16 %v822
    %v2973 = vunpack.c.l.b16 %v823
    %v2974 = vunpack.c.h.b16 %v823
    %v2975 = vunpack.c.l.b16 %v824
    %v2976 = vunpack.c.h.b16 %v824
    %v2977 = vunpack.c.l.b16 %v825
    %v2978 = vunpack.c.h.b16 %v825
    %v2979 = vunpack.c.l.b16 %v826
    %v2980 = vunpack.c.h.b16 %v826
    %v2981 = vunpack.c.l.b16 %v827
    %v2982 = vunpack.c.h.b16 %v827
    %v2983 = vunpack.c.l.b16 %v828
    %v2984 = vunpack.c.h.b16 %v828
    %v2985 = vunpack.c.l.b16 %v829
    %v2986 = vunpack.c.h.b16 %v829
    %v2987 = vunpack.c.l.b16 %v830
    %v2988 = vunpack.c.h.b16 %v830
    %v2989 = vunpack.c.l.b16 %v831
    %v2990 = vunpack.c.h.b16 %v831
    %v2991 = vunpack.c.l.b16 %v832
    %v2992 = vunpack.c.h.b16 %v832
    %v2993 = vunpack.c.l.b16 %v833
    %v2994 = vunpack.c.h.b16 %v833
    %v2995 = vunpack.c.l.b16 %v834
    %v2996 = vunpack.c.h.b16 %v834
    %v2997 = vunpack.c.l.b16 %v835
    %v2998 = vunpack.c.h.b16 %v835
    %v2999 = vunpack.c.l.b16 %v836
    %v3000 = vunpack.c.h.b16 %v836
    %v3001 = vunpack.c.l.b16 %v837
    %v3002 = vunpack.c.h.b16 %v837
    %v3003 = vunpack.c.l.b16 %v838
    %v3004 = vunpack.c.h.b16 %v838
    %v3005 = vunpack.c.l.b16 %v839
    %v3006 = vunpack.c.h.b16 %v839
    %v3007 = vunpack.c.l.b16 %v840
    %v3008 = vunpack.c.h.b16 %v840
    %v3009 = vunpack.c.l.b16 %v841
    %v3010 = vunpack.c.h.b16 %v841
    %v3011 = vunpack.c.l.b16 %v842
    %v3012 = vunpack.c.h.b16 %v842
    %v3013 = vunpack.c.l.b16 %v843
    %v3014 = vunpack.c.h.b16 %v843
    %v3015 = vunpack.c.l.b16 %v844
    %v3016 = vunpack.c.h.b16 %v844
    %v3017 = vunpack.c.l.b16 %v845
    %v3018 = vunpack.c.h.b16 %v845
    %v3019 = vunpack.c.l.b16 %v846
    %v3020 = vunpack.c.h.b16 %v846
    %v3021 = vunpack.c.l.b16 %v847
    %v3022 = vunpack.c.h.b16 %v847
    %v3023 = vunpack.c.l.b16 %v848
    %v3024 = vunpack.c.h.b16 %v848
    %v3025 = vunpack.c.l.b16 %v849
    %v3026 = vunpack.c.h.b16 %v849
    %v3027 = vunpack.c.l.b16 %v850
    %v3028 = vunpack.c.h.b16 %v850
    %v3029 = vunpack.c.l.b16 %v851
    %v3030 = vunpack.c.h.b16 %v851
    %v3031 = vunpack.c.l.b16 %v852
    %v3032 = vunpack.c.h.b16 %v852
    %v3033 = vunpack.c.l.b16 %v853
    %v3034 = vunpack.c.h.b16 %v853
    %v3035 = vunpack.c.l.b16 %v854
    %v3036 = vunpack.c.h.b16 %v854
    %v3037 = vunpack.c.l.b16 %v855
    %v3038 = vunpack.c.h.b16 %v855
    %v3039 = vunpack.c.l.b16 %v856
    %v3040 = vunpack.c.h.b16 %v856
    %v3041 = vunpack.c.l.b16 %v857
    %v3042 = vunpack.c.h.b16 %v857
    %v3043 = vunpack.c.l.b16 %v858
    %v3044 = vunpack.c.h.b16 %v858
    %v3045 = vunpack.c.l.b16 %v859
    %v3046 = vunpack.c.h.b16 %v859
    %v3047 = vunpack.c.l.b16 %v860
    %v3048 = vunpack.c.h.b16 %v860
    %v3049 = vunpack.c.l.b16 %v861
    %v3050 = vunpack.c.h.b16 %v861
    %v3051 = vunpack.c.l.b16 %v862
    %v3052 = vunpack.c.h.b16 %v862
    %v3053 = vunpack.c.l.b16 %v863
    %v3054 = vunpack.c.h.b16 %v863
    %v3055 = vunpack.c.l.b16 %v864
    %v3056 = vunpack.c.h.b16 %v864
    %v3057 = vunpack.c.l.b16 %v865
    %v3058 = vunpack.c.h.b16 %v865
    %v3059 = vunpack.c.l.b16 %v866
    %v3060 = vunpack.c.h.b16 %v866
    %v3061 = vunpack.c.l.b16 %v867
    %v3062 = vunpack.c.h.b16 %v867
    %v3063 = vunpack.c.l.b16 %v868
    %v3064 = vunpack.c.h.b16 %v868
    %v3065 = vunpack.c.l.b16 %v869
    %v3066 = vunpack.c.h.b16 %v869
    %v3067 = vunpack.c.l.b16 %v870
    %v3068 = vunpack.c.h.b16 %v870
    %v3069 = vunpack.c.l.b16 %v871
    %v3070 = vunpack.c.h.b16 %v871
    %v3071 = vunpack.c.l.b16 %v872
    %v3072 = vunpack.c.h.b16 %v872
    %v3073 = vunpack.c.l.b16 %v873
    %v3074 = vunpack.c.h.b16 %v873
    %v3075 = vunpack.c.l.b16 %v874
    %v3076 = vunpack.c.h.b16 %v874
    %v3077 = vunpack.c.l.b16 %v875
    %v3078 = vunpack.c.h.b16 %v875
    %v3079 = vunpack.c.l.b16 %v876
    %v3080 = vunpack.c.h.b16 %v876
    %v3081 = vunpack.c.l.b16 %v877
    %v3082 = vunpack.c.h.b16 %v877
    %v3083 = vunpack.c.l.b16 %v878
    %v3084 = vunpack.c.h.b16 %v878
    %v3085 = vunpack.c.l.b16 %v879
    %v3086 = vunpack.c.h.b16 %v879
    %v3087 = vunpack.c.l.b16 %v880
    %v3088 = vunpack.c.h.b16 %v880
    %v3089 = vunpack.c.l.b16 %v881
    %v3090 = vunpack.c.h.b16 %v881
    %v3091 = vunpack.c.l.b16 %v882
    %v3092 = vunpack.c.h.b16 %v882
    %v3093 = vunpack.c.l.b16 %v883
    %v3094 = vunpack.c.h.b16 %v883
    %v3095 = vunpack.c.l.b16 %v884
    %v3096 = vunpack.c.h.b16 %v884
    %v3097 = vunpack.c.l.b16 %v885
    %v3098 = vunpack.c.h.b16 %v885
    %v3099 = vunpack.c.l.b16 %v886
    %v3100 = vunpack.c.h.b16 %v886
    %v3101 = vunpack.c.l.b16 %v887
    %v3102 = vunpack.c.h.b16 %v887
    %v3103 = vunpack.c.l.b16 %v888
    %v3104 = vunpack.c.h.b16 %v888
    %v3105 = vunpack.c.l.b16 %v889
    %v3106 = vunpack.c.h.b16 %v889
    %v3107 = vunpack.c.l.b16 %v890
    %v3108 = vunpack.c.h.b16 %v890
    %v3109 = vunpack.c.l.b16 %v891
    %v3110 = vunpack.c.h.b16 %v891
    %v3111 = vunpack.c.l.b16 %v892
    %v3112 = vunpack.c.h.b16 %v892
    %v3113 = vunpack.c.l.b16 %v893
    %v3114 = vunpack.c.h.b16 %v893
    %v3115 = vunpack.c.l.b16 %v894
    %v3116 = vunpack.c.h.b16 %v894
    %v3117 = vunpack.c.l.b16 %v895
    %v3118 = vunpack.c.h.b16 %v895
    %v3119 = vunpack.c.l.b16 %v896
    %v3120 = vunpack.c.h.b16 %v896
    %v3121 = vunpack.c.l.b16 %v897
    %v3122 = vunpack.c.h.b16 %v897
    %v3123 = vunpack.c.l.b16 %v898
    %v3124 = vunpack.c.h.b16 %v898
    %v3125 = vunpack.c.l.b16 %v899
    %v3126 = vunpack.c.h.b16 %v899
    %v3127 = vunpack.c.l.b16 %v900
    %v3128 = vunpack.c.h.b16 %v900
    %v3129 = vunpack.c.l.b16 %v901
    %v3130 = vunpack.c.h.b16 %v901
    %v3131 = vunpack.c.l.b16 %v902
    %v3132 = vunpack.c.h.b16 %v902
    %v3133 = vunpack.c.l.b16 %v903
    %v3134 = vunpack.c.h.b16 %v903
    %v3135 = vunpack.c.l.b16 %v904
    %v3136 = vunpack.c.h.b16 %v904
    %v3137 = vunpack.c.l.b16 %v905
    %v3138 = vunpack.c.h.b16 %v905
    %v3139 = vunpack.c.l.b16 %v906
    %v3140 = vunpack.c.h.b16 %v906
    %v3141 = vunpack.c.l.b16 %v907
    %v3142 = vunpack.c.h.b16 %v907
    %v3143 = vunpack.c.l.b16 %v908
    %v3144 = vunpack.c.h.b16 %v908
    %v3145 = vunpack.c.l.b16 %v909
    %v3146 = vunpack.c.h.b16 %v909
    %v3147 = vunpack.c.l.b16 %v910
    %v3148 = vunpack.c.h.b16 %v910
    %v3149 = vunpack.c.l.b16 %v911
    %v3150 = vunpack.c.h.b16 %v911
    %v3151 = vunpack.c.l.b16 %v912
    %v3152 = vunpack.c.h.b16 %v912
    %v3153 = vunpack.c.l.b16 %v913
    %v3154 = vunpack.c.h.b16 %v913
    %v3155 = vunpack.c.l.b16 %v914
    %v3156 = vunpack.c.h.b16 %v914
    %v3157 = vunpack.c.l.b16 %v915
    %v3158 = vunpack.c.h.b16 %v915
    %v3159 = vunpack.c.l.b16 %v916
    %v3160 = vunpack.c.h.b16 %v916
    %v3161 = vunpack.c.l.b16 %v917
    %v3162 = vunpack.c.h.b16 %v917
    %v3163 = vunpack.c.l.b16 %v918
    %v3164 = vunpack.c.h.b16 %v918
    %v3165 = vunpack.c.l.b16 %v919
    %v3166 = vunpack.c.h.b16 %v919
    %v3167 = vunpack.c.l.b16 %v920
    %v3168 = vunpack.c.h.b16 %v920
    %v3169 = vunpack.c.l.b16 %v921
    %v3170 = vunpack.c.h.b16 %v921
    %v3171 = vunpack.c.l.b16 %v922
    %v3172 = vunpack.c.h.b16 %v922
    %v3173 = vunpack.c.l.b16 %v923
    %v3174 = vunpack.c.h.b16 %v923
    %v3175 = vunpack.c.l.b16 %v924
    %v3176 = vunpack.c.h.b16 %v924
    %v3177 = vunpack.c.l.b16 %v925
    %v3178 = vunpack.c.h.b16 %v925
    %v3179 = vunpack.c.l.b16 %v926
    %v3180 = vunpack.c.h.b16 %v926
    %v3181 = vunpack.c.l.b16 %v927
    %v3182 = vunpack.c.h.b16 %v927
    %v3183 = vunpack.c.l.b16 %v928
    %v3184 = vunpack.c.h.b16 %v928
    %v3185 = vunpack.c.l.b16 %v929
    %v3186 = vunpack.c.h.b16 %v929
    %v3187 = vunpack.c.l.b16 %v930
    %v3188 = vunpack.c.h.b16 %v930
    %v3189 = vunpack.c.l.b16 %v931
    %v3190 = vunpack.c.h.b16 %v931
    %v3191 = vunpack.c.l.b16 %v932
    %v3192 = vunpack.c.h.b16 %v932
    %v3193 = vunpack.c.l.b16 %v933
    %v3194 = vunpack.c.h.b16 %v933
    %v3195 = vunpack.c.l.b16 %v934
    %v3196 = vunpack.c.h.b16 %v934
    %v3197 = vunpack.c.l.b16 %v935
    %v3198 = vunpack.c.h.b16 %v935
    %v3199 = vunpack.c.l.b16 %v936
    %v3200 = vunpack.c.h.b16 %v936
    %v3201 = vunpack.c.l.b16 %v937
    %v3202 = vunpack.c.h.b16 %v937
    %v3203 = vunpack.c.l.b16 %v938
    %v3204 = vunpack.c.h.b16 %v938
    %v3205 = vunpack.c.l.b16 %v939
    %v3206 = vunpack.c.h.b16 %v939
    %v3207 = vunpack.c.l.b16 %v940
    %v3208 = vunpack.c.h.b16 %v940
    %v3209 = vunpack.c.l.b16 %v941
    %v3210 = vunpack.c.h.b16 %v941
    %v3211 = vunpack.c.l.b16 %v942
    %v3212 = vunpack.c.h.b16 %v942
    %v3213 = vunpack.c.l.b16 %v943
    %v3214 = vunpack.c.h.b16 %v943
    %v3215 = vunpack.c.l.b16 %v944
    %v3216 = vunpack.c.h.b16 %v944
    %v3217 = vunpack.c.l.b16 %v945
    %v3218 = vunpack.c.h.b16 %v945
    %v3219 = vunpack.c.l.b16 %v946
    %v3220 = vunpack.c.h.b16 %v946
    %v3221 = vunpack.c.l.b16 %v947
    %v3222 = vunpack.c.h.b16 %v947
    %v3223 = vunpack.c.l.b16 %v948
    %v3224 = vunpack.c.h.b16 %v948
    %v3225 = vunpack.c.l.b16 %v949
    %v3226 = vunpack.c.h.b16 %v949
    %v3227 = vunpack.c.l.b16 %v950
    %v3228 = vunpack.c.h.b16 %v950
    %v3229 = vunpack.c.l.b16 %v951
    %v3230 = vunpack.c.h.b16 %v951
    %v3231 = vunpack.c.l.b16 %v952
    %v3232 = vunpack.c.h.b16 %v952
    %v3233 = vunpack.c.l.b16 %v953
    %v3234 = vunpack.c.h.b16 %v953
    %v3235 = vunpack.c.l.b16 %v954
    %v3236 = vunpack.c.h.b16 %v954
    %v3237 = vunpack.c.l.b16 %v955
    %v3238 = vunpack.c.h.b16 %v955
    %v3239 = vunpack.c.l.b16 %v956
    %v3240 = vunpack.c.h.b16 %v956
    %v3241 = vunpack.c.l.b16 %v957
    %v3242 = vunpack.c.h.b16 %v957
    %v3243 = vunpack.c.l.b16 %v958
    %v3244 = vunpack.c.h.b16 %v958
    %v3245 = vunpack.c.l.b16 %v959
    %v3246 = vunpack.c.h.b16 %v959
    %v3247 = vunpack.c.l.b16 %v960
    %v3248 = vunpack.c.h.b16 %v960
    %v3249 = vunpack.c.l.b16 %v961
    %v3250 = vunpack.c.h.b16 %v961
    %v3251 = vunpack.c.l.b16 %v962
    %v3252 = vunpack.c.h.b16 %v962
    %v3253 = vunpack.c.l.b16 %v963
    %v3254 = vunpack.c.h.b16 %v963
    %v3255 = vunpack.c.l.b16 %v964
    %v3256 = vunpack.c.h.b16 %v964
    %v3257 = vunpack.c.l.b16 %v965
    %v3258 = vunpack.c.h.b16 %v965
    %v3259 = vunpack.c.l.b16 %v966
    %v3260 = vunpack.c.h.b16 %v966
    %v3261 = vunpack.c.l.b16 %v967
    %v3262 = vunpack.c.h.b16 %v967
    %v3263 = vunpack.c.l.b16 %v968
    %v3264 = vunpack.c.h.b16 %v968
    %v3265 = vunpack.c.l.b16 %v969
    %v3266 = vunpack.c.h.b16 %v969
    %v3267 = vunpack.c.l.b16 %v970
    %v3268 = vunpack.c.h.b16 %v970
    %v3269 = vunpack.c.l.b16 %v971
    %v3270 = vunpack.c.h.b16 %v971
    %v3271 = vunpack.c.l.b16 %v972
    %v3272 = vunpack.c.h.b16 %v972
    %v3273 = vunpack.c.l.b16 %v973
    %v3274 = vunpack.c.h.b16 %v973
    %v3275 = vunpack.c.l.b16 %v974
    %v3276 = vunpack.c.h.b16 %v974
    %v3277 = vunpack.c.l.b16 %v975
    %v3278 = vunpack.c.h.b16 %v975
    %v3279 = vunpack.c.l.b16 %v976
    %v3280 = vunpack.c.h.b16 %v976
    %v3281 = vunpack.c.l.b16 %v977
    %v3282 = vunpack.c.h.b16 %v977
    %v3283 = vunpack.c.l.b16 %v978
    %v3284 = vunpack.c.h.b16 %v978
    %v3285 = vunpack.c.l.b16 %v979
    %v3286 = vunpack.c.h.b16 %v979
    %v3287 = vunpack.c.l.b16 %v980
    %v3288 = vunpack.c.h.b16 %v980
    %v3289 = vunpack.c.l.b16 %v981
    %v3290 = vunpack.c.h.b16 %v981
    %v3291 = vunpack.c.l.b16 %v982
    %v3292 = vunpack.c.h.b16 %v982
    %v3293 = vunpack.c.l.b16 %v983
    %v3294 = vunpack.c.h.b16 %v983
    %v3295 = vunpack.c.l.b16 %v984
    %v3296 = vunpack.c.h.b16 %v984
    %v3297 = vunpack.c.l.b16 %v985
    %v3298 = vunpack.c.h.b16 %v985
    %v3299 = vunpack.c.l.b16 %v986
    %v3300 = vunpack.c.h.b16 %v986
    %v3301 = vunpack.c.l.b16 %v987
    %v3302 = vunpack.c.h.b16 %v987
    %v3303 = vunpack.c.l.b16 %v988
    %v3304 = vunpack.c.h.b16 %v988
    %v3305 = vunpack.c.l.b16 %v989
    %v3306 = vunpack.c.h.b16 %v989
    %v3307 = vunpack.c.l.b16 %v990
    %v3308 = vunpack.c.h.b16 %v990
    %v3309 = vunpack.c.l.b16 %v991
    %v3310 = vunpack.c.h.b16 %v991
    %v3311 = vunpack.c.l.b16 %v992
    %v3312 = vunpack.c.h.b16 %v992
    %v3313 = vunpack.c.l.b16 %v993
    %v3314 = vunpack.c.h.b16 %v993
    %v3315 = vunpack.c.l.b16 %v994
    %v3316 = vunpack.c.h.b16 %v994
    %v3317 = vunpack.c.l.b16 %v995
    %v3318 = vunpack.c.h.b16 %v995
    %v3319 = vunpack.c.l.b16 %v996
    %v3320 = vunpack.c.h.b16 %v996
    %v3321 = vunpack.c.l.b16 %v997
    %v3322 = vunpack.c.h.b16 %v997
    %v3323 = vunpack.c.l.b16 %v998
    %v3324 = vunpack.c.h.b16 %v998
    %v3325 = vunpack.c.l.b16 %v999
    %v3326 = vunpack.c.h.b16 %v999
    %v3327 = vunpack.c.l.b16 %v1000
    %v3328 = vunpack.c.h.b16 %v1000
    %v3329 = vunpack.c.l.b16 %v1001
    %v3330 = vunpack.c.h.b16 %v1001
    %v3331 = vunpack.c.l.b16 %v1002
    %v3332 = vunpack.c.h.b16 %v1002
    %v3333 = vunpack.c.l.b16 %v1003
    %v3334 = vunpack.c.h.b16 %v1003
    %v3335 = vunpack.c.l.b16 %v1004
    %v3336 = vunpack.c.h.b16 %v1004
    %v3337 = vunpack.c.l.b16 %v1005
    %v3338 = vunpack.c.h.b16 %v1005
    %v3339 = vunpack.c.l.b16 %v1006
    %v3340 = vunpack.c.h.b16 %v1006
    %v3341 = vunpack.c.l.b16 %v1007
    %v3342 = vunpack.c.h.b16 %v1007
    %v3343 = vunpack.c.l.b16 %v1008
    %v3344 = vunpack.c.h.b16 %v1008
    %v3345 = vunpack.c.l.b16 %v1009
    %v3346 = vunpack.c.h.b16 %v1009
    %v3347 = vunpack.c.l.b16 %v1010
    %v3348 = vunpack.c.h.b16 %v1010
    %v3349 = vunpack.c.l.b16 %v1011
    %v3350 = vunpack.c.h.b16 %v1011
    %v3351 = vunpack.c.l.b16 %v1012
    %v3352 = vunpack.c.h.b16 %v1012
    %v3353 = vunpack.c.l.b16 %v1013
    %v3354 = vunpack.c.h.b16 %v1013
    %v3355 = vunpack.c.l.b16 %v1014
    %v3356 = vunpack.c.h.b16 %v1014
    %v3357 = vunpack.c.l.b16 %v1015
    %v3358 = vunpack.c.h.b16 %v1015
    %v3359 = vunpack.c.l.b16 %v1016
    %v3360 = vunpack.c.h.b16 %v1016
    %v3361 = vunpack.c.l.b16 %v1017
    %v3362 = vunpack.c.h.b16 %v1017
    %v3363 = vunpack.c.l.b16 %v1018
    %v3364 = vunpack.c.h.b16 %v1018
    %v3365 = vunpack.c.l.b16 %v1019
    %v3366 = vunpack.c.h.b16 %v1019
    %v3367 = vunpack.c.l.b16 %v1020
    %v3368 = vunpack.c.h.b16 %v1020
    %v3369 = vunpack.c.l.b16 %v1021
    %v3370 = vunpack.c.h.b16 %v1021
    %v3371 = vunpack.c.l.b16 %v1022
    %v3372 = vunpack.c.h.b16 %v1022
    %v3373 = vunpack.c.l.b16 %v1023
    %v3374 = vunpack.c.h.b16 %v1023
    %v3375 = vunpack.c.l.b16 %v1024
    %v3376 = vunpack.c.h.b16 %v1024
    %v3377 = vunpack.c.l.b16 %v1025
    %v3378 = vunpack.c.h.b16 %v1025
    %v3379 = vunpack.c.l.b16 %v1026
    %v3380 = vunpack.c.h.b16 %v1026
    %v3381 = vunpack.c.l.b16 %v1027
    %v3382 = vunpack.c.h.b16 %v1027
    %v3383 = vunpack.c.l.b16 %v1028
    %v3384 = vunpack.c.h.b16 %v1028
    %v3385 = vunpack.c.l.b16 %v1029
    %v3386 = vunpack.c.h.b16 %v1029
    %v3387 = vunpack.c.l.b16 %v1030
    %v3388 = vunpack.c.h.b16 %v1030
    %v3389 = vunpack.c.l.b16 %v1031
    %v3390 = vunpack.c.h.b16 %v1031
    %v3391 = vunpack.c.l.b16 %v1032
    %v3392 = vunpack.c.h.b16 %v1032
    %v3393 = vunpack.c.l.b16 %v1033
    %v3394 = vunpack.c.h.b16 %v1033
    %v3395 = vunpack.c.l.b16 %v1034
    %v3396 = vunpack.c.h.b16 %v1034
    %v3397 = vunpack.c.l.b16 %v1035
    %v3398 = vunpack.c.h.b16 %v1035
    %v3399 = vunpack.c.l.b16 %v1036
    %v3400 = vunpack.c.h.b16 %v1036
    %v3401 = vunpack.c.l.b16 %v1037
    %v3402 = vunpack.c.h.b16 %v1037
    %v3403 = vunpack.c.l.b16 %v1038
    %v3404 = vunpack.c.h.b16 %v1038
    %v3405 = vunpack.c.l.b16 %v1039
    %v3406 = vunpack.c.h.b16 %v1039
    %v3407 = vunpack.c.l.b16 %v1040
    %v3408 = vunpack.c.h.b16 %v1040
    %v3409 = vunpack.c.l.b16 %v1041
    %v3410 = vunpack.c.h.b16 %v1041
    %v3411 = vunpack.c.l.b16 %v1042
    %v3412 = vunpack.c.h.b16 %v1042
    %v3413 = vunpack.c.l.b16 %v1043
    %v3414 = vunpack.c.h.b16 %v1043
    %v3415 = vunpack.c.l.b16 %v1044
    %v3416 = vunpack.c.h.b16 %v1044
    %v3417 = vunpack.c.l.b16 %v1045
    %v3418 = vunpack.c.h.b16 %v1045
    %v3419 = vunpack.c.l.b16 %v1046
    %v3420 = vunpack.c.h.b16 %v1046
    %v3421 = vunpack.c.l.b16 %v1047
    %v3422 = vunpack.c.h.b16 %v1047
    %v3423 = vunpack.c.l.b16 %v1048
    %v3424 = vunpack.c.h.b16 %v1048
    %v3425 = vunpack.c.l.b16 %v1049
    %v3426 = vunpack.c.h.b16 %v1049
    %v3427 = vunpack.c.l.b16 %v1050
    %v3428 = vunpack.c.h.b16 %v1050
    %v3429 = vunpack.c.l.b16 %v1051
    %v3430 = vunpack.c.h.b16 %v1051
    %v3431 = vunpack.c.l.b16 %v1052
    %v3432 = vunpack.c.h.b16 %v1052
    %v3433 = vunpack.c.l.b16 %v1053
    %v3434 = vunpack.c.h.b16 %v1053
    %v3435 = vunpack.c.l.b16 %v1054
    %v3436 = vunpack.c.h.b16 %v1054
    %v3437 = vunpack.c.l.b16 %v1055
    %v3438 = vunpack.c.h.b16 %v1055
    %v3439 = vunpack.c.l.b16 %v1056
    %v3440 = vunpack.c.h.b16 %v1056
    %v3441 = vunpack.c.l.b16 %v1057
    %v3442 = vunpack.c.h.b16 %v1057
    %v3443 = vunpack.c.l.b16 %v1058
    %v3444 = vunpack.c.h.b16 %v1058
    %v3445 = vunpack.c.l.b16 %v1059
    %v3446 = vunpack.c.h.b16 %v1059
    %v3447 = vunpack.c.l.b16 %v1060
    %v3448 = vunpack.c.h.b16 %v1060
    %v3449 = vunpack.c.l.b16 %v1061
    %v3450 = vunpack.c.h.b16 %v1061
    %v3451 = vunpack.c.l.b16 %v1062
    %v3452 = vunpack.c.h.b16 %v1062
    %v3453 = vunpack.c.l.b16 %v1063
    %v3454 = vunpack.c.h.b16 %v1063
    %v3455 = vunpack.c.l.b16 %v1064
    %v3456 = vunpack.c.h.b16 %v1064
    %v3457 = vunpack.c.l.b16 %v1065
    %v3458 = vunpack.c.h.b16 %v1065
    %v3459 = vunpack.c.l.b16 %v1066
    %v3460 = vunpack.c.h.b16 %v1066
    %v3461 = vunpack.c.l.b16 %v1067
    %v3462 = vunpack.c.h.b16 %v1067
    %v3463 = vunpack.c.l.b16 %v1068
    %v3464 = vunpack.c.h.b16 %v1068
    %v3465 = vunpack.c.l.b16 %v1069
    %v3466 = vunpack.c.h.b16 %v1069
    %v3467 = vunpack.c.l.b16 %v1070
    %v3468 = vunpack.c.h.b16 %v1070
    %v3469 = vunpack.c.l.b16 %v1071
    %v3470 = vunpack.c.h.b16 %v1071
    %v3471 = vunpack.c.l.b16 %v1072
    %v3472 = vunpack.c.h.b16 %v1072
    %v3473 = vunpack.c.l.b16 %v1073
    %v3474 = vunpack.c.h.b16 %v1073
    %v3475 = vunpack.c.l.b16 %v1074
    %v3476 = vunpack.c.h.b16 %v1074
    %v3477 = vunpack.c.l.b16 %v1075
    %v3478 = vunpack.c.h.b16 %v1075
    %v3479 = vunpack.c.l.b16 %v1076
    %v3480 = vunpack.c.h.b16 %v1076
    %v3481 = vunpack.c.l.b16 %v1077
    %v3482 = vunpack.c.h.b16 %v1077
    %v3483 = vunpack.c.l.b16 %v1078
    %v3484 = vunpack.c.h.b16 %v1078
    %v3485 = vunpack.c.l.b16 %v1079
    %v3486 = vunpack.c.h.b16 %v1079
    %v3487 = vunpack.c.l.b16 %v1080
    %v3488 = vunpack.c.h.b16 %v1080
    %v3489 = vunpack.c.l.b16 %v1081
    %v3490 = vunpack.c.h.b16 %v1081
    %v3491 = vunpack.c.l.b16 %v1082
    %v3492 = vunpack.c.h.b16 %v1082
    %v3493 = vunpack.c.l.b16 %v1083
    %v3494 = vunpack.c.h.b16 %v1083
    %v3495 = vunpack.c.l.b16 %v1084
    %v3496 = vunpack.c.h.b16 %v1084
    %v3497 = vunpack.c.l.b16 %v1085
    %v3498 = vunpack.c.h.b16 %v1085
    %v3499 = vunpack.c.l.b16 %v1086
    %v3500 = vunpack.c.h.b16 %v1086
    %v3501 = vunpack.c.l.b16 %v1087
    %v3502 = vunpack.c.h.b16 %v1087
    %v3503 = vunpack.c.l.b16 %v1088
    %v3504 = vunpack.c.h.b16 %v1088
    %v3505 = vunpack.c.l.b16 %v1089
    %v3506 = vunpack.c.h.b16 %v1089
    %v3507 = vunpack.c.l.b16 %v1090
    %v3508 = vunpack.c.h.b16 %v1090
    %v3509 = vunpack.c.l.b16 %v1091
    %v3510 = vunpack.c.h.b16 %v1091
    %v3511 = vunpack.c.l.b16 %v1092
    %v3512 = vunpack.c.h.b16 %v1092
    %v3513 = vunpack.c.l.b16 %v1093
    %v3514 = vunpack.c.h.b16 %v1093
    %v3515 = vunpack.c.l.b16 %v1094
    %v3516 = vunpack.c.h.b16 %v1094
    %v3517 = vunpack.c.l.b16 %v1095
    %v3518 = vunpack.c.h.b16 %v1095
    %v3519 = vunpack.c.l.b16 %v1096
    %v3520 = vunpack.c.h.b16 %v1096
    %v3521 = vunpack.c.l.b16 %v1097
    %v3522 = vunpack.c.h.b16 %v1097
    %v3523 = vunpack.c.l.b16 %v1098
    %v3524 = vunpack.c.h.b16 %v1098
    %v3525 = vunpack.c.l.b16 %v1099
    %v3526 = vunpack.c.h.b16 %v1099
    %v3527 = vunpack.c.l.b16 %v1100
    %v3528 = vunpack.c.h.b16 %v1100
    %v3529 = vunpack.c.l.b16 %v1101
    %v3530 = vunpack.c.h.b16 %v1101
    %v3531 = vunpack.c.l.b16 %v1102
    %v3532 = vunpack.c.h.b16 %v1102
    %v3533 = vunpack.c.l.b16 %v1103
    %v3534 = vunpack.c.h.b16 %v1103
    %v3535 = vunpack.c.l.b16 %v1104
    %v3536 = vunpack.c.h.b16 %v1104
    %v3537 = vunpack.c.l.b16 %v1105
    %v3538 = vunpack.c.h.b16 %v1105
    %v3539 = vunpack.c.l.b16 %v1106
    %v3540 = vunpack.c.h.b16 %v1106
    %v3541 = vunpack.c.l.b16 %v1107
    %v3542 = vunpack.c.h.b16 %v1107
    %v3543 = vunpack.c.l.b16 %v1108
    %v3544 = vunpack.c.h.b16 %v1108
    %v3545 = vunpack.c.l.b16 %v1109
    %v3546 = vunpack.c.h.b16 %v1109
    %v3547 = vunpack.c.l.b16 %v1110
    %v3548 = vunpack.c.h.b16 %v1110
    %v3549 = vunpack.c.l.b16 %v1111
    %v3550 = vunpack.c.h.b16 %v1111
    %v3551 = vunpack.c.l.b16 %v1112
    %v3552 = vunpack.c.h.b16 %v1112
    %v3553 = vunpack.c.l.b16 %v1113
    %v3554 = vunpack.c.h.b16 %v1113
    %v3555 = vunpack.c.l.b16 %v1114
    %v3556 = vunpack.c.h.b16 %v1114
    %v3557 = vunpack.c.l.b16 %v1115
    %v3558 = vunpack.c.h.b16 %v1115
    %v3559 = vunpack.c.l.b16 %v1116
    %v3560 = vunpack.c.h.b16 %v1116
    %v3561 = vunpack.c.l.b16 %v1117
    %v3562 = vunpack.c.h.b16 %v1117
    %v3563 = vunpack.c.l.b16 %v1118
    %v3564 = vunpack.c.h.b16 %v1118
    %v3565 = vunpack.c.l.b16 %v1119
    %v3566 = vunpack.c.h.b16 %v1119
    %v3567 = vunpack.c.l.b16 %v1120
    %v3568 = vunpack.c.h.b16 %v1120
    %v3569 = vunpack.c.l.b16 %v1121
    %v3570 = vunpack.c.h.b16 %v1121
    %v3571 = vunpack.c.l.b16 %v1122
    %v3572 = vunpack.c.h.b16 %v1122
    %v3573 = vunpack.c.l.b16 %v1123
    %v3574 = vunpack.c.h.b16 %v1123
    %v3575 = vunpack.c.l.b16 %v1124
    %v3576 = vunpack.c.h.b16 %v1124
    %v3577 = vunpack.c.l.b16 %v1125
    %v3578 = vunpack.c.h.b16 %v1125
    %v3579 = vunpack.c.l.b16 %v1126
    %v3580 = vunpack.c.h.b16 %v1126
    %v3581 = vunpack.c.l.b16 %v1127
    %v3582 = vunpack.c.h.b16 %v1127
    %v3583 = vunpack.c.l.b16 %v1128
    %v3584 = vunpack.c.h.b16 %v1128
    %v3585 = vunpack.c.l.b16 %v1129
    %v3586 = vunpack.c.h.b16 %v1129
    %v3587 = vunpack.c.l.b16 %v1130
    %v3588 = vunpack.c.h.b16 %v1130
    %v3589 = vunpack.c.l.b16 %v1131
    %v3590 = vunpack.c.h.b16 %v1131
    %v3591 = vunpack.c.l.b16 %v1132
    %v3592 = vunpack.c.h.b16 %v1132
    %v3593 = vunpack.c.l.b16 %v1133
    %v3594 = vunpack.c.h.b16 %v1133
    %v3595 = vunpack.c.l.b16 %v1134
    %v3596 = vunpack.c.h.b16 %v1134
    %v3597 = vunpack.c.l.b16 %v1135
    %v3598 = vunpack.c.h.b16 %v1135
    %v3599 = vunpack.c.l.b16 %v1136
    %v3600 = vunpack.c.h.b16 %v1136
    %v3601 = vunpack.c.l.b16 %v1137
    %v3602 = vunpack.c.h.b16 %v1137
    %v3603 = vunpack.c.l.b16 %v1138
    %v3604 = vunpack.c.h.b16 %v1138
    %v3605 = vunpack.c.l.b16 %v1139
    %v3606 = vunpack.c.h.b16 %v1139
    %v3607 = vunpack.c.l.b16 %v1140
    %v3608 = vunpack.c.h.b16 %v1140
    %v3609 = vunpack.c.l.b16 %v1141
    %v3610 = vunpack.c.h.b16 %v1141
    %v3611 = vunpack.c.l.b16 %v1142
    %v3612 = vunpack.c.h.b16 %v1142
    %v3613 = vunpack.c.l.b16 %v1143
    %v3614 = vunpack.c.h.b16 %v1143
    %v3615 = vunpack.c.l.b16 %v1144
    %v3616 = vunpack.c.h.b16 %v1144
    %v3617 = vunpack.c.l.b16 %v1145
    %v3618 = vunpack.c.h.b16 %v1145
    %v3619 = vunpack.c.l.b16 %v1146
    %v3620 = vunpack.c.h.b16 %v1146
    %v3621 = vunpack.c.l.b16 %v1147
    %v3622 = vunpack.c.h.b16 %v1147
    %v3623 = vunpack.c.l.b16 %v1148
    %v3624 = vunpack.c.h.b16 %v1148
    %v3625 = vunpack.c.l.b16 %v1149
    %v3626 = vunpack.c.h.b16 %v1149
    %v3627 = vunpack.c.l.b16 %v1150
    %v3628 = vunpack.c.h.b16 %v1150
    %v3629 = vunpack.c.l.b16 %v1151
    %v3630 = vunpack.c.h.b16 %v1151
    %v3631 = vunpack.c.l.b16 %v1152
    %v3632 = vunpack.c.h.b16 %v1152
    %v3633 = vunpack.c.l.b16 %v1153
    %v3634 = vunpack.c.h.b16 %v1153
    %v3635 = vunpack.c.l.b16 %v1154
    %v3636 = vunpack.c.h.b16 %v1154
    %v3637 = vunpack.c.l.b16 %v1155
    %v3638 = vunpack.c.h.b16 %v1155
    %v3639 = vunpack.c.l.b16 %v1156
    %v3640 = vunpack.c.h.b16 %v1156
    %v3641 = vunpack.c.l.b16 %v1157
    %v3642 = vunpack.c.h.b16 %v1157
    %v3643 = vunpack.c.l.b16 %v1158
    %v3644 = vunpack.c.h.b16 %v1158
    %v3645 = vunpack.c.l.b16 %v1159
    %v3646 = vunpack.c.h.b16 %v1159
    %v3647 = vunpack.c.l.b16 %v1160
    %v3648 = vunpack.c.h.b16 %v1160
    %v3649 = vunpack.c.l.b16 %v1161
    %v3650 = vunpack.c.h.b16 %v1161
    %v3651 = vpack.c.b16 %v2643, %v2627
    %v3652 = vpack.c.b16 %v2644, %v2628
    %v3653 = vpack.c.b16 %v2645, %v2629
    %v3654 = vpack.c.b16 %v2646, %v2630
    %v3655 = vpack.c.b16 %v2647, %v2631
    %v3656 = vpack.c.b16 %v2648, %v2632
    %v3657 = vpack.c.b16 %v2649, %v2633
    %v3658 = vpack.c.b16 %v2650, %v2634
    %v3659 = vpack.c.b16 %v2651, %v2635
    %v3660 = vpack.c.b16 %v2652, %v2636
    %v3661 = vpack.c.b16 %v2653, %v2637
    %v3662 = vpack.c.b16 %v2654, %v2638
    %v3663 = vpack.c.b16 %v2655, %v2639
    %v3664 = vpack.c.b16 %v2656, %v2640
    %v3665 = vpack.c.b16 %v2657, %v2641
    %v3666 = vpack.c.b16 %v2658, %v2642
    %v3667 = vpack.c.b16 %v2675, %v2659
    %v3668 = vpack.c.b16 %v2676, %v2660
    %v3669 = vpack.c.b16 %v2677, %v2661
    %v3670 = vpack.c.b16 %v2678, %v2662
    %v3671 = vpack.c.b16 %v2679, %v2663
    %v3672 = vpack.c.b16 %v2680, %v2664
    %v3673 = vpack.c.b16 %v2681, %v2665
    %v3674 = vpack.c.b16 %v2682, %v2666
    %v3675 = vpack.c.b16 %v2683, %v2667
    %v3676 = vpack.c.b16 %v2684, %v2668
    %v3677 = vpack.c.b16 %v2685, %v2669
    %v3678 = vpack.c.b16 %v2686, %v2670
    %v3679 = vpack.c.b16 %v2687, %v2671
    %v3680 = vpack.c.b16 %v2688, %v2672
    %v3681 = vpack.c.b16 %v2689, %v2673
    %v3682 = vpack.c.b16 %v2690, %v2674
    %v3683 = vpack.c.b16 %v2707, %v2691
    %v3684 = vpack.c.b16 %v2708, %v2692
    %v3685 = vpack.c.b16 %v2709, %v2693
    %v3686 = vpack.c.b16 %v2710, %v2694
    %v3687 = vpack.c.b16 %v2711, %v2695
    %v3688 = vpack.c.b16 %v2712, %v2696
    %v3689 = vpack.c.b16 %v2713, %v2697
    %v3690 = vpack.c.b16 %v2714, %v2698
    %v3691 = vpack.c.b16 %v2715, %v2699
    %v3692 = vpack.c.b16 %v2716, %v2700
    %v3693 = vpack.c.b16 %v2717, %v2701
    %v3694 = vpack.c.b16 %v2718, %v2702
    %v3695 = vpack.c.b16 %v2719, %v2703
    %v3696 = vpack.c.b16 %v2720, %v2704
    %v3697 = vpack.c.b16 %v2721, %v2705
    %v3698 = vpack.c.b16 %v2722, %v2706
    %v3699 = vpack.c.b16 %v2739, %v2723
    %v3700 = vpack.c.b16 %v2740, %v2724
    %v3701 = vpack.c.b16 %v2741, %v2725
    %v3702 = vpack.c.b16 %v2742, %v2726
    %v3703 = vpack.c.b16 %v2743, %v2727
    %v3704 = vpack.c.b16 %v2744, %v2728
    %v3705 = vpack.c.b16 %v2745, %v2729
    %v3706 = vpack.c.b16 %v2746, %v2730
    %v3707 = vpack.c.b16 %v2747, %v2731
    %v3708 = vpack.c.b16 %v2748, %v2732
    %v3709 = vpack.c.b16 %v2749, %v2733
    %v3710 = vpack.c.b16 %v2750, %v2734
    %v3711 = vpack.c.b16 %v2751, %v2735
    %v3712 = vpack.c.b16 %v2752, %v2736
    %v3713 = vpack.c.b16 %v2753, %v2737
    %v3714 = vpack.c.b16 %v2754, %v2738
    %v3715 = vpack.c.b16 %v2771, %v2755
    %v3716 = vpack.c.b16 %v2772, %v2756
    %v3717 = vpack.c.b16 %v2773, %v2757
    %v3718 = vpack.c.b16 %v2774, %v2758
    %v3719 = vpack.c.b16 %v2775, %v2759
    %v3720 = vpack.c.b16 %v2776, %v2760
    %v3721 = vpack.c.b16 %v2777, %v2761
    %v3722 = vpack.c.b16 %v2778, %v2762
    %v3723 = vpack.c.b16 %v2779, %v2763
    %v3724 = vpack.c.b16 %v2780, %v2764
    %v3725 = vpack.c.b16 %v2781, %v2765
    %v3726 = vpack.c.b16 %v2782, %v2766
    %v3727 = vpack.c.b16 %v2783, %v2767
    %v3728 = vpack.c.b16 %v2784, %v2768
    %v3729 = vpack.c.b16 %v2785, %v2769
    %v3730 = vpack.c.b16 %v2786, %v2770
    %v3731 = vpack.c.b16 %v2803, %v2787
    %v3732 = vpack.c.b16 %v2804, %v2788
    %v3733 = vpack.c.b16 %v2805, %v2789
    %v3734 = vpack.c.b16 %v2806, %v2790
    %v3735 = vpack.c.b16 %v2807, %v2791
    %v3736 = vpack.c.b16 %v2808, %v2792
    %v3737 = vpack.c.b16 %v2809, %v2793
    %v3738 = vpack.c.b16 %v2810, %v2794
    %v3739 = vpack.c.b16 %v2811, %v2795
    %v3740 = vpack.c.b16 %v2812, %v2796
    %v3741 = vpack.c.b16 %v2813, %v2797
    %v3742 = vpack.c.b16 %v2814, %v2798
    %v3743 = vpack.c.b16 %v2815, %v2799
    %v3744 = vpack.c.b16 %v2816, %v2800
    %v3745 = vpack.c.b16 %v2817, %v2801
    %v3746 = vpack.c.b16 %v2818, %v2802
    %v3747 = vpack.c.b16 %v2835, %v2819
    %v3748 = vpack.c.b16 %v2836, %v2820
    %v3749 = vpack.c.b16 %v2837, %v2821
    %v3750 = vpack.c.b16 %v2838, %v2822
    %v3751 = vpack.c.b16 %v2839, %v2823
    %v3752 = vpack.c.b16 %v2840, %v2824
    %v3753 = vpack.c.b16 %v2841, %v2825
    %v3754 = vpack.c.b16 %v2842, %v2826
    %v3755 = vpack.c.b16 %v2843, %v2827
    %v3756 = vpack.c.b16 %v2844, %v2828
    %v3757 = vpack.c.b16 %v2845, %v2829
    %v3758 = vpack.c.b16 %v2846, %v2830
    %v3759 = vpack.c.b16 %v2847, %v2831
    %v3760 = vpack.c.b16 %v2848, %v2832
    %v3761 = vpack.c.b16 %v2849, %v2833
    %v3762 = vpack.c.b16 %v2850, %v2834
    %v3763 = vpack.c.b16 %v2867, %v2851
    %v3764 = vpack.c.b16 %v2868, %v2852
    %v3765 = vpack.c.b16 %v2869, %v2853
    %v3766 = vpack.c.b16 %v2870, %v2854
    %v3767 = vpack.c.b16 %v2871, %v2855
    %v3768 = vpack.c.b16 %v2872, %v2856
    %v3769 = vpack.c.b16 %v2873, %v2857
    %v3770 = vpack.c.b16 %v2874, %v2858
    %v3771 = vpack.c.b16 %v2875, %v2859
    %v3772 = vpack.c.b16 %v2876, %v2860
    %v3773 = vpack.c.b16 %v2877, %v2861
    %v3774 = vpack.c.b16 %v2878, %v2862
    %v3775 = vpack.c.b16 %v2879, %v2863
    %v3776 = vpack.c.b16 %v2880, %v2864
    %v3777 = vpack.c.b16 %v2881, %v2865
    %v3778 = vpack.c.b16 %v2882, %v2866
    %v3779 = vpack.c.b16 %v2899, %v2883
    %v3780 = vpack.c.b16 %v2900, %v2884
    %v3781 = vpack.c.b16 %v2901, %v2885
    %v3782 = vpack.c.b16 %v2902, %v2886
    %v3783 = vpack.c.b16 %v2903, %v2887
    %v3784 = vpack.c.b16 %v2904, %v2888
    %v3785 = vpack.c.b16 %v2905, %v2889
    %v3786 = vpack.c.b16 %v2906, %v2890
    %v3787 = vpack.c.b16 %v2907, %v2891
    %v3788 = vpack.c.b16 %v2908, %v2892
    %v3789 = vpack.c.b16 %v2909, %v2893
    %v3790 = vpack.c.b16 %v2910, %v2894
    %v3791 = vpack.c.b16 %v2911, %v2895
    %v3792 = vpack.c.b16 %v2912, %v2896
    %v3793 = vpack.c.b16 %v2913, %v2897
    %v3794 = vpack.c.b16 %v2914, %v2898
    %v3795 = vpack.c.b16 %v2931, %v2915
    %v3796 = vpack.c.b16 %v2932, %v2916
    %v3797 = vpack.c.b16 %v2933, %v2917
    %v3798 = vpack.c.b16 %v2934, %v2918
    %v3799 = vpack.c.b16 %v2935, %v2919
    %v3800 = vpack.c.b16 %v2936, %v2920
    %v3801 = vpack.c.b16 %v2937, %v2921
    %v3802 = vpack.c.b16 %v2938, %v2922
    %v3803 = vpack.c.b16 %v2939, %v2923
    %v3804 = vpack.c.b16 %v2940, %v2924
    %v3805 = vpack.c.b16 %v2941, %v2925
    %v3806 = vpack.c.b16 %v2942, %v2926
    %v3807 = vpack.c.b16 %v2943, %v2927
    %v3808 = vpack.c.b16 %v2944, %v2928
    %v3809 = vpack.c.b16 %v2945, %v2929
    %v3810 = vpack.c.b16 %v2946, %v2930
    %v3811 = vpack.c.b16 %v2963, %v2947
    %v3812 = vpack.c.b16 %v2964, %v2948
    %v3813 = vpack.c.b16 %v2965, %v2949
    %v3814 = vpack.c.b16 %v2966, %v2950
    %v3815 = vpack.c.b16 %v2967, %v2951
    %v3816 = vpack.c.b16 %v2968, %v2952
    %v3817 = vpack.c.b16 %v2969, %v2953
    %v3818 = vpack.c.b16 %v2970, %v2954
    %v3819 = vpack.c.b16 %v2971, %v2955
    %v3820 = vpack.c.b16 %v2972, %v2956
    %v3821 = vpack.c.b16 %v2973, %v2957
    %v3822 = vpack.c.b16 %v2974, %v2958
    %v3823 = vpack.c.b16 %v2975, %v2959
    %v3824 = vpack.c.b16 %v2976, %v2960
    %v3825 = vpack.c.b16 %v2977, %v2961
    %v3826 = vpack.c.b16 %v2978, %v2962
    %v3827 = vpack.c.b16 %v2995, %v2979
    %v3828 = vpack.c.b16 %v2996, %v2980
    %v3829 = vpack.c.b16 %v2997, %v2981
    %v3830 = vpack.c.b16 %v2998, %v2982
    %v3831 = vpack.c.b16 %v2999, %v2983
    %v3832 = vpack.c.b16 %v3000, %v2984
    %v3833 = vpack.c.b16 %v3001, %v2985
    %v3834 = vpack.c.b16 %v3002, %v2986
    %v3835 = vpack.c.b16 %v3003, %v2987
    %v3836 = vpack.c.b16 %v3004, %v2988
    %v3837 = vpack.c.b16 %v3005, %v2989
    %v3838 = vpack.c.b16 %v3006, %v2990
    %v3839 = vpack.c.b16 %v3007, %v2991
    %v3840 = vpack.c.b16 %v3008, %v2992
    %v3841 = vpack.c.b16 %v3009, %v2993
    %v3842 = vpack.c.b16 %v3010, %v2994
    %v3843 = vpack.c.b16 %v3027, %v3011
    %v3844 = vpack.c.b16 %v3028, %v3012
    %v3845 = vpack.c.b16 %v3029, %v3013
    %v3846 = vpack.c.b16 %v3030, %v3014
    %v3847 = vpack.c.b16 %v3031, %v3015
    %v3848 = vpack.c.b16 %v3032, %v3016
    %v3849 = vpack.c.b16 %v3033, %v3017
    %v3850 = vpack.c.b16 %v3034, %v3018
    %v3851 = vpack.c.b16 %v3035, %v3019
    %v3852 = vpack.c.b16 %v3036, %v3020
    %v3853 = vpack.c.b16 %v3037, %v3021
    %v3854 = vpack.c.b16 %v3038, %v3022
    %v3855 = vpack.c.b16 %v3039, %v3023
    %v3856 = vpack.c.b16 %v3040, %v3024
    %v3857 = vpack.c.b16 %v3041, %v3025
    %v3858 = vpack.c.b16 %v3042, %v3026
    %v3859 = vpack.c.b16 %v3059, %v3043
    %v3860 = vpack.c.b16 %v3060, %v3044
    %v3861 = vpack.c.b16 %v3061, %v3045
    %v3862 = vpack.c.b16 %v3062, %v3046
    %v3863 = vpack.c.b16 %v3063, %v3047
    %v3864 = vpack.c.b16 %v3064, %v3048
    %v3865 = vpack.c.b16 %v3065, %v3049
    %v3866 = vpack.c.b16 %v3066, %v3050
    %v3867 = vpack.c.b16 %v3067, %v3051
    %v3868 = vpack.c.b16 %v3068, %v3052
    %v3869 = vpack.c.b16 %v3069, %v3053
    %v3870 = vpack.c.b16 %v3070, %v3054
    %v3871 = vpack.c.b16 %v3071, %v3055
    %v3872 = vpack.c.b16 %v3072, %v3056
    %v3873 = vpack.c.b16 %v3073, %v3057
    %v3874 = vpack.c.b16 %v3074, %v3058
    %v3875 = vpack.c.b16 %v3091, %v3075
    %v3876 = vpack.c.b16 %v3092, %v3076
    %v3877 = vpack.c.b16 %v3093, %v3077
    %v3878 = vpack.c.b16 %v3094, %v3078
    %v3879 = vpack.c.b16 %v3095, %v3079
    %v3880 = vpack.c.b16 %v3096, %v3080
    %v3881 = vpack.c.b16 %v3097, %v3081
    %v3882 = vpack.c.b16 %v3098, %v3082
    %v3883 = vpack.c.b16 %v3099, %v3083
    %v3884 = vpack.c.b16 %v3100, %v3084
    %v3885 = vpack.c.b16 %v3101, %v3085
    %v3886 = vpack.c.b16 %v3102, %v3086
    %v3887 = vpack.c.b16 %v3103, %v3087
    %v3888 = vpack.c.b16 %v3104, %v3088
    %v3889 = vpack.c.b16 %v3105, %v3089
    %v3890 = vpack.c.b16 %v3106, %v3090
    %v3891 = vpack.c.b16 %v3123, %v3107
    %v3892 = vpack.c.b16 %v3124, %v3108
    %v3893 = vpack.c.b16 %v3125, %v3109
    %v3894 = vpack.c.b16 %v3126, %v3110
    %v3895 = vpack.c.b16 %v3127, %v3111
    %v3896 = vpack.c.b16 %v3128, %v3112
    %v3897 = vpack.c.b16 %v3129, %v3113
    %v3898 = vpack.c.b16 %v3130, %v3114
    %v3899 = vpack.c.b16 %v3131, %v3115
    %v3900 = vpack.c.b16 %v3132, %v3116
    %v3901 = vpack.c.b16 %v3133, %v3117
    %v3902 = vpack.c.b16 %v3134, %v3118
    %v3903 = vpack.c.b16 %v3135, %v3119
    %v3904 = vpack.c.b16 %v3136, %v3120
    %v3905 = vpack.c.b16 %v3137, %v3121
    %v3906 = vpack.c.b16 %v3138, %v3122
    %v3907 = vpack.c.b16 %v3155, %v3139
    %v3908 = vpack.c.b16 %v3156, %v3140
    %v3909 = vpack.c.b16 %v3157, %v3141
    %v3910 = vpack.c.b16 %v3158, %v3142
    %v3911 = vpack.c.b16 %v3159, %v3143
    %v3912 = vpack.c.b16 %v3160, %v3144
    %v3913 = vpack.c.b16 %v3161, %v3145
    %v3914 = vpack.c.b16 %v3162, %v3146
    %v3915 = vpack.c.b16 %v3163, %v3147
    %v3916 = vpack.c.b16 %v3164, %v3148
    %v3917 = vpack.c.b16 %v3165, %v3149
    %v3918 = vpack.c.b16 %v3166, %v3150
    %v3919 = vpack.c.b16 %v3167, %v3151
    %v3920 = vpack.c.b16 %v3168, %v3152
    %v3921 = vpack.c.b16 %v3169, %v3153
    %v3922 = vpack.c.b16 %v3170, %v3154
    %v3923 = vpack.c.b16 %v3187, %v3171
    %v3924 = vpack.c.b16 %v3188, %v3172
    %v3925 = vpack.c.b16 %v3189, %v3173
    %v3926 = vpack.c.b16 %v3190, %v3174
    %v3927 = vpack.c.b16 %v3191, %v3175
    %v3928 = vpack.c.b16 %v3192, %v3176
    %v3929 = vpack.c.b16 %v3193, %v3177
    %v3930 = vpack.c.b16 %v3194, %v3178
    %v3931 = vpack.c.b16 %v3195, %v3179
    %v3932 = vpack.c.b16 %v3196, %v3180
    %v3933 = vpack.c.b16 %v3197, %v3181
    %v3934 = vpack.c.b16 %v3198, %v3182
    %v3935 = vpack.c.b16 %v3199, %v3183
    %v3936 = vpack.c.b16 %v3200, %v3184
    %v3937 = vpack.c.b16 %v3201, %v3185
    %v3938 = vpack.c.b16 %v3202, %v3186
    %v3939 = vpack.c.b16 %v3219, %v3203
    %v3940 = vpack.c.b16 %v3220, %v3204
    %v3941 = vpack.c.b16 %v3221, %v3205
    %v3942 = vpack.c.b16 %v3222, %v3206
    %v3943 = vpack.c.b16 %v3223, %v3207
    %v3944 = vpack.c.b16 %v3224, %v3208
    %v3945 = vpack.c.b16 %v3225, %v3209
    %v3946 = vpack.c.b16 %v3226, %v3210
    %v3947 = vpack.c.b16 %v3227, %v3211
    %v3948 = vpack.c.b16 %v3228, %v3212
    %v3949 = vpack.c.b16 %v3229, %v3213
    %v3950 = vpack.c.b16 %v3230, %v3214
    %v3951 = vpack.c.b16 %v3231, %v3215
    %v3952 = vpack.c.b16 %v3232, %v3216
    %v3953 = vpack.c.b16 %v3233, %v3217
    %v3954 = vpack.c.b16 %v3234, %v3218
    %v3955 = vpack.c.b16 %v3251, %v3235
    %v3956 = vpack.c.b16 %v3252, %v3236
    %v3957 = vpack.c.b16 %v3253, %v3237
    %v3958 = vpack.c.b16 %v3254, %v3238
    %v3959 = vpack.c.b16 %v3255, %v3239
    %v3960 = vpack.c.b16 %v3256, %v3240
    %v3961 = vpack.c.b16 %v3257, %v3241
    %v3962 = vpack.c.b16 %v3258, %v3242
    %v3963 = vpack.c.b16 %v3259, %v3243
    %v3964 = vpack.c.b16 %v3260, %v3244
    %v3965 = vpack.c.b16 %v3261, %v3245
    %v3966 = vpack.c.b16 %v3262, %v3246
    %v3967 = vpack.c.b16 %v3263, %v3247
    %v3968 = vpack.c.b16 %v3264, %v3248
    %v3969 = vpack.c.b16 %v3265, %v3249
    %v3970 = vpack.c.b16 %v3266, %v3250
    %v3971 = vpack.c.b16 %v3283, %v3267
    %v3972 = vpack.c.b16 %v3284, %v3268
    %v3973 = vpack.c.b16 %v3285, %v3269
    %v3974 = vpack.c.b16 %v3286, %v3270
    %v3975 = vpack.c.b16 %v3287, %v3271
    %v3976 = vpack.c.b16 %v3288, %v3272
    %v3977 = vpack.c.b16 %v3289, %v3273
    %v3978 = vpack.c.b16 %v3290, %v3274
    %v3979 = vpack.c.b16 %v3291, %v3275
    %v3980 = vpack.c.b16 %v3292, %v3276
    %v3981 = vpack.c.b16 %v3293, %v3277
    %v3982 = vpack.c.b16 %v3294, %v3278
    %v3983 = vpack.c.b16 %v3295, %v3279
    %v3984 = vpack.c.b16 %v3296, %v3280
    %v3985 = vpack.c.b16 %v3297, %v3281
    %v3986 = vpack.c.b16 %v3298, %v3282
    %v3987 = vpack.c.b16 %v3315, %v3299
    %v3988 = vpack.c.b16 %v3316, %v3300
    %v3989 = vpack.c.b16 %v3317, %v3301
    %v3990 = vpack.c.b16 %v3318, %v3302
    %v3991 = vpack.c.b16 %v3319, %v3303
    %v3992 = vpack.c.b16 %v3320, %v3304
    %v3993 = vpack.c.b16 %v3321, %v3305
    %v3994 = vpack.c.b16 %v3322, %v3306
    %v3995 = vpack.c.b16 %v3323, %v3307
    %v3996 = vpack.c.b16 %v3324, %v3308
    %v3997 = vpack.c.b16 %v3325, %v3309
    %v3998 = vpack.c.b16 %v3326, %v3310
    %v3999 = vpack.c.b16 %v3327, %v3311
    %v4000 = vpack.c.b16 %v3328, %v3312
    %v4001 = vpack.c.b16 %v3329, %v3313
    %v4002 = vpack.c.b16 %v3330, %v3314
    %v4003 = vpack.c.b16 %v3347, %v3331
    %v4004 = vpack.c.b16 %v3348, %v3332
    %v4005 = vpack.c.b16 %v3349, %v3333
    %v4006 = vpack.c.b16 %v3350, %v3334
    %v4007 = vpack.c.b16 %v3351, %v3335
    %v4008 = vpack.c.b16 %v3352, %v3336
    %v4009 = vpack.c.b16 %v3353, %v3337
    %v4010 = vpack.c.b16 %v3354, %v3338
    %v4011 = vpack.c.b16 %v3355, %v3339
    %v4012 = vpack.c.b16 %v3356, %v3340
    %v4013 = vpack.c.b16 %v3357, %v3341
    %v4014 = vpack.c.b16 %v3358, %v3342
    %v4015 = vpack.c.b16 %v3359, %v3343
    %v4016 = vpack.c.b16 %v3360, %v3344
    %v4017 = vpack.c.b16 %v3361, %v3345
    %v4018 = vpack.c.b16 %v3362, %v3346
    %v4019 = vpack.c.b16 %v3379, %v3363
    %v4020 = vpack.c.b16 %v3380, %v3364
    %v4021 = vpack.c.b16 %v3381, %v3365
    %v4022 = vpack.c.b16 %v3382, %v3366
    %v4023 = vpack.c.b16 %v3383, %v3367
    %v4024 = vpack.c.b16 %v3384, %v3368
    %v4025 = vpack.c.b16 %v3385, %v3369
    %v4026 = vpack.c.b16 %v3386, %v3370
    %v4027 = vpack.c.b16 %v3387, %v3371
    %v4028 = vpack.c.b16 %v3388, %v3372
    %v4029 = vpack.c.b16 %v3389, %v3373
    %v4030 = vpack.c.b16 %v3390, %v3374
    %v4031 = vpack.c.b16 %v3391, %v3375
    %v4032 = vpack.c.b16 %v3392, %v3376
    %v4033 = vpack.c.b16 %v3393, %v3377
    %v4034 = vpack.c.b16 %v3394, %v3378
    %v4035 = vpack.c.b16 %v3411, %v3395
    %v4036 = vpack.c.b16 %v3412, %v3396
    %v4037 = vpack.c.b16 %v3413, %v3397
    %v4038 = vpack.c.b16 %v3414, %v3398
    %v4039 = vpack.c.b16 %v3415, %v3399
    %v4040 = vpack.c.b16 %v3416, %v3400
    %v4041 = vpack.c.b16 %v3417, %v3401
    %v4042 = vpack.c.b16 %v3418, %v3402
    %v4043 = vpack.c.b16 %v3419, %v3403
    %v4044 = vpack.c.b16 %v3420, %v3404
    %v4045 = vpack.c.b16 %v3421, %v3405
    %v4046 = vpack.c.b16 %v3422, %v3406
    %v4047 = vpack.c.b16 %v3423, %v3407
    %v4048 = vpack.c.b16 %v3424, %v3408
    %v4049 = vpack.c.b16 %v3425, %v3409
    %v4050 = vpack.c.b16 %v3426, %v3410
    %v4051 = vpack.c.b16 %v3443, %v3427
    %v4052 = vpack.c.b16 %v3444, %v3428
    %v4053 = vpack.c.b16 %v3445, %v3429
    %v4054 = vpack.c.b16 %v3446, %v3430
    %v4055 = vpack.c.b16 %v3447, %v3431
    %v4056 = vpack.c.b16 %v3448, %v3432
    %v4057 = vpack.c.b16 %v3449, %v3433
    %v4058 = vpack.c.b16 %v3450, %v3434
    %v4059 = vpack.c.b16 %v3451, %v3435
    %v4060 = vpack.c.b16 %v3452, %v3436
    %v4061 = vpack.c.b16 %v3453, %v3437
    %v4062 = vpack.c.b16 %v3454, %v3438
    %v4063 = vpack.c.b16 %v3455, %v3439
    %v4064 = vpack.c.b16 %v3456, %v3440
    %v4065 = vpack.c.b16 %v3457, %v3441
    %v4066 = vpack.c.b16 %v3458, %v3442
    %v4067 = vpack.c.b16 %v3475, %v3459
    %v4068 = vpack.c.b16 %v3476, %v3460
    %v4069 = vpack.c.b16 %v3477, %v3461
    %v4070 = vpack.c.b16 %v3478, %v3462
    %v4071 = vpack.c.b16 %v3479, %v3463
    %v4072 = vpack.c.b16 %v3480, %v3464
    %v4073 = vpack.c.b16 %v3481, %v3465
    %v4074 = vpack.c.b16 %v3482, %v3466
    %v4075 = vpack.c.b16 %v3483, %v3467
    %v4076 = vpack.c.b16 %v3484, %v3468
    %v4077 = vpack.c.b16 %v3485, %v3469
    %v4078 = vpack.c.b16 %v3486, %v3470
    %v4079 = vpack.c.b16 %v3487, %v3471
    %v4080 = vpack.c.b16 %v3488, %v3472
    %v4081 = vpack.c.b16 %v3489, %v3473
    %v4082 = vpack.c.b16 %v3490, %v3474
    %v4083 = vpack.c.b16 %v3507, %v3491
    %v4084 = vpack.c.b16 %v3508, %v3492
    %v4085 = vpack.c.b16 %v3509, %v3493
    %v4086 = vpack.c.b16 %v3510, %v3494
    %v4087 = vpack.c.b16 %v3511, %v3495
    %v4088 = vpack.c.b16 %v3512, %v3496
    %v4089 = vpack.c.b16 %v3513, %v3497
    %v4090 = vpack.c.b16 %v3514, %v3498
    %v4091 = vpack.c.b16 %v3515, %v3499
    %v4092 = vpack.c.b16 %v3516, %v3500
    %v4093 = vpack.c.b16 %v3517, %v3501
    %v4094 = vpack.c.b16 %v3518, %v3502
    %v4095 = vpack.c.b16 %v3519, %v3503
    %v4096 = vpack.c.b16 %v3520, %v3504
    %v4097 = vpack.c.b16 %v3521, %v3505
    %v4098 = vpack.c.b16 %v3522, %v3506
    %v4099 = vpack.c.b16 %v3539, %v3523
    %v4100 = vpack.c.b16 %v3540, %v3524
    %v4101 = vpack.c.b16 %v3541, %v3525
    %v4102 = vpack.c.b16 %v3542, %v3526
    %v4103 = vpack.c.b16 %v3543, %v3527
    %v4104 = vpack.c.b16 %v3544, %v3528
    %v4105 = vpack.c.b16 %v3545, %v3529
    %v4106 = vpack.c.b16 %v3546, %v3530
    %v4107 = vpack.c.b16 %v3547, %v3531
    %v4108 = vpack.c.b16 %v3548, %v3532
    %v4109 = vpack.c.b16 %v3549, %v3533
    %v4110 = vpack.c.b16 %v3550, %v3534
    %v4111 = vpack.c.b16 %v3551, %v3535
    %v4112 = vpack.c.b16 %v3552, %v3536
    %v4113 = vpack.c.b16 %v3553, %v3537
    %v4114 = vpack.c.b16 %v3554, %v3538
    %v4115 = vpack.c.b16 %v3571, %v3555
    %v4116 = vpack.c.b16 %v3572, %v3556
    %v4117 = vpack.c.b16 %v3573, %v3557
    %v4118 = vpack.c.b16 %v3574, %v3558
    %v4119 = vpack.c.b16 %v3575, %v3559
    %v4120 = vpack.c.b16 %v3576, %v3560
    %v4121 = vpack.c.b16 %v3577, %v3561
    %v4122 = vpack.c.b16 %v3578, %v3562
    %v4123 = vpack.c.b16 %v3579, %v3563
    %v4124 = vpack.c.b16 %v3580, %v3564
    %v4125 = vpack.c.b16 %v3581, %v3565
    %v4126 = vpack.c.b16 %v3582, %v3566
    %v4127 = vpack.c.b16 %v3583, %v3567
    %v4128 = vpack.c.b16 %v3584, %v3568
    %v4129 = vpack.c.b16 %v3585, %v3569
    %v4130 = vpack.c.b16 %v3586, %v3570
    %v4131 = vpack.c.b16 %v3603, %v3587
    %v4132 = vpack.c.b16 %v3604, %v3588
    %v4133 = vpack.c.b16 %v3605, %v3589
    %v4134 = vpack.c.b16 %v3606, %v3590
    %v4135 = vpack.c.b16 %v3607, %v3591
    %v4136 = vpack.c.b16 %v3608, %v3592
    %v4137 = vpack.c.b16 %v3609, %v3593
    %v4138 = vpack.c.b16 %v3610, %v3594
    %v4139 = vpack.c.b16 %v3611, %v3595
    %v4140 = vpack.c.b16 %v3612, %v3596
    %v4141 = vpack.c.b16 %v3613, %v3597
    %v4142 = vpack.c.b16 %v3614, %v3598
    %v4143 = vpack.c.b16 %v3615, %v3599
    %v4144 = vpack.c.b16 %v3616, %v3600
    %v4145 = vpack.c.b16 %v3617, %v3601
    %v4146 = vpack.c.b16 %v3618, %v3602
    %v4147 = vpack.c.b16 %v3635, %v3619
    %v4148 = vpack.c.b16 %v3636, %v3620
    %v4149 = vpack.c.b16 %v3637, %v3621
    %v4150 = vpack.c.b16 %v3638, %v3622
    %v4151 = vpack.c.b16 %v3639, %v3623
    %v4152 = vpack.c.b16 %v3640, %v3624
    %v4153 = vpack.c.b16 %v3641, %v3625
    %v4154 = vpack.c.b16 %v3642, %v3626
    %v4155 = vpack.c.b16 %v3643, %v3627
    %v4156 = vpack.c.b16 %v3644, %v3628
    %v4157 = vpack.c.b16 %v3645, %v3629
    %v4158 = vpack.c.b16 %v3646, %v3630
    %v4159 = vpack.c.b16 %v3647, %v3631
    %v4160 = vpack.c.b16 %v3648, %v3632
    %v4161 = vpack.c.b16 %v3649, %v3633
    %v4162 = vpack.c.b16 %v3650, %v3634
    %4675 = vmatprep.subr.bf16.mxu0 %v3652
    %4676 = vmatpush1.bf16.msra.mxu0 %v3651
    %4677 = vmatprep.subr.bf16.mxu0 %v3668
    %4678 = vmatpush1.bf16.msra.mxu0 %v3667
    %4679 = vmatprep.subr.bf16.mxu0 %v3684
    %4680 = vmatpush1.bf16.msra.mxu0 %v3683
    %4681 = vmatprep.subr.bf16.mxu0 %v3700
    %4682 = vmatpush1.bf16.msra.mxu0 %v3699
    %4683 = vmatprep.subr.bf16.mxu0 %v3716
    %4684 = vmatpush1.bf16.msra.mxu0 %v3715
    %4685 = vmatprep.subr.bf16.mxu0 %v3732
    %4686 = vmatpush1.bf16.msra.mxu0 %v3731
    %4687 = vmatprep.subr.bf16.mxu0 %v3748
    %4688 = vmatpush1.bf16.msra.mxu0 %v3747
    %4689 = vmatprep.subr.bf16.mxu0 %v3764
    %4690 = vmatpush1.bf16.msra.mxu0 %v3763
    %4691 = vmatprep.subr.bf16.mxu0 %v3780
    %4692 = vmatpush1.bf16.msra.mxu0 %v3779
    %4693 = vmatprep.subr.bf16.mxu0 %v3796
    %4694 = vmatpush1.bf16.msra.mxu0 %v3795
    %4695 = vmatprep.subr.bf16.mxu0 %v3812
    %4696 = vmatpush1.bf16.msra.mxu0 %v3811
    %4697 = vmatprep.subr.bf16.mxu0 %v3828
    %4698 = vmatpush1.bf16.msra.mxu0 %v3827
    %4699 = vmatprep.subr.bf16.mxu0 %v3844
    %4700 = vmatpush1.bf16.msra.mxu0 %v3843
    %4701 = vmatprep.subr.bf16.mxu0 %v3860
    %4702 = vmatpush1.bf16.msra.mxu0 %v3859
    %4703 = vmatprep.subr.bf16.mxu0 %v3876
    %4704 = vmatpush1.bf16.msra.mxu0 %v3875
    %4705 = vmatprep.subr.bf16.mxu0 %v3892
    %4706 = vmatpush1.bf16.msra.mxu0 %v3891
    %4707 = vmatprep.mubr.bf16.mxu0 %v2108
    %4708 = vmatmul.mubr.bf16.gmra.mrb[0].mxu0 %v2107
    %v4709 = vpop.f32.mrb[0].mxu0
    %v4710 = vadd.f32 %v1169, %v4709
    %v4711 = vpop.f32.mrb[0].mxu0
    %v4712 = vadd.f32 %v1173, %v4711
    %v4713 = vpop.f32.mrb[0].mxu0
    %v4714 = vpop.f32.mrb[0].mxu0
    %4715 = vdwg.mxu0
    %4716 = vmatprep.subr.bf16.mxu0 %v3908
    %4717 = vmatpush1.bf16.msra.mxu0 %v3907
    %4718 = vmatprep.subr.bf16.mxu0 %v3924
    %4719 = vmatpush1.bf16.msra.mxu0 %v3923
    %4720 = vmatprep.subr.bf16.mxu0 %v3940
    %4721 = vmatpush1.bf16.msra.mxu0 %v3939
    %4722 = vmatprep.subr.bf16.mxu0 %v3956
    %4723 = vmatpush1.bf16.msra.mxu0 %v3955
    %4724 = vmatprep.subr.bf16.mxu0 %v3972
    %4725 = vmatpush1.bf16.msra.mxu0 %v3971
    %4726 = vmatprep.subr.bf16.mxu0 %v3988
    %4727 = vmatpush1.bf16.msra.mxu0 %v3987
    %4728 = vmatprep.subr.bf16.mxu0 %v4004
    %4729 = vmatpush1.bf16.msra.mxu0 %v4003
    %4730 = vmatprep.subr.bf16.mxu0 %v4020
    %4731 = vmatpush1.bf16.msra.mxu0 %v4019
    %4732 = vmatprep.subr.bf16.mxu0 %v4036
    %4733 = vmatpush1.bf16.msra.mxu0 %v4035
    %4734 = vmatprep.subr.bf16.mxu0 %v4052
    %4735 = vmatpush1.bf16.msra.mxu0 %v4051
    %4736 = vmatprep.subr.bf16.mxu0 %v4068
    %4737 = vmatpush1.bf16.msra.mxu0 %v4067
    %4738 = vmatprep.subr.bf16.mxu0 %v4084
    %4739 = vmatpush1.bf16.msra.mxu0 %v4083
    %4740 = vmatprep.subr.bf16.mxu0 %v4100
    %4741 = vmatpush1.bf16.msra.mxu0 %v4099
    %4742 = vmatprep.subr.bf16.mxu0 %v4116
    %4743 = vmatpush1.bf16.msra.mxu0 %v4115
    %4744 = vmatprep.subr.bf16.mxu0 %v4132
    %4745 = vmatpush1.bf16.msra.mxu0 %v4131
    %4746 = vmatprep.subr.bf16.mxu0 %v4148
    %4747 = vmatpush1.bf16.msra.mxu0 %v4147
    %4748 = vmatprep.mubr.bf16.mxu0 %v2110
    %4749 = vmatmul.mubr.bf16.gmra.mrb[0].mxu0 %v2109
    %v4750 = vpop.f32.mrb[0].mxu0
    %v4751 = vadd.f32 %v4710, %v4750
    %v4752 = vpop.f32.mrb[0].mxu0
    %v4753 = vadd.f32 %v4712, %v4752
    %v4754 = vpop.f32.mrb[0].mxu0
    %v4755 = vpop.f32.mrb[0].mxu0
    %4756 = vdwg.mxu0
    %4757 = vmatprep.subr.bf16.mxu0 %v3654
    %4758 = vmatpush1.bf16.msra.mxu0 %v3653
    %4759 = vmatprep.subr.bf16.mxu0 %v3670
    %4760 = vmatpush1.bf16.msra.mxu0 %v3669
    %4761 = vmatprep.subr.bf16.mxu0 %v3686
    %4762 = vmatpush1.bf16.msra.mxu0 %v3685
    %4763 = vmatprep.subr.bf16.mxu0 %v3702
    %4764 = vmatpush1.bf16.msra.mxu0 %v3701
    %4765 = vmatprep.subr.bf16.mxu0 %v3718
    %4766 = vmatpush1.bf16.msra.mxu0 %v3717
    %4767 = vmatprep.subr.bf16.mxu0 %v3734
    %4768 = vmatpush1.bf16.msra.mxu0 %v3733
    %4769 = vmatprep.subr.bf16.mxu0 %v3750
    %4770 = vmatpush1.bf16.msra.mxu0 %v3749
    %4771 = vmatprep.subr.bf16.mxu0 %v3766
    %4772 = vmatpush1.bf16.msra.mxu0 %v3765
    %4773 = vmatprep.subr.bf16.mxu0 %v3782
    %4774 = vmatpush1.bf16.msra.mxu0 %v3781
    %4775 = vmatprep.subr.bf16.mxu0 %v3798
    %4776 = vmatpush1.bf16.msra.mxu0 %v3797
    %4777 = vmatprep.subr.bf16.mxu0 %v3814
    %4778 = vmatpush1.bf16.msra.mxu0 %v3813
    %4779 = vmatprep.subr.bf16.mxu0 %v3830
    %4780 = vmatpush1.bf16.msra.mxu0 %v3829
    %4781 = vmatprep.subr.bf16.mxu0 %v3846
    %4782 = vmatpush1.bf16.msra.mxu0 %v3845
    %4783 = vmatprep.subr.bf16.mxu0 %v3862
    %4784 = vmatpush1.bf16.msra.mxu0 %v3861
    %4785 = vmatprep.subr.bf16.mxu0 %v3878
    %4786 = vmatpush1.bf16.msra.mxu0 %v3877
    %4787 = vmatprep.subr.bf16.mxu0 %v3894
    %4788 = vmatpush1.bf16.msra.mxu0 %v3893
    %4789 = vmatprep.mubr.bf16.mxu0 %v2108
    %4790 = vmatmul.mubr.bf16.gmra.mrb[0].mxu0 %v2107
    %v4791 = vpop.f32.mrb[0].mxu0
    %v4792 = vadd.f32 %v1177, %v4791
    %v4793 = vpop.f32.mrb[0].mxu0
    %v4794 = vadd.f32 %v1181, %v4793
    %v4795 = vpop.f32.mrb[0].mxu0
    %v4796 = vpop.f32.mrb[0].mxu0
    %4797 = vdwg.mxu0
    %4798 = vmatprep.subr.bf16.mxu0 %v3910
    %4799 = vmatpush1.bf16.msra.mxu0 %v3909
    %4800 = vmatprep.subr.bf16.mxu0 %v3926
    %4801 = vmatpush1.bf16.msra.mxu0 %v3925
    %4802 = vmatprep.subr.bf16.mxu0 %v3942
    %4803 = vmatpush1.bf16.msra.mxu0 %v3941
    %4804 = vmatprep.subr.bf16.mxu0 %v3958
    %4805 = vmatpush1.bf16.msra.mxu0 %v3957
    %4806 = vmatprep.subr.bf16.mxu0 %v3974
    %4807 = vmatpush1.bf16.msra.mxu0 %v3973
    %4808 = vmatprep.subr.bf16.mxu0 %v3990
    %4809 = vmatpush1.bf16.msra.mxu0 %v3989
    %4810 = vmatprep.subr.bf16.mxu0 %v4006
    %4811 = vmatpush1.bf16.msra.mxu0 %v4005
    %4812 = vmatprep.subr.bf16.mxu0 %v4022
    %4813 = vmatpush1.bf16.msra.mxu0 %v4021
    %4814 = vmatprep.subr.bf16.mxu0 %v4038
    %4815 = vmatpush1.bf16.msra.mxu0 %v4037
    %4816 = vmatprep.subr.bf16.mxu0 %v4054
    %4817 = vmatpush1.bf16.msra.mxu0 %v4053
    %4818 = vmatprep.subr.bf16.mxu0 %v4070
    %4819 = vmatpush1.bf16.msra.mxu0 %v4069
    %4820 = vmatprep.subr.bf16.mxu0 %v4086
    %4821 = vmatpush1.bf16.msra.mxu0 %v4085
    %4822 = vmatprep.subr.bf16.mxu0 %v4102
    %4823 = vmatpush1.bf16.msra.mxu0 %v4101
    %4824 = vmatprep.subr.bf16.mxu0 %v4118
    %4825 = vmatpush1.bf16.msra.mxu0 %v4117
    %4826 = vmatprep.subr.bf16.mxu0 %v4134
    %4827 = vmatpush1.bf16.msra.mxu0 %v4133
    %4828 = vmatprep.subr.bf16.mxu0 %v4150
    %4829 = vmatpush1.bf16.msra.mxu0 %v4149
    %4830 = vmatprep.mubr.bf16.mxu0 %v2110
    %4831 = vmatmul.mubr.bf16.gmra.mrb[0].mxu0 %v2109
    %v4832 = vpop.f32.mrb[0].mxu0
    %v4833 = vadd.f32 %v4792, %v4832
    %v4834 = vpop.f32.mrb[0].mxu0
    %v4835 = vadd.f32 %v4794, %v4834
    %v4836 = vpop.f32.mrb[0].mxu0
    %v4837 = vpop.f32.mrb[0].mxu0
    %4838 = vdwg.mxu0
    %4839 = vmatprep.subr.bf16.mxu0 %v3656
    %4840 = vmatpush1.bf16.msra.mxu0 %v3655
    %4841 = vmatprep.subr.bf16.mxu0 %v3672
    %4842 = vmatpush1.bf16.msra.mxu0 %v3671
    %4843 = vmatprep.subr.bf16.mxu0 %v3688
    %4844 = vmatpush1.bf16.msra.mxu0 %v3687
    %4845 = vmatprep.subr.bf16.mxu0 %v3704
    %4846 = vmatpush1.bf16.msra.mxu0 %v3703
    %4847 = vmatprep.subr.bf16.mxu0 %v3720
    %4848 = vmatpush1.bf16.msra.mxu0 %v3719
    %4849 = vmatprep.subr.bf16.mxu0 %v3736
    %4850 = vmatpush1.bf16.msra.mxu0 %v3735
    %4851 = vmatprep.subr.bf16.mxu0 %v3752
    %4852 = vmatpush1.bf16.msra.mxu0 %v3751
    %4853 = vmatprep.subr.bf16.mxu0 %v3768
    %4854 = vmatpush1.bf16.msra.mxu0 %v3767
    %4855 = vmatprep.subr.bf16.mxu0 %v3784
    %4856 = vmatpush1.bf16.msra.mxu0 %v3783
    %4857 = vmatprep.subr.bf16.mxu0 %v3800
    %4858 = vmatpush1.bf16.msra.mxu0 %v3799
    %4859 = vmatprep.subr.bf16.mxu0 %v3816
    %4860 = vmatpush1.bf16.msra.mxu0 %v3815
    %4861 = vmatprep.subr.bf16.mxu0 %v3832
    %4862 = vmatpush1.bf16.msra.mxu0 %v3831
    %4863 = vmatprep.subr.bf16.mxu0 %v3848
    %4864 = vmatpush1.bf16.msra.mxu0 %v3847
    %4865 = vmatprep.subr.bf16.mxu0 %v3864
    %4866 = vmatpush1.bf16.msra.mxu0 %v3863
    %4867 = vmatprep.subr.bf16.mxu0 %v3880
    %4868 = vmatpush1.bf16.msra.mxu0 %v3879
    %4869 = vmatprep.subr.bf16.mxu0 %v3896
    %4870 = vmatpush1.bf16.msra.mxu0 %v3895
    %4871 = vmatprep.mubr.bf16.mxu0 %v2108
    %4872 = vmatmul.mubr.bf16.gmra.mrb[0].mxu0 %v2107
    %v4873 = vpop.f32.mrb[0].mxu0
    %v4874 = vadd.f32 %v1185, %v4873
    %v4875 = vpop.f32.mrb[0].mxu0
    %v4876 = vadd.f32 %v1189, %v4875
    %v4877 = vpop.f32.mrb[0].mxu0
    %v4878 = vpop.f32.mrb[0].mxu0
    %4879 = vdwg.mxu0
    %4880 = vmatprep.subr.bf16.mxu0 %v3912
    %4881 = vmatpush1.bf16.msra.mxu0 %v3911
    %4882 = vmatprep.subr.bf16.mxu0 %v3928
    %4883 = vmatpush1.bf16.msra.mxu0 %v3927
    %4884 = vmatprep.subr.bf16.mxu0 %v3944
    %4885 = vmatpush1.bf16.msra.mxu0 %v3943
    %4886 = vmatprep.subr.bf16.mxu0 %v3960
    %4887 = vmatpush1.bf16.msra.mxu0 %v3959
    %4888 = vmatprep.subr.bf16.mxu0 %v3976
    %4889 = vmatpush1.bf16.msra.mxu0 %v3975
    %4890 = vmatprep.subr.bf16.mxu0 %v3992
    %4891 = vmatpush1.bf16.msra.mxu0 %v3991
    %4892 = vmatprep.subr.bf16.mxu0 %v4008
    %4893 = vmatpush1.bf16.msra.mxu0 %v4007
    %4894 = vmatprep.subr.bf16.mxu0 %v4024
    %4895 = vmatpush1.bf16.msra.mxu0 %v4023
    %4896 = vmatprep.subr.bf16.mxu0 %v4040
    %4897 = vmatpush1.bf16.msra.mxu0 %v4039
    %4898 = vmatprep.subr.bf16.mxu0 %v4056
    %4899 = vmatpush1.bf16.msra.mxu0 %v4055
    %4900 = vmatprep.subr.bf16.mxu0 %v4072
    %4901 = vmatpush1.bf16.msra.mxu0 %v4071
    %4902 = vmatprep.subr.bf16.mxu0 %v4088
    %4903 = vmatpush1.bf16.msra.mxu0 %v4087
    %4904 = vmatprep.subr.bf16.mxu0 %v4104
    %4905 = vmatpush1.bf16.msra.mxu0 %v4103
    %4906 = vmatprep.subr.bf16.mxu0 %v4120
    %4907 = vmatpush1.bf16.msra.mxu0 %v4119
    %4908 = vmatprep.subr.bf16.mxu0 %v4136
    %4909 = vmatpush1.bf16.msra.mxu0 %v4135
    %4910 = vmatprep.subr.bf16.mxu0 %v4152
    %4911 = vmatpush1.bf16.msra.mxu0 %v4151
    %4912 = vmatprep.mubr.bf16.mxu0 %v2110
    %4913 = vmatmul.mubr.bf16.gmra.mrb[0].mxu0 %v2109
    %v4914 = vpop.f32.mrb[0].mxu0
    %v4915 = vadd.f32 %v4874, %v4914
    %v4916 = vpop.f32.mrb[0].mxu0
    %v4917 = vadd.f32 %v4876, %v4916
    %v4918 = vpop.f32.mrb[0].mxu0
    %v4919 = vpop.f32.mrb[0].mxu0
    %4920 = vdwg.mxu0
    %4921 = vmatprep.subr.bf16.mxu0 %v3658
    %4922 = vmatpush1.bf16.msra.mxu0 %v3657
    %4923 = vmatprep.subr.bf16.mxu0 %v3674
    %4924 = vmatpush1.bf16.msra.mxu0 %v3673
    %4925 = vmatprep.subr.bf16.mxu0 %v3690
    %4926 = vmatpush1.bf16.msra.mxu0 %v3689
    %4927 = vmatprep.subr.bf16.mxu0 %v3706
    %4928 = vmatpush1.bf16.msra.mxu0 %v3705
    %4929 = vmatprep.subr.bf16.mxu0 %v3722
    %4930 = vmatpush1.bf16.msra.mxu0 %v3721
    %4931 = vmatprep.subr.bf16.mxu0 %v3738
    %4932 = vmatpush1.bf16.msra.mxu0 %v3737
    %4933 = vmatprep.subr.bf16.mxu0 %v3754
    %4934 = vmatpush1.bf16.msra.mxu0 %v3753
    %4935 = vmatprep.subr.bf16.mxu0 %v3770
    %4936 = vmatpush1.bf16.msra.mxu0 %v3769
    %4937 = vmatprep.subr.bf16.mxu0 %v3786
    %4938 = vmatpush1.bf16.msra.mxu0 %v3785
    %4939 = vmatprep.subr.bf16.mxu0 %v3802
    %4940 = vmatpush1.bf16.msra.mxu0 %v3801
    %4941 = vmatprep.subr.bf16.mxu0 %v3818
    %4942 = vmatpush1.bf16.msra.mxu0 %v3817
    %4943 = vmatprep.subr.bf16.mxu0 %v3834
    %4944 = vmatpush1.bf16.msra.mxu0 %v3833
    %4945 = vmatprep.subr.bf16.mxu0 %v3850
    %4946 = vmatpush1.bf16.msra.mxu0 %v3849
    %4947 = vmatprep.subr.bf16.mxu0 %v3866
    %4948 = vmatpush1.bf16.msra.mxu0 %v3865
    %4949 = vmatprep.subr.bf16.mxu0 %v3882
    %4950 = vmatpush1.bf16.msra.mxu0 %v3881
    %4951 = vmatprep.subr.bf16.mxu0 %v3898
    %4952 = vmatpush1.bf16.msra.mxu0 %v3897
    %4953 = vmatprep.mubr.bf16.mxu0 %v2108
    %4954 = vmatmul.mubr.bf16.gmra.mrb[0].mxu0 %v2107
    %v4955 = vpop.f32.mrb[0].mxu0
    %v4956 = vadd.f32 %v1193, %v4955
    %v4957 = vpop.f32.mrb[0].mxu0
    %v4958 = vadd.f32 %v1197, %v4957
    %v4959 = vpop.f32.mrb[0].mxu0
    %v4960 = vpop.f32.mrb[0].mxu0
    %4961 = vdwg.mxu0
    %4962 = vmatprep.subr.bf16.mxu0 %v3914
    %4963 = vmatpush1.bf16.msra.mxu0 %v3913
    %4964 = vmatprep.subr.bf16.mxu0 %v3930
    %4965 = vmatpush1.bf16.msra.mxu0 %v3929
    %4966 = vmatprep.subr.bf16.mxu0 %v3946
    %4967 = vmatpush1.bf16.msra.mxu0 %v3945
    %4968 = vmatprep.subr.bf16.mxu0 %v3962
    %4969 = vmatpush1.bf16.msra.mxu0 %v3961
    %4970 = vmatprep.subr.bf16.mxu0 %v3978
    %4971 = vmatpush1.bf16.msra.mxu0 %v3977
    %4972 = vmatprep.subr.bf16.mxu0 %v3994
    %4973 = vmatpush1.bf16.msra.mxu0 %v3993
    %4974 = vmatprep.subr.bf16.mxu0 %v4010
    %4975 = vmatpush1.bf16.msra.mxu0 %v4009
    %4976 = vmatprep.subr.bf16.mxu0 %v4026
    %4977 = vmatpush1.bf16.msra.mxu0 %v4025
    %4978 = vmatprep.subr.bf16.mxu0 %v4042
    %4979 = vmatpush1.bf16.msra.mxu0 %v4041
    %4980 = vmatprep.subr.bf16.mxu0 %v4058
    %4981 = vmatpush1.bf16.msra.mxu0 %v4057
    %4982 = vmatprep.subr.bf16.mxu0 %v4074
    %4983 = vmatpush1.bf16.msra.mxu0 %v4073
    %4984 = vmatprep.subr.bf16.mxu0 %v4090
    %4985 = vmatpush1.bf16.msra.mxu0 %v4089
    %4986 = vmatprep.subr.bf16.mxu0 %v4106
    %4987 = vmatpush1.bf16.msra.mxu0 %v4105
    %4988 = vmatprep.subr.bf16.mxu0 %v4122
    %4989 = vmatpush1.bf16.msra.mxu0 %v4121
    %4990 = vmatprep.subr.bf16.mxu0 %v4138
    %4991 = vmatpush1.bf16.msra.mxu0 %v4137
    %4992 = vmatprep.subr.bf16.mxu0 %v4154
    %4993 = vmatpush1.bf16.msra.mxu0 %v4153
    %4994 = vmatprep.mubr.bf16.mxu0 %v2110
    %4995 = vmatmul.mubr.bf16.gmra.mrb[0].mxu0 %v2109
    %v4996 = vpop.f32.mrb[0].mxu0
    %v4997 = vadd.f32 %v4956, %v4996
    %v4998 = vpop.f32.mrb[0].mxu0
    %v4999 = vadd.f32 %v4958, %v4998
    %v5000 = vpop.f32.mrb[0].mxu0
    %v5001 = vpop.f32.mrb[0].mxu0
    %5002 = vdwg.mxu0
    %5003 = vmatprep.subr.bf16.mxu0 %v3660
    %5004 = vmatpush1.bf16.msra.mxu0 %v3659
    %5005 = vmatprep.subr.bf16.mxu0 %v3676
    %5006 = vmatpush1.bf16.msra.mxu0 %v3675
    %5007 = vmatprep.subr.bf16.mxu0 %v3692
    %5008 = vmatpush1.bf16.msra.mxu0 %v3691
    %5009 = vmatprep.subr.bf16.mxu0 %v3708
    %5010 = vmatpush1.bf16.msra.mxu0 %v3707
    %5011 = vmatprep.subr.bf16.mxu0 %v3724
    %5012 = vmatpush1.bf16.msra.mxu0 %v3723
    %5013 = vmatprep.subr.bf16.mxu0 %v3740
    %5014 = vmatpush1.bf16.msra.mxu0 %v3739
    %5015 = vmatprep.subr.bf16.mxu0 %v3756
    %5016 = vmatpush1.bf16.msra.mxu0 %v3755
    %5017 = vmatprep.subr.bf16.mxu0 %v3772
    %5018 = vmatpush1.bf16.msra.mxu0 %v3771
    %5019 = vmatprep.subr.bf16.mxu0 %v3788
    %5020 = vmatpush1.bf16.msra.mxu0 %v3787
    %5021 = vmatprep.subr.bf16.mxu0 %v3804
    %5022 = vmatpush1.bf16.msra.mxu0 %v3803
    %5023 = vmatprep.subr.bf16.mxu0 %v3820
    %5024 = vmatpush1.bf16.msra.mxu0 %v3819
    %5025 = vmatprep.subr.bf16.mxu0 %v3836
    %5026 = vmatpush1.bf16.msra.mxu0 %v3835
    %5027 = vmatprep.subr.bf16.mxu0 %v3852
    %5028 = vmatpush1.bf16.msra.mxu0 %v3851
    %5029 = vmatprep.subr.bf16.mxu0 %v3868
    %5030 = vmatpush1.bf16.msra.mxu0 %v3867
    %5031 = vmatprep.subr.bf16.mxu0 %v3884
    %5032 = vmatpush1.bf16.msra.mxu0 %v3883
    %5033 = vmatprep.subr.bf16.mxu0 %v3900
    %5034 = vmatpush1.bf16.msra.mxu0 %v3899
    %5035 = vmatprep.mubr.bf16.mxu0 %v2108
    %5036 = vmatmul.mubr.bf16.gmra.mrb[0].mxu0 %v2107
    %v5037 = vpop.f32.mrb[0].mxu0
    %v5038 = vadd.f32 %v1201, %v5037
    %v5039 = vpop.f32.mrb[0].mxu0
    %v5040 = vadd.f32 %v1205, %v5039
    %v5041 = vpop.f32.mrb[0].mxu0
    %v5042 = vpop.f32.mrb[0].mxu0
    %5043 = vdwg.mxu0
    %5044 = vmatprep.subr.bf16.mxu0 %v3916
    %5045 = vmatpush1.bf16.msra.mxu0 %v3915
    %5046 = vmatprep.subr.bf16.mxu0 %v3932
    %5047 = vmatpush1.bf16.msra.mxu0 %v3931
    %5048 = vmatprep.subr.bf16.mxu0 %v3948
    %5049 = vmatpush1.bf16.msra.mxu0 %v3947
    %5050 = vmatprep.subr.bf16.mxu0 %v3964
    %5051 = vmatpush1.bf16.msra.mxu0 %v3963
    %5052 = vmatprep.subr.bf16.mxu0 %v3980
    %5053 = vmatpush1.bf16.msra.mxu0 %v3979
    %5054 = vmatprep.subr.bf16.mxu0 %v3996
    %5055 = vmatpush1.bf16.msra.mxu0 %v3995
    %5056 = vmatprep.subr.bf16.mxu0 %v4012
    %5057 = vmatpush1.bf16.msra.mxu0 %v4011
    %5058 = vmatprep.subr.bf16.mxu0 %v4028
    %5059 = vmatpush1.bf16.msra.mxu0 %v4027
    %5060 = vmatprep.subr.bf16.mxu0 %v4044
    %5061 = vmatpush1.bf16.msra.mxu0 %v4043
    %5062 = vmatprep.subr.bf16.mxu0 %v4060
    %5063 = vmatpush1.bf16.msra.mxu0 %v4059
    %5064 = vmatprep.subr.bf16.mxu0 %v4076
    %5065 = vmatpush1.bf16.msra.mxu0 %v4075
    %5066 = vmatprep.subr.bf16.mxu0 %v4092
    %5067 = vmatpush1.bf16.msra.mxu0 %v4091
    %5068 = vmatprep.subr.bf16.mxu0 %v4108
    %5069 = vmatpush1.bf16.msra.mxu0 %v4107
    %5070 = vmatprep.subr.bf16.mxu0 %v4124
    %5071 = vmatpush1.bf16.msra.mxu0 %v4123
    %5072 = vmatprep.subr.bf16.mxu0 %v4140
    %5073 = vmatpush1.bf16.msra.mxu0 %v4139
    %5074 = vmatprep.subr.bf16.mxu0 %v4156
    %5075 = vmatpush1.bf16.msra.mxu0 %v4155
    %5076 = vmatprep.mubr.bf16.mxu0 %v2110
    %5077 = vmatmul.mubr.bf16.gmra.mrb[0].mxu0 %v2109
    %v5078 = vpop.f32.mrb[0].mxu0
    %v5079 = vadd.f32 %v5038, %v5078
    %v5080 = vpop.f32.mrb[0].mxu0
    %v5081 = vadd.f32 %v5040, %v5080
    %v5082 = vpop.f32.mrb[0].mxu0
    %v5083 = vpop.f32.mrb[0].mxu0
    %5084 = vdwg.mxu0
    %5085 = vmatprep.subr.bf16.mxu0 %v3662
    %5086 = vmatpush1.bf16.msra.mxu0 %v3661
    %5087 = vmatprep.subr.bf16.mxu0 %v3678
    %5088 = vmatpush1.bf16.msra.mxu0 %v3677
    %5089 = vmatprep.subr.bf16.mxu0 %v3694
    %5090 = vmatpush1.bf16.msra.mxu0 %v3693
    %5091 = vmatprep.subr.bf16.mxu0 %v3710
    %5092 = vmatpush1.bf16.msra.mxu0 %v3709
    %5093 = vmatprep.subr.bf16.mxu0 %v3726
    %5094 = vmatpush1.bf16.msra.mxu0 %v3725
    %5095 = vmatprep.subr.bf16.mxu0 %v3742
    %5096 = vmatpush1.bf16.msra.mxu0 %v3741
    %5097 = vmatprep.subr.bf16.mxu0 %v3758
    %5098 = vmatpush1.bf16.msra.mxu0 %v3757
    %5099 = vmatprep.subr.bf16.mxu0 %v3774
    %5100 = vmatpush1.bf16.msra.mxu0 %v3773
    %5101 = vmatprep.subr.bf16.mxu0 %v3790
    %5102 = vmatpush1.bf16.msra.mxu0 %v3789
    %5103 = vmatprep.subr.bf16.mxu0 %v3806
    %5104 = vmatpush1.bf16.msra.mxu0 %v3805
    %5105 = vmatprep.subr.bf16.mxu0 %v3822
    %5106 = vmatpush1.bf16.msra.mxu0 %v3821
    %5107 = vmatprep.subr.bf16.mxu0 %v3838
    %5108 = vmatpush1.bf16.msra.mxu0 %v3837
    %5109 = vmatprep.subr.bf16.mxu0 %v3854
    %5110 = vmatpush1.bf16.msra.mxu0 %v3853
    %5111 = vmatprep.subr.bf16.mxu0 %v3870
    %5112 = vmatpush1.bf16.msra.mxu0 %v3869
    %5113 = vmatprep.subr.bf16.mxu0 %v3886
    %5114 = vmatpush1.bf16.msra.mxu0 %v3885
    %5115 = vmatprep.subr.bf16.mxu0 %v3902
    %5116 = vmatpush1.bf16.msra.mxu0 %v3901
    %5117 = vmatprep.mubr.bf16.mxu0 %v2108
    %5118 = vmatmul.mubr.bf16.gmra.mrb[0].mxu0 %v2107
    %v5119 = vpop.f32.mrb[0].mxu0
    %v5120 = vadd.f32 %v1209, %v5119
    %v5121 = vpop.f32.mrb[0].mxu0
    %v5122 = vadd.f32 %v1213, %v5121
    %v5123 = vpop.f32.mrb[0].mxu0
    %v5124 = vpop.f32.mrb[0].mxu0
    %5125 = vdwg.mxu0
    %5126 = vmatprep.subr.bf16.mxu0 %v3918
    %5127 = vmatpush1.bf16.msra.mxu0 %v3917
    %5128 = vmatprep.subr.bf16.mxu0 %v3934
    %5129 = vmatpush1.bf16.msra.mxu0 %v3933
    %5130 = vmatprep.subr.bf16.mxu0 %v3950
    %5131 = vmatpush1.bf16.msra.mxu0 %v3949
    %5132 = vmatprep.subr.bf16.mxu0 %v3966
    %5133 = vmatpush1.bf16.msra.mxu0 %v3965
    %5134 = vmatprep.subr.bf16.mxu0 %v3982
    %5135 = vmatpush1.bf16.msra.mxu0 %v3981
    %5136 = vmatprep.subr.bf16.mxu0 %v3998
    %5137 = vmatpush1.bf16.msra.mxu0 %v3997
    %5138 = vmatprep.subr.bf16.mxu0 %v4014
    %5139 = vmatpush1.bf16.msra.mxu0 %v4013
    %5140 = vmatprep.subr.bf16.mxu0 %v4030
    %5141 = vmatpush1.bf16.msra.mxu0 %v4029
    %5142 = vmatprep.subr.bf16.mxu0 %v4046
    %5143 = vmatpush1.bf16.msra.mxu0 %v4045
    %5144 = vmatprep.subr.bf16.mxu0 %v4062
    %5145 = vmatpush1.bf16.msra.mxu0 %v4061
    %5146 = vmatprep.subr.bf16.mxu0 %v4078
    %5147 = vmatpush1.bf16.msra.mxu0 %v4077
    %5148 = vmatprep.subr.bf16.mxu0 %v4094
    %5149 = vmatpush1.bf16.msra.mxu0 %v4093
    %5150 = vmatprep.subr.bf16.mxu0 %v4110
    %5151 = vmatpush1.bf16.msra.mxu0 %v4109
    %5152 = vmatprep.subr.bf16.mxu0 %v4126
    %5153 = vmatpush1.bf16.msra.mxu0 %v4125
    %5154 = vmatprep.subr.bf16.mxu0 %v4142
    %5155 = vmatpush1.bf16.msra.mxu0 %v4141
    %5156 = vmatprep.subr.bf16.mxu0 %v4158
    %5157 = vmatpush1.bf16.msra.mxu0 %v4157
    %5158 = vmatprep.mubr.bf16.mxu0 %v2110
    %5159 = vmatmul.mubr.bf16.gmra.mrb[0].mxu0 %v2109
    %v5160 = vpop.f32.mrb[0].mxu0
    %v5161 = vadd.f32 %v5120, %v5160
    %v5162 = vpop.f32.mrb[0].mxu0
    %v5163 = vadd.f32 %v5122, %v5162
    %v5164 = vpop.f32.mrb[0].mxu0
    %v5165 = vpop.f32.mrb[0].mxu0
    %5166 = vdwg.mxu0
    %5167 = vmatprep.subr.bf16.mxu0 %v3664
    %5168 = vmatpush1.bf16.msra.mxu0 %v3663
    %5169 = vmatprep.subr.bf16.mxu0 %v3680
    %5170 = vmatpush1.bf16.msra.mxu0 %v3679
    %5171 = vmatprep.subr.bf16.mxu0 %v3696
    %5172 = vmatpush1.bf16.msra.mxu0 %v3695
    %5173 = vmatprep.subr.bf16.mxu0 %v3712
    %5174 = vmatpush1.bf16.msra.mxu0 %v3711
    %5175 = vmatprep.subr.bf16.mxu0 %v3728
    %5176 = vmatpush1.bf16.msra.mxu0 %v3727
    %5177 = vmatprep.subr.bf16.mxu0 %v3744
    %5178 = vmatpush1.bf16.msra.mxu0 %v3743
    %5179 = vmatprep.subr.bf16.mxu0 %v3760
    %5180 = vmatpush1.bf16.msra.mxu0 %v3759
    %5181 = vmatprep.subr.bf16.mxu0 %v3776
    %5182 = vmatpush1.bf16.msra.mxu0 %v3775
    %5183 = vmatprep.subr.bf16.mxu0 %v3792
    %5184 = vmatpush1.bf16.msra.mxu0 %v3791
    %5185 = vmatprep.subr.bf16.mxu0 %v3808
    %5186 = vmatpush1.bf16.msra.mxu0 %v3807
    %5187 = vmatprep.subr.bf16.mxu0 %v3824
    %5188 = vmatpush1.bf16.msra.mxu0 %v3823
    %5189 = vmatprep.subr.bf16.mxu0 %v3840
    %5190 = vmatpush1.bf16.msra.mxu0 %v3839
    %5191 = vmatprep.subr.bf16.mxu0 %v3856
    %5192 = vmatpush1.bf16.msra.mxu0 %v3855
    %5193 = vmatprep.subr.bf16.mxu0 %v3872
    %5194 = vmatpush1.bf16.msra.mxu0 %v3871
    %5195 = vmatprep.subr.bf16.mxu0 %v3888
    %5196 = vmatpush1.bf16.msra.mxu0 %v3887
    %5197 = vmatprep.subr.bf16.mxu0 %v3904
    %5198 = vmatpush1.bf16.msra.mxu0 %v3903
    %5199 = vmatprep.mubr.bf16.mxu0 %v2108
    %5200 = vmatmul.mubr.bf16.gmra.mrb[0].mxu0 %v2107
    %v5201 = vpop.f32.mrb[0].mxu0
    %v5202 = vadd.f32 %v1217, %v5201
    %v5203 = vpop.f32.mrb[0].mxu0
    %v5204 = vadd.f32 %v1221, %v5203
    %v5205 = vpop.f32.mrb[0].mxu0
    %v5206 = vpop.f32.mrb[0].mxu0
    %5207 = vdwg.mxu0
    %5208 = vmatprep.subr.bf16.mxu0 %v3920
    %5209 = vmatpush1.bf16.msra.mxu0 %v3919
    %5210 = vmatprep.subr.bf16.mxu0 %v3936
    %5211 = vmatpush1.bf16.msra.mxu0 %v3935
    %5212 = vmatprep.subr.bf16.mxu0 %v3952
    %5213 = vmatpush1.bf16.msra.mxu0 %v3951
    %5214 = vmatprep.subr.bf16.mxu0 %v3968
    %5215 = vmatpush1.bf16.msra.mxu0 %v3967
    %5216 = vmatprep.subr.bf16.mxu0 %v3984
    %5217 = vmatpush1.bf16.msra.mxu0 %v3983
    %5218 = vmatprep.subr.bf16.mxu0 %v4000
    %5219 = vmatpush1.bf16.msra.mxu0 %v3999
    %5220 = vmatprep.subr.bf16.mxu0 %v4016
    %5221 = vmatpush1.bf16.msra.mxu0 %v4015
    %5222 = vmatprep.subr.bf16.mxu0 %v4032
    %5223 = vmatpush1.bf16.msra.mxu0 %v4031
    %5224 = vmatprep.subr.bf16.mxu0 %v4048
    %5225 = vmatpush1.bf16.msra.mxu0 %v4047
    %5226 = vmatprep.subr.bf16.mxu0 %v4064
    %5227 = vmatpush1.bf16.msra.mxu0 %v4063
    %5228 = vmatprep.subr.bf16.mxu0 %v4080
    %5229 = vmatpush1.bf16.msra.mxu0 %v4079
    %5230 = vmatprep.subr.bf16.mxu0 %v4096
    %5231 = vmatpush1.bf16.msra.mxu0 %v4095
    %5232 = vmatprep.subr.bf16.mxu0 %v4112
    %5233 = vmatpush1.bf16.msra.mxu0 %v4111
    %5234 = vmatprep.subr.bf16.mxu0 %v4128
    %5235 = vmatpush1.bf16.msra.mxu0 %v4127
    %5236 = vmatprep.subr.bf16.mxu0 %v4144
    %5237 = vmatpush1.bf16.msra.mxu0 %v4143
    %5238 = vmatprep.subr.bf16.mxu0 %v4160
    %5239 = vmatpush1.bf16.msra.mxu0 %v4159
    %5240 = vmatprep.mubr.bf16.mxu0 %v2110
    %5241 = vmatmul.mubr.bf16.gmra.mrb[0].mxu0 %v2109
    %v5242 = vpop.f32.mrb[0].mxu0
    %v5243 = vadd.f32 %v5202, %v5242
    %v5244 = vpop.f32.mrb[0].mxu0
    %v5245 = vadd.f32 %v5204, %v5244
    %v5246 = vpop.f32.mrb[0].mxu0
    %v5247 = vpop.f32.mrb[0].mxu0
    %5248 = vdwg.mxu0
    %5249 = vmatprep.subr.bf16.mxu0 %v3666
    %5250 = vmatpush1.bf16.msra.mxu0 %v3665
    %5251 = vmatprep.subr.bf16.mxu0 %v3682
    %5252 = vmatpush1.bf16.msra.mxu0 %v3681
    %5253 = vmatprep.subr.bf16.mxu0 %v3698
    %5254 = vmatpush1.bf16.msra.mxu0 %v3697
    %5255 = vmatprep.subr.bf16.mxu0 %v3714
    %5256 = vmatpush1.bf16.msra.mxu0 %v3713
    %5257 = vmatprep.subr.bf16.mxu0 %v3730
    %5258 = vmatpush1.bf16.msra.mxu0 %v3729
    %5259 = vmatprep.subr.bf16.mxu0 %v3746
    %5260 = vmatpush1.bf16.msra.mxu0 %v3745
    %5261 = vmatprep.subr.bf16.mxu0 %v3762
    %5262 = vmatpush1.bf16.msra.mxu0 %v3761
    %5263 = vmatprep.subr.bf16.mxu0 %v3778
    %5264 = vmatpush1.bf16.msra.mxu0 %v3777
    %5265 = vmatprep.subr.bf16.mxu0 %v3794
    %5266 = vmatpush1.bf16.msra.mxu0 %v3793
    %5267 = vmatprep.subr.bf16.mxu0 %v3810
    %5268 = vmatpush1.bf16.msra.mxu0 %v3809
    %5269 = vmatprep.subr.bf16.mxu0 %v3826
    %5270 = vmatpush1.bf16.msra.mxu0 %v3825
    %5271 = vmatprep.subr.bf16.mxu0 %v3842
    %5272 = vmatpush1.bf16.msra.mxu0 %v3841
    %5273 = vmatprep.subr.bf16.mxu0 %v3858
    %5274 = vmatpush1.bf16.msra.mxu0 %v3857
    %5275 = vmatprep.subr.bf16.mxu0 %v3874
    %5276 = vmatpush1.bf16.msra.mxu0 %v3873
    %5277 = vmatprep.subr.bf16.mxu0 %v3890
    %5278 = vmatpush1.bf16.msra.mxu0 %v3889
    %5279 = vmatprep.subr.bf16.mxu0 %v3906
    %5280 = vmatpush1.bf16.msra.mxu0 %v3905
    %5281 = vmatprep.mubr.bf16.mxu0 %v2108
    %5282 = vmatmul.mubr.bf16.gmra.mrb[0].mxu0 %v2107
    %v5283 = vpop.f32.mrb[0].mxu0
    %v5284 = vadd.f32 %v1225, %v5283
    %v5285 = vpop.f32.mrb[0].mxu0
    %v5286 = vadd.f32 %v1229, %v5285
    %v5287 = vpop.f32.mrb[0].mxu0
    %v5288 = vpop.f32.mrb[0].mxu0
    %5289 = vdwg.mxu0
    %5290 = vmatprep.subr.bf16.mxu0 %v3922
    %5291 = vmatpush1.bf16.msra.mxu0 %v3921
    %5292 = vmatprep.subr.bf16.mxu0 %v3938
    %5293 = vmatpush1.bf16.msra.mxu0 %v3937
    %5294 = vmatprep.subr.bf16.mxu0 %v3954
    %5295 = vmatpush1.bf16.msra.mxu0 %v3953
    %5296 = vmatprep.subr.bf16.mxu0 %v3970
    %5297 = vmatpush1.bf16.msra.mxu0 %v3969
    %5298 = vmatprep.subr.bf16.mxu0 %v3986
    %5299 = vmatpush1.bf16.msra.mxu0 %v3985
    %5300 = vmatprep.subr.bf16.mxu0 %v4002
    %5301 = vmatpush1.bf16.msra.mxu0 %v4001
    %5302 = vmatprep.subr.bf16.mxu0 %v4018
    %5303 = vmatpush1.bf16.msra.mxu0 %v4017
    %5304 = vmatprep.subr.bf16.mxu0 %v4034
    %5305 = vmatpush1.bf16.msra.mxu0 %v4033
    %5306 = vmatprep.subr.bf16.mxu0 %v4050
    %5307 = vmatpush1.bf16.msra.mxu0 %v4049
    %5308 = vmatprep.subr.bf16.mxu0 %v4066
    %5309 = vmatpush1.bf16.msra.mxu0 %v4065
    %5310 = vmatprep.subr.bf16.mxu0 %v4082
    %5311 = vmatpush1.bf16.msra.mxu0 %v4081
    %5312 = vmatprep.subr.bf16.mxu0 %v4098
    %5313 = vmatpush1.bf16.msra.mxu0 %v4097
    %5314 = vmatprep.subr.bf16.mxu0 %v4114
    %5315 = vmatpush1.bf16.msra.mxu0 %v4113
    %5316 = vmatprep.subr.bf16.mxu0 %v4130
    %5317 = vmatpush1.bf16.msra.mxu0 %v4129
    %5318 = vmatprep.subr.bf16.mxu0 %v4146
    %5319 = vmatpush1.bf16.msra.mxu0 %v4145
    %5320 = vmatprep.subr.bf16.mxu0 %v4162
    %5321 = vmatpush1.bf16.msra.mxu0 %v4161
    %5322 = vmatprep.mubr.bf16.mxu0 %v2110
    %5323 = vmatmul.mubr.bf16.gmra.mrb[0].mxu0 %v2109
    %v5324 = vpop.f32.mrb[0].mxu0
    %v5325 = vadd.f32 %v5284, %v5324
    %v5326 = vpop.f32.mrb[0].mxu0
    %v5327 = vadd.f32 %v5286, %v5326
    %v5328 = vpop.f32.mrb[0].mxu0
    %v5329 = vpop.f32.mrb[0].mxu0
    %5330 = vdwg.mxu0
    %v5331 = vmax.f32 %v4751, 0.0
    %v5332 = vmax.f32 %v4753, 0.0
    %v5333 = vmax.f32 %v4833, 0.0
    %v5334 = vmax.f32 %v4835, 0.0
    %v5335 = vmax.f32 %v4915, 0.0
    %v5336 = vmax.f32 %v4917, 0.0
    %v5337 = vmax.f32 %v4997, 0.0
    %v5338 = vmax.f32 %v4999, 0.0
    %v5339 = vmax.f32 %v5079, 0.0
    %v5340 = vmax.f32 %v5081, 0.0
    %v5341 = vmax.f32 %v5161, 0.0
    %v5342 = vmax.f32 %v5163, 0.0
    %v5343 = vmax.f32 %v5243, 0.0
    %v5344 = vmax.f32 %v5245, 0.0
    %v5345 = vmax.f32 %v5325, 0.0
    %v5346 = vmax.f32 %v5327, 0.0
    %v5347 = vpack.c.bf16 %v5331, %v5331
    %v5348 = vpack.c.bf16 %v5332, %v5332
    %v5349 = vpack.c.bf16 %v5333, %v5333
    %v5350 = vpack.c.bf16 %v5334, %v5334
    %v5351 = vpack.c.bf16 %v5335, %v5335
    %v5352 = vpack.c.bf16 %v5336, %v5336
    %v5353 = vpack.c.bf16 %v5337, %v5337
    %v5354 = vpack.c.bf16 %v5338, %v5338
    %v5355 = vpack.c.bf16 %v5339, %v5339
    %v5356 = vpack.c.bf16 %v5340, %v5340
    %v5357 = vpack.c.bf16 %v5341, %v5341
    %v5358 = vpack.c.bf16 %v5342, %v5342
    %v5359 = vpack.c.bf16 %v5343, %v5343
    %v5360 = vpack.c.bf16 %v5344, %v5344
    %v5361 = vpack.c.bf16 %v5345, %v5345
    %v5362 = vpack.c.bf16 %v5346, %v5346
    %v5363 = vld [vmem:[#allocation7] sm:$0xf]
    %v5364 = vld [vmem:[#allocation7 + $0x4] sm:$0xf]
    %v5365 = vld [vmem:[#allocation7 + $0x8] sm:$0xf]
    %v5366 = vld [vmem:[#allocation7 + $0xc] sm:$0xf]
    %v5367 = vld [vmem:[#allocation7 + $0x10] sm:$0xf]
    %v5368 = vld [vmem:[#allocation7 + $0x14] sm:$0xf]
    %v5369 = vld [vmem:[#allocation7 + $0x18] sm:$0xf]
    %v5370 = vld [vmem:[#allocation7 + $0x1c] sm:$0xf]
    %v5371 = vld [vmem:[#allocation7 + $0x20] sm:$0xf]
    %v5372 = vld [vmem:[#allocation7 + $0x24] sm:$0xf]
    %v5373 = vld [vmem:[#allocation7 + $0x28] sm:$0xf]
    %v5374 = vld [vmem:[#allocation7 + $0x2c] sm:$0xf]
    %v5375 = vld [vmem:[#allocation7 + $0x30] sm:$0xf]
    %v5376 = vld [vmem:[#allocation7 + $0x34] sm:$0xf]
    %v5377 = vld [vmem:[#allocation7 + $0x38] sm:$0xf]
    %v5378 = vld [vmem:[#allocation7 + $0x3c] sm:$0xf]
    %v5379 = vld [vmem:[#allocation7 + $0x40] sm:$0xf]
    %v5380 = vld [vmem:[#allocation7 + $0x44] sm:$0xf]
    %v5381 = vld [vmem:[#allocation7 + $0x48] sm:$0xf]
    %v5382 = vld [vmem:[#allocation7 + $0x4c] sm:$0xf]
    %v5383 = vld [vmem:[#allocation7 + $0x50] sm:$0xf]
    %v5384 = vld [vmem:[#allocation7 + $0x54] sm:$0xf]
    %v5385 = vld [vmem:[#allocation7 + $0x58] sm:$0xf]
    %v5386 = vld [vmem:[#allocation7 + $0x5c] sm:$0xf]
    %v5387 = vld [vmem:[#allocation7 + $0x60] sm:$0xf]
    %v5388 = vld [vmem:[#allocation7 + $0x64] sm:$0xf]
    %v5389 = vld [vmem:[#allocation7 + $0x68] sm:$0xf]
    %v5390 = vld [vmem:[#allocation7 + $0x6c] sm:$0xf]
    %v5391 = vld [vmem:[#allocation7 + $0x70] sm:$0xf]
    %v5392 = vld [vmem:[#allocation7 + $0x74] sm:$0xf]
    %v5393 = vld [vmem:[#allocation7 + $0x78] sm:$0xf]
    %v5394 = vld [vmem:[#allocation7 + $0x7c] sm:$0xf]
    %v5395 = vld [vmem:[#allocation7 + $0x80] sm:$0xf]
    %v5396 = vld [vmem:[#allocation7 + $0x84] sm:$0xf]
    %v5397 = vld [vmem:[#allocation7 + $0x88] sm:$0xf]
    %v5398 = vld [vmem:[#allocation7 + $0x8c] sm:$0xf]
    %v5399 = vld [vmem:[#allocation7 + $0x90] sm:$0xf]
    %v5400 = vld [vmem:[#allocation7 + $0x94] sm:$0xf]
    %v5401 = vld [vmem:[#allocation7 + $0x98] sm:$0xf]
    %v5402 = vld [vmem:[#allocation7 + $0x9c] sm:$0xf]
    %v5403 = vld [vmem:[#allocation7 + $0xa0] sm:$0xf]
    %v5404 = vld [vmem:[#allocation7 + $0xa4] sm:$0xf]
    %v5405 = vld [vmem:[#allocation7 + $0xa8] sm:$0xf]
    %v5406 = vld [vmem:[#allocation7 + $0xac] sm:$0xf]
    %v5407 = vld [vmem:[#allocation7 + $0xb0] sm:$0xf]
    %v5408 = vld [vmem:[#allocation7 + $0xb4] sm:$0xf]
    %v5409 = vld [vmem:[#allocation7 + $0xb8] sm:$0xf]
    %v5410 = vld [vmem:[#allocation7 + $0xbc] sm:$0xf]
    %v5411 = vld [vmem:[#allocation7 + $0xc0] sm:$0xf]
    %v5412 = vld [vmem:[#allocation7 + $0xc4] sm:$0xf]
    %v5413 = vld [vmem:[#allocation7 + $0xc8] sm:$0xf]
    %v5414 = vld [vmem:[#allocation7 + $0xcc] sm:$0xf]
    %v5415 = vld [vmem:[#allocation7 + $0xd0] sm:$0xf]
    %v5416 = vld [vmem:[#allocation7 + $0xd4] sm:$0xf]
    %v5417 = vld [vmem:[#allocation7 + $0xd8] sm:$0xf]
    %v5418 = vld [vmem:[#allocation7 + $0xdc] sm:$0xf]
    %v5419 = vld [vmem:[#allocation7 + $0xe0] sm:$0xf]
    %v5420 = vld [vmem:[#allocation7 + $0xe4] sm:$0xf]
    %v5421 = vld [vmem:[#allocation7 + $0xe8] sm:$0xf]
    %v5422 = vld [vmem:[#allocation7 + $0xec] sm:$0xf]
    %v5423 = vld [vmem:[#allocation7 + $0xf0] sm:$0xf]
    %v5424 = vld [vmem:[#allocation7 + $0xf4] sm:$0xf]
    %v5425 = vld [vmem:[#allocation7 + $0xf8] sm:$0xf]
    %v5426 = vld [vmem:[#allocation7 + $0xfc] sm:$0xf]
    %v5427 = vld [vmem:[#allocation7 + $0x100] sm:$0xf]
    %v5428 = vld [vmem:[#allocation7 + $0x104] sm:$0xf]
    %v5429 = vld [vmem:[#allocation7 + $0x108] sm:$0xf]
    %v5430 = vld [vmem:[#allocation7 + $0x10c] sm:$0xf]
    %v5431 = vld [vmem:[#allocation7 + $0x110] sm:$0xf]
    %v5432 = vld [vmem:[#allocation7 + $0x114] sm:$0xf]
    %v5433 = vld [vmem:[#allocation7 + $0x118] sm:$0xf]
    %v5434 = vld [vmem:[#allocation7 + $0x11c] sm:$0xf]
    %v5435 = vld [vmem:[#allocation7 + $0x120] sm:$0xf]
    %v5436 = vld [vmem:[#allocation7 + $0x124] sm:$0xf]
    %v5437 = vld [vmem:[#allocation7 + $0x128] sm:$0xf]
    %v5438 = vld [vmem:[#allocation7 + $0x12c] sm:$0xf]
    %v5439 = vld [vmem:[#allocation7 + $0x130] sm:$0xf]
    %v5440 = vld [vmem:[#allocation7 + $0x134] sm:$0xf]
    %v5441 = vld [vmem:[#allocation7 + $0x138] sm:$0xf]
    %v5442 = vld [vmem:[#allocation7 + $0x13c] sm:$0xf]
    %v5443 = vld [vmem:[#allocation7 + $0x140] sm:$0xf]
    %v5444 = vld [vmem:[#allocation7 + $0x144] sm:$0xf]
    %v5445 = vld [vmem:[#allocation7 + $0x148] sm:$0xf]
    %v5446 = vld [vmem:[#allocation7 + $0x14c] sm:$0xf]
    %v5447 = vld [vmem:[#allocation7 + $0x150] sm:$0xf]
    %v5448 = vld [vmem:[#allocation7 + $0x154] sm:$0xf]
    %v5449 = vld [vmem:[#allocation7 + $0x158] sm:$0xf]
    %v5450 = vld [vmem:[#allocation7 + $0x15c] sm:$0xf]
    %v5451 = vld [vmem:[#allocation7 + $0x160] sm:$0xf]
    %v5452 = vld [vmem:[#allocation7 + $0x164] sm:$0xf]
    %v5453 = vld [vmem:[#allocation7 + $0x168] sm:$0xf]
    %v5454 = vld [vmem:[#allocation7 + $0x16c] sm:$0xf]
    %v5455 = vld [vmem:[#allocation7 + $0x170] sm:$0xf]
    %v5456 = vld [vmem:[#allocation7 + $0x174] sm:$0xf]
    %v5457 = vld [vmem:[#allocation7 + $0x178] sm:$0xf]
    %v5458 = vld [vmem:[#allocation7 + $0x17c] sm:$0xf]
    %v5459 = vld [vmem:[#allocation7 + $0x180] sm:$0xf]
    %v5460 = vld [vmem:[#allocation7 + $0x184] sm:$0xf]
    %v5461 = vld [vmem:[#allocation7 + $0x188] sm:$0xf]
    %v5462 = vld [vmem:[#allocation7 + $0x18c] sm:$0xf]
    %v5463 = vld [vmem:[#allocation7 + $0x190] sm:$0xf]
    %v5464 = vld [vmem:[#allocation7 + $0x194] sm:$0xf]
    %v5465 = vld [vmem:[#allocation7 + $0x198] sm:$0xf]
    %v5466 = vld [vmem:[#allocation7 + $0x19c] sm:$0xf]
    %v5467 = vld [vmem:[#allocation7 + $0x1a0] sm:$0xf]
    %v5468 = vld [vmem:[#allocation7 + $0x1a4] sm:$0xf]
    %v5469 = vld [vmem:[#allocation7 + $0x1a8] sm:$0xf]
    %v5470 = vld [vmem:[#allocation7 + $0x1ac] sm:$0xf]
    %v5471 = vld [vmem:[#allocation7 + $0x1b0] sm:$0xf]
    %v5472 = vld [vmem:[#allocation7 + $0x1b4] sm:$0xf]
    %v5473 = vld [vmem:[#allocation7 + $0x1b8] sm:$0xf]
    %v5474 = vld [vmem:[#allocation7 + $0x1bc] sm:$0xf]
    %v5475 = vld [vmem:[#allocation7 + $0x1c0] sm:$0xf]
    %v5476 = vld [vmem:[#allocation7 + $0x1c4] sm:$0xf]
    %v5477 = vld [vmem:[#allocation7 + $0x1c8] sm:$0xf]
    %v5478 = vld [vmem:[#allocation7 + $0x1cc] sm:$0xf]
    %v5479 = vld [vmem:[#allocation7 + $0x1d0] sm:$0xf]
    %v5480 = vld [vmem:[#allocation7 + $0x1d4] sm:$0xf]
    %v5481 = vld [vmem:[#allocation7 + $0x1d8] sm:$0xf]
    %v5482 = vld [vmem:[#allocation7 + $0x1dc] sm:$0xf]
    %v5483 = vld [vmem:[#allocation7 + $0x1e0] sm:$0xf]
    %v5484 = vld [vmem:[#allocation7 + $0x1e4] sm:$0xf]
    %v5485 = vld [vmem:[#allocation7 + $0x1e8] sm:$0xf]
    %v5486 = vld [vmem:[#allocation7 + $0x1ec] sm:$0xf]
    %v5487 = vld [vmem:[#allocation7 + $0x1f0] sm:$0xf]
    %v5488 = vld [vmem:[#allocation7 + $0x1f4] sm:$0xf]
    %v5489 = vld [vmem:[#allocation7 + $0x1f8] sm:$0xf]
    %v5490 = vld [vmem:[#allocation7 + $0x1fc] sm:$0xf]
    %v5491 = vld [vmem:[#allocation7 + $0x200] sm:$0xf]
    %v5492 = vld [vmem:[#allocation7 + $0x204] sm:$0xf]
    %v5493 = vld [vmem:[#allocation7 + $0x208] sm:$0xf]
    %v5494 = vld [vmem:[#allocation7 + $0x20c] sm:$0xf]
    %v5495 = vld [vmem:[#allocation7 + $0x210] sm:$0xf]
    %v5496 = vld [vmem:[#allocation7 + $0x214] sm:$0xf]
    %v5497 = vld [vmem:[#allocation7 + $0x218] sm:$0xf]
    %v5498 = vld [vmem:[#allocation7 + $0x21c] sm:$0xf]
    %v5499 = vld [vmem:[#allocation7 + $0x220] sm:$0xf]
    %v5500 = vld [vmem:[#allocation7 + $0x224] sm:$0xf]
    %v5501 = vld [vmem:[#allocation7 + $0x228] sm:$0xf]
    %v5502 = vld [vmem:[#allocation7 + $0x22c] sm:$0xf]
    %v5503 = vld [vmem:[#allocation7 + $0x230] sm:$0xf]
    %v5504 = vld [vmem:[#allocation7 + $0x234] sm:$0xf]
    %v5505 = vld [vmem:[#allocation7 + $0x238] sm:$0xf]
    %v5506 = vld [vmem:[#allocation7 + $0x23c] sm:$0xf]
    %v5507 = vld [vmem:[#allocation7 + $0x240] sm:$0xf]
    %v5508 = vld [vmem:[#allocation7 + $0x244] sm:$0xf]
    %v5509 = vld [vmem:[#allocation7 + $0x248] sm:$0xf]
    %v5510 = vld [vmem:[#allocation7 + $0x24c] sm:$0xf]
    %v5511 = vld [vmem:[#allocation7 + $0x250] sm:$0xf]
    %v5512 = vld [vmem:[#allocation7 + $0x254] sm:$0xf]
    %v5513 = vld [vmem:[#allocation7 + $0x258] sm:$0xf]
    %v5514 = vld [vmem:[#allocation7 + $0x25c] sm:$0xf]
    %v5515 = vld [vmem:[#allocation7 + $0x260] sm:$0xf]
    %v5516 = vld [vmem:[#allocation7 + $0x264] sm:$0xf]
    %v5517 = vld [vmem:[#allocation7 + $0x268] sm:$0xf]
    %v5518 = vld [vmem:[#allocation7 + $0x26c] sm:$0xf]
    %v5519 = vld [vmem:[#allocation7 + $0x270] sm:$0xf]
    %v5520 = vld [vmem:[#allocation7 + $0x274] sm:$0xf]
    %v5521 = vld [vmem:[#allocation7 + $0x278] sm:$0xf]
    %v5522 = vld [vmem:[#allocation7 + $0x27c] sm:$0xf]
    %v5523 = vld [vmem:[#allocation7 + $0x280] sm:$0xf]
    %v5524 = vld [vmem:[#allocation7 + $0x284] sm:$0xf]
    %v5525 = vld [vmem:[#allocation7 + $0x288] sm:$0xf]
    %v5526 = vld [vmem:[#allocation7 + $0x28c] sm:$0xf]
    %v5527 = vld [vmem:[#allocation7 + $0x290] sm:$0xf]
    %v5528 = vld [vmem:[#allocation7 + $0x294] sm:$0xf]
    %v5529 = vld [vmem:[#allocation7 + $0x298] sm:$0xf]
    %v5530 = vld [vmem:[#allocation7 + $0x29c] sm:$0xf]
    %v5531 = vld [vmem:[#allocation7 + $0x2a0] sm:$0xf]
    %v5532 = vld [vmem:[#allocation7 + $0x2a4] sm:$0xf]
    %v5533 = vld [vmem:[#allocation7 + $0x2a8] sm:$0xf]
    %v5534 = vld [vmem:[#allocation7 + $0x2ac] sm:$0xf]
    %v5535 = vld [vmem:[#allocation7 + $0x2b0] sm:$0xf]
    %v5536 = vld [vmem:[#allocation7 + $0x2b4] sm:$0xf]
    %v5537 = vld [vmem:[#allocation7 + $0x2b8] sm:$0xf]
    %v5538 = vld [vmem:[#allocation7 + $0x2bc] sm:$0xf]
    %v5539 = vld [vmem:[#allocation7 + $0x2c0] sm:$0xf]
    %v5540 = vld [vmem:[#allocation7 + $0x2c4] sm:$0xf]
    %v5541 = vld [vmem:[#allocation7 + $0x2c8] sm:$0xf]
    %v5542 = vld [vmem:[#allocation7 + $0x2cc] sm:$0xf]
    %v5543 = vld [vmem:[#allocation7 + $0x2d0] sm:$0xf]
    %v5544 = vld [vmem:[#allocation7 + $0x2d4] sm:$0xf]
    %v5545 = vld [vmem:[#allocation7 + $0x2d8] sm:$0xf]
    %v5546 = vld [vmem:[#allocation7 + $0x2dc] sm:$0xf]
    %v5547 = vld [vmem:[#allocation7 + $0x2e0] sm:$0xf]
    %v5548 = vld [vmem:[#allocation7 + $0x2e4] sm:$0xf]
    %v5549 = vld [vmem:[#allocation7 + $0x2e8] sm:$0xf]
    %v5550 = vld [vmem:[#allocation7 + $0x2ec] sm:$0xf]
    %v5551 = vld [vmem:[#allocation7 + $0x2f0] sm:$0xf]
    %v5552 = vld [vmem:[#allocation7 + $0x2f4] sm:$0xf]
    %v5553 = vld [vmem:[#allocation7 + $0x2f8] sm:$0xf]
    %v5554 = vld [vmem:[#allocation7 + $0x2fc] sm:$0xf]
    %v5555 = vld [vmem:[#allocation7 + $0x300] sm:$0xf]
    %v5556 = vld [vmem:[#allocation7 + $0x304] sm:$0xf]
    %v5557 = vld [vmem:[#allocation7 + $0x308] sm:$0xf]
    %v5558 = vld [vmem:[#allocation7 + $0x30c] sm:$0xf]
    %v5559 = vld [vmem:[#allocation7 + $0x310] sm:$0xf]
    %v5560 = vld [vmem:[#allocation7 + $0x314] sm:$0xf]
    %v5561 = vld [vmem:[#allocation7 + $0x318] sm:$0xf]
    %v5562 = vld [vmem:[#allocation7 + $0x31c] sm:$0xf]
    %v5563 = vld [vmem:[#allocation7 + $0x320] sm:$0xf]
    %v5564 = vld [vmem:[#allocation7 + $0x324] sm:$0xf]
    %v5565 = vld [vmem:[#allocation7 + $0x328] sm:$0xf]
    %v5566 = vld [vmem:[#allocation7 + $0x32c] sm:$0xf]
    %v5567 = vld [vmem:[#allocation7 + $0x330] sm:$0xf]
    %v5568 = vld [vmem:[#allocation7 + $0x334] sm:$0xf]
    %v5569 = vld [vmem:[#allocation7 + $0x338] sm:$0xf]
    %v5570 = vld [vmem:[#allocation7 + $0x33c] sm:$0xf]
    %v5571 = vld [vmem:[#allocation7 + $0x340] sm:$0xf]
    %v5572 = vld [vmem:[#allocation7 + $0x344] sm:$0xf]
    %v5573 = vld [vmem:[#allocation7 + $0x348] sm:$0xf]
    %v5574 = vld [vmem:[#allocation7 + $0x34c] sm:$0xf]
    %v5575 = vld [vmem:[#allocation7 + $0x350] sm:$0xf]
    %v5576 = vld [vmem:[#allocation7 + $0x354] sm:$0xf]
    %v5577 = vld [vmem:[#allocation7 + $0x358] sm:$0xf]
    %v5578 = vld [vmem:[#allocation7 + $0x35c] sm:$0xf]
    %v5579 = vld [vmem:[#allocation7 + $0x360] sm:$0xf]
    %v5580 = vld [vmem:[#allocation7 + $0x364] sm:$0xf]
    %v5581 = vld [vmem:[#allocation7 + $0x368] sm:$0xf]
    %v5582 = vld [vmem:[#allocation7 + $0x36c] sm:$0xf]
    %v5583 = vld [vmem:[#allocation7 + $0x370] sm:$0xf]
    %v5584 = vld [vmem:[#allocation7 + $0x374] sm:$0xf]
    %v5585 = vld [vmem:[#allocation7 + $0x378] sm:$0xf]
    %v5586 = vld [vmem:[#allocation7 + $0x37c] sm:$0xf]
    %v5587 = vld [vmem:[#allocation7 + $0x380] sm:$0xf]
    %v5588 = vld [vmem:[#allocation7 + $0x384] sm:$0xf]
    %v5589 = vld [vmem:[#allocation7 + $0x388] sm:$0xf]
    %v5590 = vld [vmem:[#allocation7 + $0x38c] sm:$0xf]
    %v5591 = vld [vmem:[#allocation7 + $0x390] sm:$0xf]
    %v5592 = vld [vmem:[#allocation7 + $0x394] sm:$0xf]
    %v5593 = vld [vmem:[#allocation7 + $0x398] sm:$0xf]
    %v5594 = vld [vmem:[#allocation7 + $0x39c] sm:$0xf]
    %v5595 = vld [vmem:[#allocation7 + $0x3a0] sm:$0xf]
    %v5596 = vld [vmem:[#allocation7 + $0x3a4] sm:$0xf]
    %v5597 = vld [vmem:[#allocation7 + $0x3a8] sm:$0xf]
    %v5598 = vld [vmem:[#allocation7 + $0x3ac] sm:$0xf]
    %v5599 = vld [vmem:[#allocation7 + $0x3b0] sm:$0xf]
    %v5600 = vld [vmem:[#allocation7 + $0x3b4] sm:$0xf]
    %v5601 = vld [vmem:[#allocation7 + $0x3b8] sm:$0xf]
    %v5602 = vld [vmem:[#allocation7 + $0x3bc] sm:$0xf]
    %v5603 = vld [vmem:[#allocation7 + $0x3c0] sm:$0xf]
    %v5604 = vld [vmem:[#allocation7 + $0x3c4] sm:$0xf]
    %v5605 = vld [vmem:[#allocation7 + $0x3c8] sm:$0xf]
    %v5606 = vld [vmem:[#allocation7 + $0x3cc] sm:$0xf]
    %v5607 = vld [vmem:[#allocation7 + $0x3d0] sm:$0xf]
    %v5608 = vld [vmem:[#allocation7 + $0x3d4] sm:$0xf]
    %v5609 = vld [vmem:[#allocation7 + $0x3d8] sm:$0xf]
    %v5610 = vld [vmem:[#allocation7 + $0x3dc] sm:$0xf]
    %v5611 = vld [vmem:[#allocation7 + $0x3e0] sm:$0xf]
    %v5612 = vld [vmem:[#allocation7 + $0x3e4] sm:$0xf]
    %v5613 = vld [vmem:[#allocation7 + $0x3e8] sm:$0xf]
    %v5614 = vld [vmem:[#allocation7 + $0x3ec] sm:$0xf]
    %v5615 = vld [vmem:[#allocation7 + $0x3f0] sm:$0xf]
    %v5616 = vld [vmem:[#allocation7 + $0x3f4] sm:$0xf]
    %v5617 = vld [vmem:[#allocation7 + $0x3f8] sm:$0xf]
    %v5618 = vld [vmem:[#allocation7 + $0x3fc] sm:$0xf]
    %v5619 = vld [vmem:[#allocation8] sm:$0x1]
    %v5621 = vlaneseq
    %v5622 = vshrl.u32 %v5621, 7
    %v5623 = vsub.s32 0, %v5622
    %v5624 = vrot.slane %v5619, %v5623
    %v5882 = vunpack.c.l.b16 %v5363
    %v5883 = vunpack.c.l.b16 %v5364
    %v5884 = vunpack.c.l.b16 %v5365
    %v5885 = vunpack.c.l.b16 %v5366
    %v5886 = vunpack.c.l.b16 %v5367
    %v5887 = vunpack.c.l.b16 %v5368
    %v5888 = vunpack.c.l.b16 %v5369
    %v5889 = vunpack.c.l.b16 %v5370
    %v5890 = vunpack.c.l.b16 %v5371
    %v5891 = vunpack.c.l.b16 %v5372
    %v5892 = vunpack.c.l.b16 %v5373
    %v5893 = vunpack.c.l.b16 %v5374
    %v5894 = vunpack.c.l.b16 %v5375
    %v5895 = vunpack.c.l.b16 %v5376
    %v5896 = vunpack.c.l.b16 %v5377
    %v5897 = vunpack.c.l.b16 %v5378
    %v5898 = vunpack.c.l.b16 %v5379
    %v5899 = vunpack.c.l.b16 %v5380
    %v5900 = vunpack.c.l.b16 %v5381
    %v5901 = vunpack.c.l.b16 %v5382
    %v5902 = vunpack.c.l.b16 %v5383
    %v5903 = vunpack.c.l.b16 %v5384
    %v5904 = vunpack.c.l.b16 %v5385
    %v5905 = vunpack.c.l.b16 %v5386
    %v5906 = vunpack.c.l.b16 %v5387
    %v5907 = vunpack.c.l.b16 %v5388
    %v5908 = vunpack.c.l.b16 %v5389
    %v5909 = vunpack.c.l.b16 %v5390
    %v5910 = vunpack.c.l.b16 %v5391
    %v5911 = vunpack.c.l.b16 %v5392
    %v5912 = vunpack.c.l.b16 %v5393
    %v5913 = vunpack.c.l.b16 %v5394
    %v5914 = vunpack.c.l.b16 %v5395
    %v5915 = vunpack.c.l.b16 %v5396
    %v5916 = vunpack.c.l.b16 %v5397
    %v5917 = vunpack.c.l.b16 %v5398
    %v5918 = vunpack.c.l.b16 %v5399
    %v5919 = vunpack.c.l.b16 %v5400
    %v5920 = vunpack.c.l.b16 %v5401
    %v5921 = vunpack.c.l.b16 %v5402
    %v5922 = vunpack.c.l.b16 %v5403
    %v5923 = vunpack.c.l.b16 %v5404
    %v5924 = vunpack.c.l.b16 %v5405
    %v5925 = vunpack.c.l.b16 %v5406
    %v5926 = vunpack.c.l.b16 %v5407
    %v5927 = vunpack.c.l.b16 %v5408
    %v5928 = vunpack.c.l.b16 %v5409
    %v5929 = vunpack.c.l.b16 %v5410
    %v5930 = vunpack.c.l.b16 %v5411
    %v5931 = vunpack.c.l.b16 %v5412
    %v5932 = vunpack.c.l.b16 %v5413
    %v5933 = vunpack.c.l.b16 %v5414
    %v5934 = vunpack.c.l.b16 %v5415
    %v5935 = vunpack.c.l.b16 %v5416
    %v5936 = vunpack.c.l.b16 %v5417
    %v5937 = vunpack.c.l.b16 %v5418
    %v5938 = vunpack.c.l.b16 %v5419
    %v5939 = vunpack.c.l.b16 %v5420
    %v5940 = vunpack.c.l.b16 %v5421
    %v5941 = vunpack.c.l.b16 %v5422
    %v5942 = vunpack.c.l.b16 %v5423
    %v5943 = vunpack.c.l.b16 %v5424
    %v5944 = vunpack.c.l.b16 %v5425
    %v5945 = vunpack.c.l.b16 %v5426
    %v5946 = vunpack.c.l.b16 %v5427
    %v5947 = vunpack.c.l.b16 %v5428
    %v5948 = vunpack.c.l.b16 %v5429
    %v5949 = vunpack.c.l.b16 %v5430
    %v5950 = vunpack.c.l.b16 %v5431
    %v5951 = vunpack.c.l.b16 %v5432
    %v5952 = vunpack.c.l.b16 %v5433
    %v5953 = vunpack.c.l.b16 %v5434
    %v5954 = vunpack.c.l.b16 %v5435
    %v5955 = vunpack.c.l.b16 %v5436
    %v5956 = vunpack.c.l.b16 %v5437
    %v5957 = vunpack.c.l.b16 %v5438
    %v5958 = vunpack.c.l.b16 %v5439
    %v5959 = vunpack.c.l.b16 %v5440
    %v5960 = vunpack.c.l.b16 %v5441
    %v5961 = vunpack.c.l.b16 %v5442
    %v5962 = vunpack.c.l.b16 %v5443
    %v5963 = vunpack.c.l.b16 %v5444
    %v5964 = vunpack.c.l.b16 %v5445
    %v5965 = vunpack.c.l.b16 %v5446
    %v5966 = vunpack.c.l.b16 %v5447
    %v5967 = vunpack.c.l.b16 %v5448
    %v5968 = vunpack.c.l.b16 %v5449
    %v5969 = vunpack.c.l.b16 %v5450
    %v5970 = vunpack.c.l.b16 %v5451
    %v5971 = vunpack.c.l.b16 %v5452
    %v5972 = vunpack.c.l.b16 %v5453
    %v5973 = vunpack.c.l.b16 %v5454
    %v5974 = vunpack.c.l.b16 %v5455
    %v5975 = vunpack.c.l.b16 %v5456
    %v5976 = vunpack.c.l.b16 %v5457
    %v5977 = vunpack.c.l.b16 %v5458
    %v5978 = vunpack.c.l.b16 %v5459
    %v5979 = vunpack.c.l.b16 %v5460
    %v5980 = vunpack.c.l.b16 %v5461
    %v5981 = vunpack.c.l.b16 %v5462
    %v5982 = vunpack.c.l.b16 %v5463
    %v5983 = vunpack.c.l.b16 %v5464
    %v5984 = vunpack.c.l.b16 %v5465
    %v5985 = vunpack.c.l.b16 %v5466
    %v5986 = vunpack.c.l.b16 %v5467
    %v5987 = vunpack.c.l.b16 %v5468
    %v5988 = vunpack.c.l.b16 %v5469
    %v5989 = vunpack.c.l.b16 %v5470
    %v5990 = vunpack.c.l.b16 %v5471
    %v5991 = vunpack.c.l.b16 %v5472
    %v5992 = vunpack.c.l.b16 %v5473
    %v5993 = vunpack.c.l.b16 %v5474
    %v5994 = vunpack.c.l.b16 %v5475
    %v5995 = vunpack.c.l.b16 %v5476
    %v5996 = vunpack.c.l.b16 %v5477
    %v5997 = vunpack.c.l.b16 %v5478
    %v5998 = vunpack.c.l.b16 %v5479
    %v5999 = vunpack.c.l.b16 %v5480
    %v6000 = vunpack.c.l.b16 %v5481
    %v6001 = vunpack.c.l.b16 %v5482
    %v6002 = vunpack.c.l.b16 %v5483
    %v6003 = vunpack.c.l.b16 %v5484
    %v6004 = vunpack.c.l.b16 %v5485
    %v6005 = vunpack.c.l.b16 %v5486
    %v6006 = vunpack.c.l.b16 %v5487
    %v6007 = vunpack.c.l.b16 %v5488
    %v6008 = vunpack.c.l.b16 %v5489
    %v6009 = vunpack.c.l.b16 %v5490
    %v6010 = vunpack.c.l.b16 %v5491
    %v6011 = vunpack.c.l.b16 %v5492
    %v6012 = vunpack.c.l.b16 %v5493
    %v6013 = vunpack.c.l.b16 %v5494
    %v6014 = vunpack.c.l.b16 %v5495
    %v6015 = vunpack.c.l.b16 %v5496
    %v6016 = vunpack.c.l.b16 %v5497
    %v6017 = vunpack.c.l.b16 %v5498
    %v6018 = vunpack.c.l.b16 %v5499
    %v6019 = vunpack.c.l.b16 %v5500
    %v6020 = vunpack.c.l.b16 %v5501
    %v6021 = vunpack.c.l.b16 %v5502
    %v6022 = vunpack.c.l.b16 %v5503
    %v6023 = vunpack.c.l.b16 %v5504
    %v6024 = vunpack.c.l.b16 %v5505
    %v6025 = vunpack.c.l.b16 %v5506
    %v6026 = vunpack.c.l.b16 %v5507
    %v6027 = vunpack.c.l.b16 %v5508
    %v6028 = vunpack.c.l.b16 %v5509
    %v6029 = vunpack.c.l.b16 %v5510
    %v6030 = vunpack.c.l.b16 %v5511
    %v6031 = vunpack.c.l.b16 %v5512
    %v6032 = vunpack.c.l.b16 %v5513
    %v6033 = vunpack.c.l.b16 %v5514
    %v6034 = vunpack.c.l.b16 %v5515
    %v6035 = vunpack.c.l.b16 %v5516
    %v6036 = vunpack.c.l.b16 %v5517
    %v6037 = vunpack.c.l.b16 %v5518
    %v6038 = vunpack.c.l.b16 %v5519
    %v6039 = vunpack.c.l.b16 %v5520
    %v6040 = vunpack.c.l.b16 %v5521
    %v6041 = vunpack.c.l.b16 %v5522
    %v6042 = vunpack.c.l.b16 %v5523
    %v6043 = vunpack.c.l.b16 %v5524
    %v6044 = vunpack.c.l.b16 %v5525
    %v6045 = vunpack.c.l.b16 %v5526
    %v6046 = vunpack.c.l.b16 %v5527
    %v6047 = vunpack.c.l.b16 %v5528
    %v6048 = vunpack.c.l.b16 %v5529
    %v6049 = vunpack.c.l.b16 %v5530
    %v6050 = vunpack.c.l.b16 %v5531
    %v6051 = vunpack.c.l.b16 %v5532
    %v6052 = vunpack.c.l.b16 %v5533
    %v6053 = vunpack.c.l.b16 %v5534
    %v6054 = vunpack.c.l.b16 %v5535
    %v6055 = vunpack.c.l.b16 %v5536
    %v6056 = vunpack.c.l.b16 %v5537
    %v6057 = vunpack.c.l.b16 %v5538
    %v6058 = vunpack.c.l.b16 %v5539
    %v6059 = vunpack.c.l.b16 %v5540
    %v6060 = vunpack.c.l.b16 %v5541
    %v6061 = vunpack.c.l.b16 %v5542
    %v6062 = vunpack.c.l.b16 %v5543
    %v6063 = vunpack.c.l.b16 %v5544
    %v6064 = vunpack.c.l.b16 %v5545
    %v6065 = vunpack.c.l.b16 %v5546
    %v6066 = vunpack.c.l.b16 %v5547
    %v6067 = vunpack.c.l.b16 %v5548
    %v6068 = vunpack.c.l.b16 %v5549
    %v6069 = vunpack.c.l.b16 %v5550
    %v6070 = vunpack.c.l.b16 %v5551
    %v6071 = vunpack.c.l.b16 %v5552
    %v6072 = vunpack.c.l.b16 %v5553
    %v6073 = vunpack.c.l.b16 %v5554
    %v6074 = vunpack.c.l.b16 %v5555
    %v6075 = vunpack.c.l.b16 %v5556
    %v6076 = vunpack.c.l.b16 %v5557
    %v6077 = vunpack.c.l.b16 %v5558
    %v6078 = vunpack.c.l.b16 %v5559
    %v6079 = vunpack.c.l.b16 %v5560
    %v6080 = vunpack.c.l.b16 %v5561
    %v6081 = vunpack.c.l.b16 %v5562
    %v6082 = vunpack.c.l.b16 %v5563
    %v6083 = vunpack.c.l.b16 %v5564
    %v6084 = vunpack.c.l.b16 %v5565
    %v6085 = vunpack.c.l.b16 %v5566
    %v6086 = vunpack.c.l.b16 %v5567
    %v6087 = vunpack.c.l.b16 %v5568
    %v6088 = vunpack.c.l.b16 %v5569
    %v6089 = vunpack.c.l.b16 %v5570
    %v6090 = vunpack.c.l.b16 %v5571
    %v6091 = vunpack.c.l.b16 %v5572
    %v6092 = vunpack.c.l.b16 %v5573
    %v6093 = vunpack.c.l.b16 %v5574
    %v6094 = vunpack.c.l.b16 %v5575
    %v6095 = vunpack.c.l.b16 %v5576
    %v6096 = vunpack.c.l.b16 %v5577
    %v6097 = vunpack.c.l.b16 %v5578
    %v6098 = vunpack.c.l.b16 %v5579
    %v6099 = vunpack.c.l.b16 %v5580
    %v6100 = vunpack.c.l.b16 %v5581
    %v6101 = vunpack.c.l.b16 %v5582
    %v6102 = vunpack.c.l.b16 %v5583
    %v6103 = vunpack.c.l.b16 %v5584
    %v6104 = vunpack.c.l.b16 %v5585
    %v6105 = vunpack.c.l.b16 %v5586
    %v6106 = vunpack.c.l.b16 %v5587
    %v6107 = vunpack.c.l.b16 %v5588
    %v6108 = vunpack.c.l.b16 %v5589
    %v6109 = vunpack.c.l.b16 %v5590
    %v6110 = vunpack.c.l.b16 %v5591
    %v6111 = vunpack.c.l.b16 %v5592
    %v6112 = vunpack.c.l.b16 %v5593
    %v6113 = vunpack.c.l.b16 %v5594
    %v6114 = vunpack.c.l.b16 %v5595
    %v6115 = vunpack.c.l.b16 %v5596
    %v6116 = vunpack.c.l.b16 %v5597
    %v6117 = vunpack.c.l.b16 %v5598
    %v6118 = vunpack.c.l.b16 %v5599
    %v6119 = vunpack.c.l.b16 %v5600
    %v6120 = vunpack.c.l.b16 %v5601
    %v6121 = vunpack.c.l.b16 %v5602
    %v6122 = vunpack.c.l.b16 %v5603
    %v6123 = vunpack.c.l.b16 %v5604
    %v6124 = vunpack.c.l.b16 %v5605
    %v6125 = vunpack.c.l.b16 %v5606
    %v6126 = vunpack.c.l.b16 %v5607
    %v6127 = vunpack.c.l.b16 %v5608
    %v6128 = vunpack.c.l.b16 %v5609
    %v6129 = vunpack.c.l.b16 %v5610
    %v6130 = vunpack.c.l.b16 %v5611
    %v6131 = vunpack.c.l.b16 %v5612
    %v6132 = vunpack.c.l.b16 %v5613
    %v6133 = vunpack.c.l.b16 %v5614
    %v6134 = vunpack.c.l.b16 %v5615
    %v6135 = vunpack.c.l.b16 %v5616
    %v6136 = vunpack.c.l.b16 %v5617
    %v6137 = vunpack.c.l.b16 %v5618
    %v6138 = vpack.c.b16 %v5883, %v5882
    %v6139 = vpack.c.b16 %v5885, %v5884
    %v6140 = vpack.c.b16 %v5887, %v5886
    %v6141 = vpack.c.b16 %v5889, %v5888
    %v6142 = vpack.c.b16 %v5891, %v5890
    %v6143 = vpack.c.b16 %v5893, %v5892
    %v6144 = vpack.c.b16 %v5895, %v5894
    %v6145 = vpack.c.b16 %v5897, %v5896
    %v6146 = vpack.c.b16 %v5899, %v5898
    %v6147 = vpack.c.b16 %v5901, %v5900
    %v6148 = vpack.c.b16 %v5903, %v5902
    %v6149 = vpack.c.b16 %v5905, %v5904
    %v6150 = vpack.c.b16 %v5907, %v5906
    %v6151 = vpack.c.b16 %v5909, %v5908
    %v6152 = vpack.c.b16 %v5911, %v5910
    %v6153 = vpack.c.b16 %v5913, %v5912
    %v6154 = vpack.c.b16 %v5915, %v5914
    %v6155 = vpack.c.b16 %v5917, %v5916
    %v6156 = vpack.c.b16 %v5919, %v5918
    %v6157 = vpack.c.b16 %v5921, %v5920
    %v6158 = vpack.c.b16 %v5923, %v5922
    %v6159 = vpack.c.b16 %v5925, %v5924
    %v6160 = vpack.c.b16 %v5927, %v5926
    %v6161 = vpack.c.b16 %v5929, %v5928
    %v6162 = vpack.c.b16 %v5931, %v5930
    %v6163 = vpack.c.b16 %v5933, %v5932
    %v6164 = vpack.c.b16 %v5935, %v5934
    %v6165 = vpack.c.b16 %v5937, %v5936
    %v6166 = vpack.c.b16 %v5939, %v5938
    %v6167 = vpack.c.b16 %v5941, %v5940
    %v6168 = vpack.c.b16 %v5943, %v5942
    %v6169 = vpack.c.b16 %v5945, %v5944
    %v6170 = vpack.c.b16 %v5947, %v5946
    %v6171 = vpack.c.b16 %v5949, %v5948
    %v6172 = vpack.c.b16 %v5951, %v5950
    %v6173 = vpack.c.b16 %v5953, %v5952
    %v6174 = vpack.c.b16 %v5955, %v5954
    %v6175 = vpack.c.b16 %v5957, %v5956
    %v6176 = vpack.c.b16 %v5959, %v5958
    %v6177 = vpack.c.b16 %v5961, %v5960
    %v6178 = vpack.c.b16 %v5963, %v5962
    %v6179 = vpack.c.b16 %v5965, %v5964
    %v6180 = vpack.c.b16 %v5967, %v5966
    %v6181 = vpack.c.b16 %v5969, %v5968
    %v6182 = vpack.c.b16 %v5971, %v5970
    %v6183 = vpack.c.b16 %v5973, %v5972
    %v6184 = vpack.c.b16 %v5975, %v5974
    %v6185 = vpack.c.b16 %v5977, %v5976
    %v6186 = vpack.c.b16 %v5979, %v5978
    %v6187 = vpack.c.b16 %v5981, %v5980
    %v6188 = vpack.c.b16 %v5983, %v5982
    %v6189 = vpack.c.b16 %v5985, %v5984
    %v6190 = vpack.c.b16 %v5987, %v5986
    %v6191 = vpack.c.b16 %v5989, %v5988
    %v6192 = vpack.c.b16 %v5991, %v5990
    %v6193 = vpack.c.b16 %v5993, %v5992
    %v6194 = vpack.c.b16 %v5995, %v5994
    %v6195 = vpack.c.b16 %v5997, %v5996
    %v6196 = vpack.c.b16 %v5999, %v5998
    %v6197 = vpack.c.b16 %v6001, %v6000
    %v6198 = vpack.c.b16 %v6003, %v6002
    %v6199 = vpack.c.b16 %v6005, %v6004
    %v6200 = vpack.c.b16 %v6007, %v6006
    %v6201 = vpack.c.b16 %v6009, %v6008
    %v6202 = vpack.c.b16 %v6011, %v6010
    %v6203 = vpack.c.b16 %v6013, %v6012
    %v6204 = vpack.c.b16 %v6015, %v6014
    %v6205 = vpack.c.b16 %v6017, %v6016
    %v6206 = vpack.c.b16 %v6019, %v6018
    %v6207 = vpack.c.b16 %v6021, %v6020
    %v6208 = vpack.c.b16 %v6023, %v6022
    %v6209 = vpack.c.b16 %v6025, %v6024
    %v6210 = vpack.c.b16 %v6027, %v6026
    %v6211 = vpack.c.b16 %v6029, %v6028
    %v6212 = vpack.c.b16 %v6031, %v6030
    %v6213 = vpack.c.b16 %v6033, %v6032
    %v6214 = vpack.c.b16 %v6035, %v6034
    %v6215 = vpack.c.b16 %v6037, %v6036
    %v6216 = vpack.c.b16 %v6039, %v6038
    %v6217 = vpack.c.b16 %v6041, %v6040
    %v6218 = vpack.c.b16 %v6043, %v6042
    %v6219 = vpack.c.b16 %v6045, %v6044
    %v6220 = vpack.c.b16 %v6047, %v6046
    %v6221 = vpack.c.b16 %v6049, %v6048
    %v6222 = vpack.c.b16 %v6051, %v6050
    %v6223 = vpack.c.b16 %v6053, %v6052
    %v6224 = vpack.c.b16 %v6055, %v6054
    %v6225 = vpack.c.b16 %v6057, %v6056
    %v6226 = vpack.c.b16 %v6059, %v6058
    %v6227 = vpack.c.b16 %v6061, %v6060
    %v6228 = vpack.c.b16 %v6063, %v6062
    %v6229 = vpack.c.b16 %v6065, %v6064
    %v6230 = vpack.c.b16 %v6067, %v6066
    %v6231 = vpack.c.b16 %v6069, %v6068
    %v6232 = vpack.c.b16 %v6071, %v6070
    %v6233 = vpack.c.b16 %v6073, %v6072
    %v6234 = vpack.c.b16 %v6075, %v6074
    %v6235 = vpack.c.b16 %v6077, %v6076
    %v6236 = vpack.c.b16 %v6079, %v6078
    %v6237 = vpack.c.b16 %v6081, %v6080
    %v6238 = vpack.c.b16 %v6083, %v6082
    %v6239 = vpack.c.b16 %v6085, %v6084
    %v6240 = vpack.c.b16 %v6087, %v6086
    %v6241 = vpack.c.b16 %v6089, %v6088
    %v6242 = vpack.c.b16 %v6091, %v6090
    %v6243 = vpack.c.b16 %v6093, %v6092
    %v6244 = vpack.c.b16 %v6095, %v6094
    %v6245 = vpack.c.b16 %v6097, %v6096
    %v6246 = vpack.c.b16 %v6099, %v6098
    %v6247 = vpack.c.b16 %v6101, %v6100
    %v6248 = vpack.c.b16 %v6103, %v6102
    %v6249 = vpack.c.b16 %v6105, %v6104
    %v6250 = vpack.c.b16 %v6107, %v6106
    %v6251 = vpack.c.b16 %v6109, %v6108
    %v6252 = vpack.c.b16 %v6111, %v6110
    %v6253 = vpack.c.b16 %v6113, %v6112
    %v6254 = vpack.c.b16 %v6115, %v6114
    %v6255 = vpack.c.b16 %v6117, %v6116
    %v6256 = vpack.c.b16 %v6119, %v6118
    %v6257 = vpack.c.b16 %v6121, %v6120
    %v6258 = vpack.c.b16 %v6123, %v6122
    %v6259 = vpack.c.b16 %v6125, %v6124
    %v6260 = vpack.c.b16 %v6127, %v6126
    %v6261 = vpack.c.b16 %v6129, %v6128
    %v6262 = vpack.c.b16 %v6131, %v6130
    %v6263 = vpack.c.b16 %v6133, %v6132
    %v6264 = vpack.c.b16 %v6135, %v6134
    %v6265 = vpack.c.b16 %v6137, %v6136
    %6394 = vmatprep.subr.bf16.mxu0 0
    %6395 = vmatpush1.bf16.msra.mxu0 %v6138
    %6396 = vmatprep.subr.bf16.mxu0 0
    %6397 = vmatpush1.bf16.msra.mxu0 %v6139
    %6398 = vmatprep.subr.bf16.mxu0 0
    %6399 = vmatpush1.bf16.msra.mxu0 %v6140
    %6400 = vmatprep.subr.bf16.mxu0 0
    %6401 = vmatpush1.bf16.msra.mxu0 %v6141
    %6402 = vmatprep.subr.bf16.mxu0 0
    %6403 = vmatpush1.bf16.msra.mxu0 %v6142
    %6404 = vmatprep.subr.bf16.mxu0 0
    %6405 = vmatpush1.bf16.msra.mxu0 %v6143
    %6406 = vmatprep.subr.bf16.mxu0 0
    %6407 = vmatpush1.bf16.msra.mxu0 %v6144
    %6408 = vmatprep.subr.bf16.mxu0 0
    %6409 = vmatpush1.bf16.msra.mxu0 %v6145
    %6410 = vmatprep.subr.bf16.mxu0 0
    %6411 = vmatpush1.bf16.msra.mxu0 %v6146
    %6412 = vmatprep.subr.bf16.mxu0 0
    %6413 = vmatpush1.bf16.msra.mxu0 %v6147
    %6414 = vmatprep.subr.bf16.mxu0 0
    %6415 = vmatpush1.bf16.msra.mxu0 %v6148
    %6416 = vmatprep.subr.bf16.mxu0 0
    %6417 = vmatpush1.bf16.msra.mxu0 %v6149
    %6418 = vmatprep.subr.bf16.mxu0 0
    %6419 = vmatpush1.bf16.msra.mxu0 %v6150
    %6420 = vmatprep.subr.bf16.mxu0 0
    %6421 = vmatpush1.bf16.msra.mxu0 %v6151
    %6422 = vmatprep.subr.bf16.mxu0 0
    %6423 = vmatpush1.bf16.msra.mxu0 %v6152
    %6424 = vmatprep.subr.bf16.mxu0 0
    %6425 = vmatpush1.bf16.msra.mxu0 %v6153
    %6426 = vmatprep.mubr.bf16.mxu0 %v5348
    %6427 = vmatmul.mubr.bf16.gmra.mrb[0].mxu0 %v5347
    %v6428 = vpop.f32.mrb[0].mxu0
    %v6429 = vadd.f32 %v5624, %v6428
    %v6430 = vpop.f32.mrb[0].mxu0
    %v6431 = vpop.f32.mrb[0].mxu0
    %v6432 = vpop.f32.mrb[0].mxu0
    %6433 = vdwg.mxu0
    %6434 = vmatprep.subr.bf16.mxu0 0
    %6435 = vmatpush1.bf16.msra.mxu0 %v6154
    %6436 = vmatprep.subr.bf16.mxu0 0
    %6437 = vmatpush1.bf16.msra.mxu0 %v6155
    %6438 = vmatprep.subr.bf16.mxu0 0
    %6439 = vmatpush1.bf16.msra.mxu0 %v6156
    %6440 = vmatprep.subr.bf16.mxu0 0
    %6441 = vmatpush1.bf16.msra.mxu0 %v6157
    %6442 = vmatprep.subr.bf16.mxu0 0
    %6443 = vmatpush1.bf16.msra.mxu0 %v6158
    %6444 = vmatprep.subr.bf16.mxu0 0
    %6445 = vmatpush1.bf16.msra.mxu0 %v6159
    %6446 = vmatprep.subr.bf16.mxu0 0
    %6447 = vmatpush1.bf16.msra.mxu0 %v6160
    %6448 = vmatprep.subr.bf16.mxu0 0
    %6449 = vmatpush1.bf16.msra.mxu0 %v6161
    %6450 = vmatprep.subr.bf16.mxu0 0
    %6451 = vmatpush1.bf16.msra.mxu0 %v6162
    %6452 = vmatprep.subr.bf16.mxu0 0
    %6453 = vmatpush1.bf16.msra.mxu0 %v6163
    %6454 = vmatprep.subr.bf16.mxu0 0
    %6455 = vmatpush1.bf16.msra.mxu0 %v6164
    %6456 = vmatprep.subr.bf16.mxu0 0
    %6457 = vmatpush1.bf16.msra.mxu0 %v6165
    %6458 = vmatprep.subr.bf16.mxu0 0
    %6459 = vmatpush1.bf16.msra.mxu0 %v6166
    %6460 = vmatprep.subr.bf16.mxu0 0
    %6461 = vmatpush1.bf16.msra.mxu0 %v6167
    %6462 = vmatprep.subr.bf16.mxu0 0
    %6463 = vmatpush1.bf16.msra.mxu0 %v6168
    %6464 = vmatprep.subr.bf16.mxu0 0
    %6465 = vmatpush1.bf16.msra.mxu0 %v6169
    %6466 = vmatprep.mubr.bf16.mxu0 %v5350
    %6467 = vmatmul.mubr.bf16.gmra.mrb[0].mxu0 %v5349
    %v6468 = vpop.f32.mrb[0].mxu0
    %v6469 = vadd.f32 %v6429, %v6468
    %v6470 = vpop.f32.mrb[0].mxu0
    %v6471 = vpop.f32.mrb[0].mxu0
    %v6472 = vpop.f32.mrb[0].mxu0
    %6473 = vdwg.mxu0
    %6474 = vmatprep.subr.bf16.mxu0 0
    %6475 = vmatpush1.bf16.msra.mxu0 %v6170
    %6476 = vmatprep.subr.bf16.mxu0 0
    %6477 = vmatpush1.bf16.msra.mxu0 %v6171
    %6478 = vmatprep.subr.bf16.mxu0 0
    %6479 = vmatpush1.bf16.msra.mxu0 %v6172
    %6480 = vmatprep.subr.bf16.mxu0 0
    %6481 = vmatpush1.bf16.msra.mxu0 %v6173
    %6482 = vmatprep.subr.bf16.mxu0 0
    %6483 = vmatpush1.bf16.msra.mxu0 %v6174
    %6484 = vmatprep.subr.bf16.mxu0 0
    %6485 = vmatpush1.bf16.msra.mxu0 %v6175
    %6486 = vmatprep.subr.bf16.mxu0 0
    %6487 = vmatpush1.bf16.msra.mxu0 %v6176
    %6488 = vmatprep.subr.bf16.mxu0 0
    %6489 = vmatpush1.bf16.msra.mxu0 %v6177
    %6490 = vmatprep.subr.bf16.mxu0 0
    %6491 = vmatpush1.bf16.msra.mxu0 %v6178
    %6492 = vmatprep.subr.bf16.mxu0 0
    %6493 = vmatpush1.bf16.msra.mxu0 %v6179
    %6494 = vmatprep.subr.bf16.mxu0 0
    %6495 = vmatpush1.bf16.msra.mxu0 %v6180
    %6496 = vmatprep.subr.bf16.mxu0 0
    %6497 = vmatpush1.bf16.msra.mxu0 %v6181
    %6498 = vmatprep.subr.bf16.mxu0 0
    %6499 = vmatpush1.bf16.msra.mxu0 %v6182
    %6500 = vmatprep.subr.bf16.mxu0 0
    %6501 = vmatpush1.bf16.msra.mxu0 %v6183
    %6502 = vmatprep.subr.bf16.mxu0 0
    %6503 = vmatpush1.bf16.msra.mxu0 %v6184
    %6504 = vmatprep.subr.bf16.mxu0 0
    %6505 = vmatpush1.bf16.msra.mxu0 %v6185
    %6506 = vmatprep.mubr.bf16.mxu0 %v5352
    %6507 = vmatmul.mubr.bf16.gmra.mrb[0].mxu0 %v5351
    %v6508 = vpop.f32.mrb[0].mxu0
    %v6509 = vadd.f32 %v6469, %v6508
    %v6510 = vpop.f32.mrb[0].mxu0
    %v6511 = vpop.f32.mrb[0].mxu0
    %v6512 = vpop.f32.mrb[0].mxu0
    %6513 = vdwg.mxu0
    %6514 = vmatprep.subr.bf16.mxu0 0
    %6515 = vmatpush1.bf16.msra.mxu0 %v6186
    %6516 = vmatprep.subr.bf16.mxu0 0
    %6517 = vmatpush1.bf16.msra.mxu0 %v6187
    %6518 = vmatprep.subr.bf16.mxu0 0
    %6519 = vmatpush1.bf16.msra.mxu0 %v6188
    %6520 = vmatprep.subr.bf16.mxu0 0
    %6521 = vmatpush1.bf16.msra.mxu0 %v6189
    %6522 = vmatprep.subr.bf16.mxu0 0
    %6523 = vmatpush1.bf16.msra.mxu0 %v6190
    %6524 = vmatprep.subr.bf16.mxu0 0
    %6525 = vmatpush1.bf16.msra.mxu0 %v6191
    %6526 = vmatprep.subr.bf16.mxu0 0
    %6527 = vmatpush1.bf16.msra.mxu0 %v6192
    %6528 = vmatprep.subr.bf16.mxu0 0
    %6529 = vmatpush1.bf16.msra.mxu0 %v6193
    %6530 = vmatprep.subr.bf16.mxu0 0
    %6531 = vmatpush1.bf16.msra.mxu0 %v6194
    %6532 = vmatprep.subr.bf16.mxu0 0
    %6533 = vmatpush1.bf16.msra.mxu0 %v6195
    %6534 = vmatprep.subr.bf16.mxu0 0
    %6535 = vmatpush1.bf16.msra.mxu0 %v6196
    %6536 = vmatprep.subr.bf16.mxu0 0
    %6537 = vmatpush1.bf16.msra.mxu0 %v6197
    %6538 = vmatprep.subr.bf16.mxu0 0
    %6539 = vmatpush1.bf16.msra.mxu0 %v6198
    %6540 = vmatprep.subr.bf16.mxu0 0
    %6541 = vmatpush1.bf16.msra.mxu0 %v6199
    %6542 = vmatprep.subr.bf16.mxu0 0
    %6543 = vmatpush1.bf16.msra.mxu0 %v6200
    %6544 = vmatprep.subr.bf16.mxu0 0
    %6545 = vmatpush1.bf16.msra.mxu0 %v6201
    %6546 = vmatprep.mubr.bf16.mxu0 %v5354
    %6547 = vmatmul.mubr.bf16.gmra.mrb[0].mxu0 %v5353
    %v6548 = vpop.f32.mrb[0].mxu0
    %v6549 = vadd.f32 %v6509, %v6548
    %v6550 = vpop.f32.mrb[0].mxu0
    %v6551 = vpop.f32.mrb[0].mxu0
    %v6552 = vpop.f32.mrb[0].mxu0
    %6553 = vdwg.mxu0
    %6554 = vmatprep.subr.bf16.mxu0 0
    %6555 = vmatpush1.bf16.msra.mxu0 %v6202
    %6556 = vmatprep.subr.bf16.mxu0 0
    %6557 = vmatpush1.bf16.msra.mxu0 %v6203
    %6558 = vmatprep.subr.bf16.mxu0 0
    %6559 = vmatpush1.bf16.msra.mxu0 %v6204
    %6560 = vmatprep.subr.bf16.mxu0 0
    %6561 = vmatpush1.bf16.msra.mxu0 %v6205
    %6562 = vmatprep.subr.bf16.mxu0 0
    %6563 = vmatpush1.bf16.msra.mxu0 %v6206
    %6564 = vmatprep.subr.bf16.mxu0 0
    %6565 = vmatpush1.bf16.msra.mxu0 %v6207
    %6566 = vmatprep.subr.bf16.mxu0 0
    %6567 = vmatpush1.bf16.msra.mxu0 %v6208
    %6568 = vmatprep.subr.bf16.mxu0 0
    %6569 = vmatpush1.bf16.msra.mxu0 %v6209
    %6570 = vmatprep.subr.bf16.mxu0 0
    %6571 = vmatpush1.bf16.msra.mxu0 %v6210
    %6572 = vmatprep.subr.bf16.mxu0 0
    %6573 = vmatpush1.bf16.msra.mxu0 %v6211
    %6574 = vmatprep.subr.bf16.mxu0 0
    %6575 = vmatpush1.bf16.msra.mxu0 %v6212
    %6576 = vmatprep.subr.bf16.mxu0 0
    %6577 = vmatpush1.bf16.msra.mxu0 %v6213
    %6578 = vmatprep.subr.bf16.mxu0 0
    %6579 = vmatpush1.bf16.msra.mxu0 %v6214
    %6580 = vmatprep.subr.bf16.mxu0 0
    %6581 = vmatpush1.bf16.msra.mxu0 %v6215
    %6582 = vmatprep.subr.bf16.mxu0 0
    %6583 = vmatpush1.bf16.msra.mxu0 %v6216
    %6584 = vmatprep.subr.bf16.mxu0 0
    %6585 = vmatpush1.bf16.msra.mxu0 %v6217
    %6586 = vmatprep.mubr.bf16.mxu0 %v5356
    %6587 = vmatmul.mubr.bf16.gmra.mrb[0].mxu0 %v5355
    %v6588 = vpop.f32.mrb[0].mxu0
    %v6589 = vadd.f32 %v6549, %v6588
    %v6590 = vpop.f32.mrb[0].mxu0
    %v6591 = vpop.f32.mrb[0].mxu0
    %v6592 = vpop.f32.mrb[0].mxu0
    %6593 = vdwg.mxu0
    %6594 = vmatprep.subr.bf16.mxu0 0
    %6595 = vmatpush1.bf16.msra.mxu0 %v6218
    %6596 = vmatprep.subr.bf16.mxu0 0
    %6597 = vmatpush1.bf16.msra.mxu0 %v6219
    %6598 = vmatprep.subr.bf16.mxu0 0
    %6599 = vmatpush1.bf16.msra.mxu0 %v6220
    %6600 = vmatprep.subr.bf16.mxu0 0
    %6601 = vmatpush1.bf16.msra.mxu0 %v6221
    %6602 = vmatprep.subr.bf16.mxu0 0
    %6603 = vmatpush1.bf16.msra.mxu0 %v6222
    %6604 = vmatprep.subr.bf16.mxu0 0
    %6605 = vmatpush1.bf16.msra.mxu0 %v6223
    %6606 = vmatprep.subr.bf16.mxu0 0
    %6607 = vmatpush1.bf16.msra.mxu0 %v6224
    %6608 = vmatprep.subr.bf16.mxu0 0
    %6609 = vmatpush1.bf16.msra.mxu0 %v6225
    %6610 = vmatprep.subr.bf16.mxu0 0
    %6611 = vmatpush1.bf16.msra.mxu0 %v6226
    %6612 = vmatprep.subr.bf16.mxu0 0
    %6613 = vmatpush1.bf16.msra.mxu0 %v6227
    %6614 = vmatprep.subr.bf16.mxu0 0
    %6615 = vmatpush1.bf16.msra.mxu0 %v6228
    %6616 = vmatprep.subr.bf16.mxu0 0
    %6617 = vmatpush1.bf16.msra.mxu0 %v6229
    %6618 = vmatprep.subr.bf16.mxu0 0
    %6619 = vmatpush1.bf16.msra.mxu0 %v6230
    %6620 = vmatprep.subr.bf16.mxu0 0
    %6621 = vmatpush1.bf16.msra.mxu0 %v6231
    %6622 = vmatprep.subr.bf16.mxu0 0
    %6623 = vmatpush1.bf16.msra.mxu0 %v6232
    %6624 = vmatprep.subr.bf16.mxu0 0
    %6625 = vmatpush1.bf16.msra.mxu0 %v6233
    %6626 = vmatprep.mubr.bf16.mxu0 %v5358
    %6627 = vmatmul.mubr.bf16.gmra.mrb[0].mxu0 %v5357
    %v6628 = vpop.f32.mrb[0].mxu0
    %v6629 = vadd.f32 %v6589, %v6628
    %v6630 = vpop.f32.mrb[0].mxu0
    %v6631 = vpop.f32.mrb[0].mxu0
    %v6632 = vpop.f32.mrb[0].mxu0
    %6633 = vdwg.mxu0
    %6634 = vmatprep.subr.bf16.mxu0 0
    %6635 = vmatpush1.bf16.msra.mxu0 %v6234
    %6636 = vmatprep.subr.bf16.mxu0 0
    %6637 = vmatpush1.bf16.msra.mxu0 %v6235
    %6638 = vmatprep.subr.bf16.mxu0 0
    %6639 = vmatpush1.bf16.msra.mxu0 %v6236
    %6640 = vmatprep.subr.bf16.mxu0 0
    %6641 = vmatpush1.bf16.msra.mxu0 %v6237
    %6642 = vmatprep.subr.bf16.mxu0 0
    %6643 = vmatpush1.bf16.msra.mxu0 %v6238
    %6644 = vmatprep.subr.bf16.mxu0 0
    %6645 = vmatpush1.bf16.msra.mxu0 %v6239
    %6646 = vmatprep.subr.bf16.mxu0 0
    %6647 = vmatpush1.bf16.msra.mxu0 %v6240
    %6648 = vmatprep.subr.bf16.mxu0 0
    %6649 = vmatpush1.bf16.msra.mxu0 %v6241
    %6650 = vmatprep.subr.bf16.mxu0 0
    %6651 = vmatpush1.bf16.msra.mxu0 %v6242
    %6652 = vmatprep.subr.bf16.mxu0 0
    %6653 = vmatpush1.bf16.msra.mxu0 %v6243
    %6654 = vmatprep.subr.bf16.mxu0 0
    %6655 = vmatpush1.bf16.msra.mxu0 %v6244
    %6656 = vmatprep.subr.bf16.mxu0 0
    %6657 = vmatpush1.bf16.msra.mxu0 %v6245
    %6658 = vmatprep.subr.bf16.mxu0 0
    %6659 = vmatpush1.bf16.msra.mxu0 %v6246
    %6660 = vmatprep.subr.bf16.mxu0 0
    %6661 = vmatpush1.bf16.msra.mxu0 %v6247
    %6662 = vmatprep.subr.bf16.mxu0 0
    %6663 = vmatpush1.bf16.msra.mxu0 %v6248
    %6664 = vmatprep.subr.bf16.mxu0 0
    %6665 = vmatpush1.bf16.msra.mxu0 %v6249
    %6666 = vmatprep.mubr.bf16.mxu0 %v5360
    %6667 = vmatmul.mubr.bf16.gmra.mrb[0].mxu0 %v5359
    %v6668 = vpop.f32.mrb[0].mxu0
    %v6669 = vadd.f32 %v6629, %v6668
    %v6670 = vpop.f32.mrb[0].mxu0
    %v6671 = vpop.f32.mrb[0].mxu0
    %v6672 = vpop.f32.mrb[0].mxu0
    %6673 = vdwg.mxu0
    %6674 = vmatprep.subr.bf16.mxu0 0
    %6675 = vmatpush1.bf16.msra.mxu0 %v6250
    %6676 = vmatprep.subr.bf16.mxu0 0
    %6677 = vmatpush1.bf16.msra.mxu0 %v6251
    %6678 = vmatprep.subr.bf16.mxu0 0
    %6679 = vmatpush1.bf16.msra.mxu0 %v6252
    %6680 = vmatprep.subr.bf16.mxu0 0
    %6681 = vmatpush1.bf16.msra.mxu0 %v6253
    %6682 = vmatprep.subr.bf16.mxu0 0
    %6683 = vmatpush1.bf16.msra.mxu0 %v6254
    %6684 = vmatprep.subr.bf16.mxu0 0
    %6685 = vmatpush1.bf16.msra.mxu0 %v6255
    %6686 = vmatprep.subr.bf16.mxu0 0
    %6687 = vmatpush1.bf16.msra.mxu0 %v6256
    %6688 = vmatprep.subr.bf16.mxu0 0
    %6689 = vmatpush1.bf16.msra.mxu0 %v6257
    %6690 = vmatprep.subr.bf16.mxu0 0
    %6691 = vmatpush1.bf16.msra.mxu0 %v6258
    %6692 = vmatprep.subr.bf16.mxu0 0
    %6693 = vmatpush1.bf16.msra.mxu0 %v6259
    %6694 = vmatprep.subr.bf16.mxu0 0
    %6695 = vmatpush1.bf16.msra.mxu0 %v6260
    %6696 = vmatprep.subr.bf16.mxu0 0
    %6697 = vmatpush1.bf16.msra.mxu0 %v6261
    %6698 = vmatprep.subr.bf16.mxu0 0
    %6699 = vmatpush1.bf16.msra.mxu0 %v6262
    %6700 = vmatprep.subr.bf16.mxu0 0
    %6701 = vmatpush1.bf16.msra.mxu0 %v6263
    %6702 = vmatprep.subr.bf16.mxu0 0
    %6703 = vmatpush1.bf16.msra.mxu0 %v6264
    %6704 = vmatprep.subr.bf16.mxu0 0
    %6705 = vmatpush1.bf16.msra.mxu0 %v6265
    %6706 = vmatprep.mubr.bf16.mxu0 %v5362
    %6707 = vmatmul.mubr.bf16.gmra.mrb[0].mxu0 %v5361
    %v6708 = vpop.f32.mrb[0].mxu0
    %v6709 = vadd.f32 %v6669, %v6708
    %v6710 = vpop.f32.mrb[0].mxu0
    %v6711 = vpop.f32.mrb[0].mxu0
    %v6712 = vpop.f32.mrb[0].mxu0
    %6713 = vdwg.mxu0
    %6714 = vst [vmem:[#allocation10] sm:$0x3] %v6709
    // Predicated region
    $region38: #{tpu_custom_call.1} parent=1 // pred_check
      _
    $region39: #{tpu_custom_call.1} parent=1 // pred_check_branch
      %6716 = sbr.rel (0) target = $region41
    $region40: #{tpu_custom_call.1} parent=1 // pred_region
      %s6718 = ssub.s32 32, 32
      %6719 = vsyncadd [#allocation4], %s6718
      %s6721 = sshll.u32 [#allocation10], 4
      %s6722 = int_to_ptr.vmem [resolvable:$true] %s6721
      %6724 = dma.vmem_to_hbm [thread:$0]  %s6722, 32, %s5, [#allocation4]
    $region41: #{tpu_custom_call.1} parent=1 // pred_fallthru
      _
    // Predicated region
    $region42: #{tpu_custom_call.1} parent=1 // pred_check
      _
    $region43: #{tpu_custom_call.1} parent=1 // pred_check_branch
      %6726 = sbr.rel (0) target = $region45
    $region44: #{tpu_custom_call.1} parent=1 // pred_region
      %6727 = dma.done [#allocation4], 32
    $region45: #{tpu_custom_call.1} parent=1 // pred_fallthru
      _
    %6728 = vsyncpa [#allocation3], 1
    %6729 = vsyncpa [#allocation6], 1
    %6730 = vsyncpa [#allocation9], 1
    %6731 = vsyncpa [#allocation4], 1

</llo_original>
